<compile_context>
chip_gen: v6e
topology: v6e:2x2x1
jax: 0.10.0
libtpu: 0.0.40
codegen_flags: <defaults>
</compile_context>

<pallas_src>
import functools

import jax
import jax.numpy as jnp
from jax.experimental import pallas as pl
from jax.experimental.pallas import tpu as pltpu

_BN_EPS = 1e-5
_TN = 512                      # lane tile (multiple of 128)
_VMEM_LIMIT = 32 * 1024 * 1024  # explicit scoped-VMEM limit (safe on v5e/v6e/v7x)


def _round_up(a, b):
    return ((a + b - 1) // b) * b


def _col_tiling(m, tn_max=_TN):
    """Pick a lane tile (multiple of 128), grid size and padded M."""
    m_pad = _round_up(m, 128)
    tn = min(tn_max, m_pad)
    # Give megacore / v7x's 2 TensorCores at least 2 grid steps when possible.
    if m_pad // tn < 2 and m_pad >= 256:
        tn = _round_up(-(-m_pad // 2), 128)
    m_pad = _round_up(m_pad, tn)
    return tn, m_pad // tn, m_pad


# ----------------------------------------------------------------------------
# Fused conv (as matmul) + folded BN + optional residual + ReLU
# ----------------------------------------------------------------------------
def _conv_fused_kernel(relu, has_res, w_ref, x_ref, s_ref, b_ref, *rest):
    if has_res:
        r_ref, o_ref = rest
    else:
        (o_ref,) = rest
    # (cout, K) @ (K, tn) on the MXU, f32 accumulation.
    acc = jnp.dot(w_ref[...], x_ref[...], preferred_element_type=jnp.float32)
    y = acc * s_ref[...] + b_ref[...]          # per-channel folded BN (f32 VPU math)
    if has_res:
        y = y + r_ref[...].astype(jnp.float32)  # residual add before ReLU
    if relu:
        y = jnp.maximum(y, 0.0)
    o_ref[...] = y.astype(o_ref.dtype)


def _im2col_cf(x_cf, kh, kw, stride, padding):
    """Channels-first im2col.  x_cf: (C, N, H, W) -> (kh*kw*C, N*Ho*Wo)."""
    C, N, H, W = x_cf.shape
    if padding > 0:
        x_cf = jnp.pad(x_cf, ((0, 0), (0, 0), (padding, padding), (padding, padding)))
    Ho = (H + 2 * padding - kh) // stride + 1
    Wo = (W + 2 * padding - kw) // stride + 1
    taps = []
    for i in range(kh):
        for j in range(kw):
            taps.append(
                x_cf[:, :, i : i + Ho * stride : stride, j : j + Wo * stride : stride]
            )
    patches = jnp.concatenate(taps, axis=0)      # (kh*kw*C, N, Ho, Wo)
    return patches.reshape(kh * kw * C, N * Ho * Wo), Ho, Wo
    # TODO(synk): at realistic H,W replace this im2col with an in-kernel
    # kh*kw tap-accumulation loop to avoid the kh*kw x HBM traffic inflation.


def conv_bn_act(x_cf, p, k, stride, padding, relu=True, residual=None, tn_max=_TN):
    """conv(bias=False) -> folded BN -> optional residual add -> ReLU, one pallas_call.

    x_cf: (Cin, N, H, W) bf16 activations (channels-first).
    p:    precomputed {"w_cf": (Cout, k*k*Cin) bf16, "scale": (Cout,1) f32, "bias": (Cout,1) f32}
    Returns (Cout, N, Ho, Wo) bf16.
    """
    cin, N, H, W = x_cf.shape
    cout, K = p["w_cf"].shape
    assert K == k * k * cin

    patches, Ho, Wo = _im2col_cf(x_cf, k, k, stride, padding)
    patches = patches.astype(jnp.bfloat16)
    M = N * Ho * Wo
    tn, n_tiles, m_pad = _col_tiling(M, tn_max)
    if m_pad != M:
        patches = jnp.pad(patches, ((0, 0), (0, m_pad - M)))

    in_specs = [
        pl.BlockSpec((cout, K), lambda i: (0, 0)),   # weights (resident)
        pl.BlockSpec((K, tn), lambda i: (0, i)),     # patch columns (lane-tiled)
        pl.BlockSpec((cout, 1), lambda i: (0, 0)),   # BN scale
        pl.BlockSpec((cout, 1), lambda i: (0, 0)),   # BN bias
    ]
    args = [p["w_cf"], patches, p["scale"], p["bias"]]
    if residual is not None:
        res = residual.reshape(cout, M).astype(jnp.bfloat16)
        if m_pad != M:
            res = jnp.pad(res, ((0, 0), (0, m_pad - M)))
        in_specs.append(pl.BlockSpec((cout, tn), lambda i: (0, i)))
        args.append(res)

    kernel = functools.partial(_conv_fused_kernel, relu, residual is not None)
    y = pl.pallas_call(
        kernel,
        out_shape=jax.ShapeDtypeStruct((cout, m_pad), jnp.bfloat16),
        grid=(n_tiles,),
        in_specs=in_specs,
        out_specs=pl.BlockSpec((cout, tn), lambda i: (0, i)),
        compiler_params=pltpu.CompilerParams(
            dimension_semantics=("parallel",),
            vmem_limit_bytes=_VMEM_LIMIT,
        ),
    )(*args)

    if m_pad != M:
        y = y[:, :M]
    return y.reshape(cout, N, Ho, Wo)


# ----------------------------------------------------------------------------
# Fused global average pool + classification head (Linear)
# ----------------------------------------------------------------------------
def _gap_fc_kernel(x_ref, w_ref, b_ref, logits_ref, feats_ref):
    x = x_ref[...].astype(jnp.float32)                 # (N, S, C)
    feats = jnp.mean(x, axis=1)                        # (N, C)
    feats_ref[...] = feats
    logits_ref[...] = (
        jnp.dot(feats, w_ref[...], preferred_element_type=jnp.float32) + b_ref[...]
    )


def gap_fc_head(x_nsc, fc_w, fc_b):
    """x_nsc: (N, S, C) -> (logits (N, n_classes), features (N, C)), one pallas_call."""
    N, S, C = x_nsc.shape
    ncls = fc_w.shape[1]
    return pl.pallas_call(
        _gap_fc_kernel,
        out_shape=(
            jax.ShapeDtypeStruct((N, ncls), jnp.float32),
            jax.ShapeDtypeStruct((N, C), jnp.float32),
        ),
        grid=(1,),
        in_specs=[
            pl.BlockSpec((N, S, C), lambda i: (0, 0, 0)),
            pl.BlockSpec((C, ncls), lambda i: (0, 0)),
            pl.BlockSpec((1, ncls), lambda i: (0, 0)),
        ],
        out_specs=(
            pl.BlockSpec((N, ncls), lambda i: (0, 0)),
            pl.BlockSpec((N, C), lambda i: (0, 0)),
        ),
        compiler_params=pltpu.CompilerParams(vmem_limit_bytes=_VMEM_LIMIT),
    )(x_nsc.astype(jnp.bfloat16), fc_w.astype(jnp.float32), fc_b.astype(jnp.float32))


# ----------------------------------------------------------------------------
# Parameter construction: fold BN and precompute channel-first bf16 weights once
# ----------------------------------------------------------------------------
def _conv_bn_params(key, k, cin, cout):
    ks = jax.random.split(key, 5)
    w = jax.random.normal(ks[0], (k, k, cin, cout), jnp.float32) * 0.1
    gamma = jax.random.uniform(ks[1], (cout,), jnp.float32, 0.5, 1.5)
    beta = jax.random.normal(ks[2], (cout,), jnp.float32) * 0.1
    mean = jax.random.normal(ks[3], (cout,), jnp.float32) * 0.1
    var = jax.random.uniform(ks[4], (cout,), jnp.float32, 0.5, 1.5)
    scale = gamma / jnp.sqrt(var + _BN_EPS)
    bias = beta - mean * scale
    # channels-first weight: (cout, k*k*cin), K ordered (tap_i, tap_j, cin)
    w_cf = jnp.transpose(w, (3, 0, 1, 2)).reshape(cout, k * k * cin).astype(jnp.bfloat16)
    return {
        "w_cf": w_cf,
        "scale": scale.reshape(cout, 1).astype(jnp.float32),
        "bias": bias.reshape(cout, 1).astype(jnp.float32),
    }


def init_params(key, in_ch=3, base_ch=16, n_classes=10):
    ks = jax.random.split(key, 8)
    emb = base_ch * 2
    return {
        "stem": _conv_bn_params(ks[0], 3, in_ch, base_ch),
        "l1c1": _conv_bn_params(ks[1], 3, base_ch, base_ch),
        "l1c2": _conv_bn_params(ks[2], 3, base_ch, base_ch),
        "l2c1": _conv_bn_params(ks[3], 3, base_ch, emb),
        "l2c2": _conv_bn_params(ks[4], 3, emb, emb),
        "l2ds": _conv_bn_params(ks[5], 1, base_ch, emb),
        "fc_w": jax.random.normal(ks[6], (emb, n_classes), jnp.float32) * 0.1,
        "fc_b": (jax.random.normal(ks[7], (n_classes,), jnp.float32) * 0.1).reshape(
            1, n_classes
        ),
    }


# ----------------------------------------------------------------------------
# Forward: features = backbone(x); logits = classification_head(features)
# ----------------------------------------------------------------------------
def resnet_fed_forward(params, x_nchw):
    # NCHW -> channels-first flat layout (C, N, H, W); activations in bf16.
    x = jnp.transpose(x_nchw, (1, 0, 2, 3)).astype(jnp.bfloat16)

    # stem: conv3x3 s1 + BN + ReLU
    x = conv_bn_act(x, params["stem"], k=3, stride=1, padding=1)

    # layer1: basic block, identity shortcut
    idt = x
    y = conv_bn_act(x, params["l1c1"], k=3, stride=1, padding=1)
    x = conv_bn_act(y, params["l1c2"], k=3, stride=1, padding=1, residual=idt)

    # layer2: basic block with 1x1 stride-2 downsample shortcut
    idt = conv_bn_act(x, params["l2ds"], k=1, stride=2, padding=0, relu=False)
    y = conv_bn_act(x, params["l2c1"], k=3, stride=2, padding=1)
    x = conv_bn_act(y, params["l2c2"], k=3, stride=1, padding=1, residual=idt)

    # fused global average pool + classification head ("model.fc = Identity()")
    emb, N, Ho, Wo = x.shape
    x_nsc = jnp.transpose(x.reshape(emb, N, Ho * Wo), (1, 2, 0))  # tiny relayout
    logits, features = gap_fc_head(x_nsc, params["fc_w"], params["fc_b"])
    return logits, features


# TODO(synk): the original module loads pretrained timm weights; here the
# backbone is a deterministic synthetic ResNet of the same structural family.

if __name__ == "__main__":
    key = jax.random.PRNGKey(0)
    pkey, xkey = jax.random.split(key)

    N_CLASSES = 10
    params = init_params(pkey, in_ch=3, base_ch=16, n_classes=N_CLASSES)

    # small deterministic input, NCHW like PyTorch
    x = jax.random.normal(xkey, (2, 3, 16, 16), jnp.float32)

    logits, features = jax.jit(resnet_fed_forward)(params, x)
    logits = jax.block_until_ready(logits)
    features = jax.block_until_ready(features)

    assert logits.shape == (2, N_CLASSES), logits.shape
    assert features.shape == (2, 32), features.shape
    assert logits.dtype == jnp.float32 and features.dtype == jnp.float32
    assert bool(jnp.all(jnp.isfinite(logits))) and bool(jnp.all(jnp.isfinite(features)))

    print("KERNEL_OK")
</pallas_src>

<mosaic_0001>
module attributes {stable_mosaic.version = 11 : i64} {
  func.func @_conv_fused_kernel(%arg0: i32, %arg1: memref<16x27xbf16, #tpu.memory_space<vmem>>, %arg2: memref<27x256xbf16, #tpu.memory_space<vmem>>, %arg3: memref<16x1xf32, #tpu.memory_space<vmem>>, %arg4: memref<16x1xf32, #tpu.memory_space<vmem>>, %arg5: memref<16x256xbf16, #tpu.memory_space<vmem>>) attributes {dimension_semantics = [#tpu.dimension_semantics<parallel>], iteration_bounds = array<i64: 2>, scalar_prefetch = 0 : i64, scratch_operands = 0 : i64, tpu.core_type = #tpu.core_type<tc>, window_params = [{pipeline_mode = #tpu.pipeline_mode<synchronous>, transform_indices = @transform_0, window_bounds = array<i64: 16, 27>}, {transform_indices = @transform_1, window_bounds = array<i64: 27, 256>}, {pipeline_mode = #tpu.pipeline_mode<synchronous>, transform_indices = @transform_2, window_bounds = array<i64: 16, 1>}, {pipeline_mode = #tpu.pipeline_mode<synchronous>, transform_indices = @transform_3, window_bounds = array<i64: 16, 1>}, {transform_indices = @transform_4, window_bounds = array<i64: 16, 256>}]} {
    %c0 = arith.constant 0 : index
    %c0_0 = arith.constant 0 : index
    %0 = vector.load %arg1[%c0, %c0_0] : memref<16x27xbf16, #tpu.memory_space<vmem>>, vector<16x27xbf16>
    %c0_1 = arith.constant 0 : index
    %c0_2 = arith.constant 0 : index
    %1 = vector.load %arg2[%c0_1, %c0_2] : memref<27x256xbf16, #tpu.memory_space<vmem>>, vector<27x256xbf16>
    %cst = arith.constant dense<0.000000e+00> : vector<16x256xf32>
    %2 = tpu.matmul %0, %1, %cst {dimension_numbers = #tpu.dot_dimension_numbers<[1], [0], [0], [1], [0, 0, 1, 1], [], []>} : vector<16x27xbf16>, vector<27x256xbf16>, vector<16x256xf32> -> vector<16x256xf32>
    %c0_3 = arith.constant 0 : index
    %c0_4 = arith.constant 0 : index
    %3 = vector.load %arg3[%c0_3, %c0_4] : memref<16x1xf32, #tpu.memory_space<vmem>>, vector<16x1xf32>
    %4 = vector.broadcast %3 : vector<16x1xf32> to vector<16x256xf32>
    %5 = arith.mulf %2, %4 : vector<16x256xf32>
    %c0_5 = arith.constant 0 : index
    %c0_6 = arith.constant 0 : index
    %6 = vector.load %arg4[%c0_5, %c0_6] : memref<16x1xf32, #tpu.memory_space<vmem>>, vector<16x1xf32>
    %7 = vector.broadcast %6 : vector<16x1xf32> to vector<16x256xf32>
    %8 = arith.addf %5, %7 : vector<16x256xf32>
    %cst_7 = arith.constant 0.000000e+00 : f32
    %9 = vector.broadcast %cst_7 : f32 to vector<16x256xf32>
    %10 = arith.maximumf %8, %9 : vector<16x256xf32>
    %11 = arith.truncf %10 : vector<16x256xf32> to vector<16x256xbf16>
    %c0_8 = arith.constant 0 : index
    %c0_9 = arith.constant 0 : index
    %12 = vector.load %arg5[%c0_8, %c0_9] : memref<16x256xbf16, #tpu.memory_space<vmem>>, vector<16x256xbf16>
    tpu.vector_store %arg5[%c0_8, %c0_9], %11 {strides = array<i32>} : memref<16x256xbf16, #tpu.memory_space<vmem>>, vector<16x256xbf16>,
    return
  }
  func.func @transform_0(%arg0: i32) -> (i32, i32) {
    %c0_i32 = arith.constant 0 : i32
    %c0_i32_0 = arith.constant 0 : i32
    %c0_i32_1 = arith.constant 0 : i32
    return %c0_i32, %c0_i32_0 : i32, i32
  }
  func.func @transform_1(%arg0: i32) -> (i32, i32) {
    %c0_i32 = arith.constant 0 : i32
    %c0_i32_0 = arith.constant 0 : i32
    return %c0_i32, %arg0 : i32, i32
  }
  func.func @transform_2(%arg0: i32) -> (i32, i32) {
    %c0_i32 = arith.constant 0 : i32
    %c0_i32_0 = arith.constant 0 : i32
    %c0_i32_1 = arith.constant 0 : i32
    return %c0_i32, %c0_i32_0 : i32, i32
  }
  func.func @transform_3(%arg0: i32) -> (i32, i32) {
    %c0_i32 = arith.constant 0 : i32
    %c0_i32_0 = arith.constant 0 : i32
    %c0_i32_1 = arith.constant 0 : i32
    return %c0_i32, %c0_i32_0 : i32, i32
  }
  func.func @transform_4(%arg0: i32) -> (i32, i32) {
    %c0_i32 = arith.constant 0 : i32
    %c0_i32_0 = arith.constant 0 : i32
    return %c0_i32, %arg0 : i32, i32
  }
}

module attributes {stable_mosaic.version = 11 : i64} {
  func.func @_conv_fused_kernel(%arg0: i32, %arg1: memref<16x144xbf16, #tpu.memory_space<vmem>>, %arg2: memref<144x256xbf16, #tpu.memory_space<vmem>>, %arg3: memref<16x1xf32, #tpu.memory_space<vmem>>, %arg4: memref<16x1xf32, #tpu.memory_space<vmem>>, %arg5: memref<16x256xbf16, #tpu.memory_space<vmem>>) attributes {dimension_semantics = [#tpu.dimension_semantics<parallel>], iteration_bounds = array<i64: 2>, scalar_prefetch = 0 : i64, scratch_operands = 0 : i64, tpu.core_type = #tpu.core_type<tc>, window_params = [{pipeline_mode = #tpu.pipeline_mode<synchronous>, transform_indices = @transform_0, window_bounds = array<i64: 16, 144>}, {transform_indices = @transform_1, window_bounds = array<i64: 144, 256>}, {pipeline_mode = #tpu.pipeline_mode<synchronous>, transform_indices = @transform_2, window_bounds = array<i64: 16, 1>}, {pipeline_mode = #tpu.pipeline_mode<synchronous>, transform_indices = @transform_3, window_bounds = array<i64: 16, 1>}, {transform_indices = @transform_4, window_bounds = array<i64: 16, 256>}]} {
    %c0 = arith.constant 0 : index
    %c0_0 = arith.constant 0 : index
    %0 = vector.load %arg1[%c0, %c0_0] : memref<16x144xbf16, #tpu.memory_space<vmem>>, vector<16x144xbf16>
    %c0_1 = arith.constant 0 : index
    %c0_2 = arith.constant 0 : index
    %1 = vector.load %arg2[%c0_1, %c0_2] : memref<144x256xbf16, #tpu.memory_space<vmem>>, vector<144x256xbf16>
    %cst = arith.constant dense<0.000000e+00> : vector<16x256xf32>
    %2 = tpu.matmul %0, %1, %cst {dimension_numbers = #tpu.dot_dimension_numbers<[1], [0], [0], [1], [0, 0, 1, 1], [], []>} : vector<16x144xbf16>, vector<144x256xbf16>, vector<16x256xf32> -> vector<16x256xf32>
    %c0_3 = arith.constant 0 : index
    %c0_4 = arith.constant 0 : index
    %3 = vector.load %arg3[%c0_3, %c0_4] : memref<16x1xf32, #tpu.memory_space<vmem>>, vector<16x1xf32>
    %4 = vector.broadcast %3 : vector<16x1xf32> to vector<16x256xf32>
    %5 = arith.mulf %2, %4 : vector<16x256xf32>
    %c0_5 = arith.constant 0 : index
    %c0_6 = arith.constant 0 : index
    %6 = vector.load %arg4[%c0_5, %c0_6] : memref<16x1xf32, #tpu.memory_space<vmem>>, vector<16x1xf32>
    %7 = vector.broadcast %6 : vector<16x1xf32> to vector<16x256xf32>
    %8 = arith.addf %5, %7 : vector<16x256xf32>
    %cst_7 = arith.constant 0.000000e+00 : f32
    %9 = vector.broadcast %cst_7 : f32 to vector<16x256xf32>
    %10 = arith.maximumf %8, %9 : vector<16x256xf32>
    %11 = arith.truncf %10 : vector<16x256xf32> to vector<16x256xbf16>
    %c0_8 = arith.constant 0 : index
    %c0_9 = arith.constant 0 : index
    %12 = vector.load %arg5[%c0_8, %c0_9] : memref<16x256xbf16, #tpu.memory_space<vmem>>, vector<16x256xbf16>
    tpu.vector_store %arg5[%c0_8, %c0_9], %11 {strides = array<i32>} : memref<16x256xbf16, #tpu.memory_space<vmem>>, vector<16x256xbf16>,
    return
  }
  func.func @transform_0(%arg0: i32) -> (i32, i32) {
    %c0_i32 = arith.constant 0 : i32
    %c0_i32_0 = arith.constant 0 : i32
    %c0_i32_1 = arith.constant 0 : i32
    return %c0_i32, %c0_i32_0 : i32, i32
  }
  func.func @transform_1(%arg0: i32) -> (i32, i32) {
    %c0_i32 = arith.constant 0 : i32
    %c0_i32_0 = arith.constant 0 : i32
    return %c0_i32, %arg0 : i32, i32
  }
  func.func @transform_2(%arg0: i32) -> (i32, i32) {
    %c0_i32 = arith.constant 0 : i32
    %c0_i32_0 = arith.constant 0 : i32
    %c0_i32_1 = arith.constant 0 : i32
    return %c0_i32, %c0_i32_0 : i32, i32
  }
  func.func @transform_3(%arg0: i32) -> (i32, i32) {
    %c0_i32 = arith.constant 0 : i32
    %c0_i32_0 = arith.constant 0 : i32
    %c0_i32_1 = arith.constant 0 : i32
    return %c0_i32, %c0_i32_0 : i32, i32
  }
  func.func @transform_4(%arg0: i32) -> (i32, i32) {
    %c0_i32 = arith.constant 0 : i32
    %c0_i32_0 = arith.constant 0 : i32
    return %c0_i32, %arg0 : i32, i32
  }
}

module attributes {stable_mosaic.version = 11 : i64} {
  func.func @_conv_fused_kernel(%arg0: i32, %arg1: memref<16x144xbf16, #tpu.memory_space<vmem>>, %arg2: memref<144x256xbf16, #tpu.memory_space<vmem>>, %arg3: memref<16x1xf32, #tpu.memory_space<vmem>>, %arg4: memref<16x1xf32, #tpu.memory_space<vmem>>, %arg5: memref<16x256xbf16, #tpu.memory_space<vmem>>, %arg6: memref<16x256xbf16, #tpu.memory_space<vmem>>) attributes {dimension_semantics = [#tpu.dimension_semantics<parallel>], iteration_bounds = array<i64: 2>, scalar_prefetch = 0 : i64, scratch_operands = 0 : i64, tpu.core_type = #tpu.core_type<tc>, window_params = [{pipeline_mode = #tpu.pipeline_mode<synchronous>, transform_indices = @transform_0, window_bounds = array<i64: 16, 144>}, {transform_indices = @transform_1, window_bounds = array<i64: 144, 256>}, {pipeline_mode = #tpu.pipeline_mode<synchronous>, transform_indices = @transform_2, window_bounds = array<i64: 16, 1>}, {pipeline_mode = #tpu.pipeline_mode<synchronous>, transform_indices = @transform_3, window_bounds = array<i64: 16, 1>}, {transform_indices = @transform_4, window_bounds = array<i64: 16, 256>}, {transform_indices = @transform_5, window_bounds = array<i64: 16, 256>}]} {
    %c0 = arith.constant 0 : index
    %c0_0 = arith.constant 0 : index
    %0 = vector.load %arg1[%c0, %c0_0] : memref<16x144xbf16, #tpu.memory_space<vmem>>, vector<16x144xbf16>
    %c0_1 = arith.constant 0 : index
    %c0_2 = arith.constant 0 : index
    %1 = vector.load %arg2[%c0_1, %c0_2] : memref<144x256xbf16, #tpu.memory_space<vmem>>, vector<144x256xbf16>
    %cst = arith.constant dense<0.000000e+00> : vector<16x256xf32>
    %2 = tpu.matmul %0, %1, %cst {dimension_numbers = #tpu.dot_dimension_numbers<[1], [0], [0], [1], [0, 0, 1, 1], [], []>} : vector<16x144xbf16>, vector<144x256xbf16>, vector<16x256xf32> -> vector<16x256xf32>
    %c0_3 = arith.constant 0 : index
    %c0_4 = arith.constant 0 : index
    %3 = vector.load %arg3[%c0_3, %c0_4] : memref<16x1xf32, #tpu.memory_space<vmem>>, vector<16x1xf32>
    %4 = vector.broadcast %3 : vector<16x1xf32> to vector<16x256xf32>
    %5 = arith.mulf %2, %4 : vector<16x256xf32>
    %c0_5 = arith.constant 0 : index
    %c0_6 = arith.constant 0 : index
    %6 = vector.load %arg4[%c0_5, %c0_6] : memref<16x1xf32, #tpu.memory_space<vmem>>, vector<16x1xf32>
    %7 = vector.broadcast %6 : vector<16x1xf32> to vector<16x256xf32>
    %8 = arith.addf %5, %7 : vector<16x256xf32>
    %c0_7 = arith.constant 0 : index
    %c0_8 = arith.constant 0 : index
    %9 = vector.load %arg5[%c0_7, %c0_8] : memref<16x256xbf16, #tpu.memory_space<vmem>>, vector<16x256xbf16>
    %10 = arith.extf %9 : vector<16x256xbf16> to vector<16x256xf32>
    %11 = arith.addf %8, %10 : vector<16x256xf32>
    %cst_9 = arith.constant 0.000000e+00 : f32
    %12 = vector.broadcast %cst_9 : f32 to vector<16x256xf32>
    %13 = arith.maximumf %11, %12 : vector<16x256xf32>
    %14 = arith.truncf %13 : vector<16x256xf32> to vector<16x256xbf16>
    %c0_10 = arith.constant 0 : index
    %c0_11 = arith.constant 0 : index
    %15 = vector.load %arg6[%c0_10, %c0_11] : memref<16x256xbf16, #tpu.memory_space<vmem>>, vector<16x256xbf16>
    tpu.vector_store %arg6[%c0_10, %c0_11], %14 {strides = array<i32>} : memref<16x256xbf16, #tpu.memory_space<vmem>>, vector<16x256xbf16>,
    return
  }
  func.func @transform_0(%arg0: i32) -> (i32, i32) {
    %c0_i32 = arith.constant 0 : i32
    %c0_i32_0 = arith.constant 0 : i32
    %c0_i32_1 = arith.constant 0 : i32
    return %c0_i32, %c0_i32_0 : i32, i32
  }
  func.func @transform_1(%arg0: i32) -> (i32, i32) {
    %c0_i32 = arith.constant 0 : i32
    %c0_i32_0 = arith.constant 0 : i32
    return %c0_i32, %arg0 : i32, i32
  }
  func.func @transform_2(%arg0: i32) -> (i32, i32) {
    %c0_i32 = arith.constant 0 : i32
    %c0_i32_0 = arith.constant 0 : i32
    %c0_i32_1 = arith.constant 0 : i32
    return %c0_i32, %c0_i32_0 : i32, i32
  }
  func.func @transform_3(%arg0: i32) -> (i32, i32) {
    %c0_i32 = arith.constant 0 : i32
    %c0_i32_0 = arith.constant 0 : i32
    %c0_i32_1 = arith.constant 0 : i32
    return %c0_i32, %c0_i32_0 : i32, i32
  }
  func.func @transform_4(%arg0: i32) -> (i32, i32) {
    %c0_i32 = arith.constant 0 : i32
    %c0_i32_0 = arith.constant 0 : i32
    return %c0_i32, %arg0 : i32, i32
  }
  func.func @transform_5(%arg0: i32) -> (i32, i32) {
    %c0_i32 = arith.constant 0 : i32
    %c0_i32_0 = arith.constant 0 : i32
    return %c0_i32, %arg0 : i32, i32
  }
}

module attributes {stable_mosaic.version = 11 : i64} {
  func.func @_conv_fused_kernel(%arg0: i32, %arg1: memref<32x144xbf16, #tpu.memory_space<vmem>>, %arg2: memref<144x128xbf16, #tpu.memory_space<vmem>>, %arg3: memref<32x1xf32, #tpu.memory_space<vmem>>, %arg4: memref<32x1xf32, #tpu.memory_space<vmem>>, %arg5: memref<32x128xbf16, #tpu.memory_space<vmem>>) attributes {dimension_semantics = [#tpu.dimension_semantics<parallel>], iteration_bounds = array<i64: 1>, scalar_prefetch = 0 : i64, scratch_operands = 0 : i64, tpu.core_type = #tpu.core_type<tc>, window_params = [{pipeline_mode = #tpu.pipeline_mode<synchronous>, transform_indices = @transform_0, window_bounds = array<i64: 32, 144>}, {transform_indices = @transform_1, window_bounds = array<i64: 144, 128>}, {pipeline_mode = #tpu.pipeline_mode<synchronous>, transform_indices = @transform_2, window_bounds = array<i64: 32, 1>}, {pipeline_mode = #tpu.pipeline_mode<synchronous>, transform_indices = @transform_3, window_bounds = array<i64: 32, 1>}, {transform_indices = @transform_4, window_bounds = array<i64: 32, 128>}]} {
    %c0 = arith.constant 0 : index
    %c0_0 = arith.constant 0 : index
    %0 = vector.load %arg1[%c0, %c0_0] : memref<32x144xbf16, #tpu.memory_space<vmem>>, vector<32x144xbf16>
    %c0_1 = arith.constant 0 : index
    %c0_2 = arith.constant 0 : index
    %1 = vector.load %arg2[%c0_1, %c0_2] : memref<144x128xbf16, #tpu.memory_space<vmem>>, vector<144x128xbf16>
    %cst = arith.constant dense<0.000000e+00> : vector<32x128xf32>
    %2 = tpu.matmul %0, %1, %cst {dimension_numbers = #tpu.dot_dimension_numbers<[1], [0], [0], [1], [0, 0, 1, 1], [], []>} : vector<32x144xbf16>, vector<144x128xbf16>, vector<32x128xf32> -> vector<32x128xf32>
    %c0_3 = arith.constant 0 : index
    %c0_4 = arith.constant 0 : index
    %3 = vector.load %arg3[%c0_3, %c0_4] : memref<32x1xf32, #tpu.memory_space<vmem>>, vector<32x1xf32>
    %4 = vector.broadcast %3 : vector<32x1xf32> to vector<32x128xf32>
    %5 = arith.mulf %2, %4 : vector<32x128xf32>
    %c0_5 = arith.constant 0 : index
    %c0_6 = arith.constant 0 : index
    %6 = vector.load %arg4[%c0_5, %c0_6] : memref<32x1xf32, #tpu.memory_space<vmem>>, vector<32x1xf32>
    %7 = vector.broadcast %6 : vector<32x1xf32> to vector<32x128xf32>
    %8 = arith.addf %5, %7 : vector<32x128xf32>
    %cst_7 = arith.constant 0.000000e+00 : f32
    %9 = vector.broadcast %cst_7 : f32 to vector<32x128xf32>
    %10 = arith.maximumf %8, %9 : vector<32x128xf32>
    %11 = arith.truncf %10 : vector<32x128xf32> to vector<32x128xbf16>
    %c0_8 = arith.constant 0 : index
    %c0_9 = arith.constant 0 : index
    %12 = vector.load %arg5[%c0_8, %c0_9] : memref<32x128xbf16, #tpu.memory_space<vmem>>, vector<32x128xbf16>
    tpu.vector_store %arg5[%c0_8, %c0_9], %11 {strides = array<i32>} : memref<32x128xbf16, #tpu.memory_space<vmem>>, vector<32x128xbf16>,
    return
  }
  func.func @transform_0(%arg0: i32) -> (i32, i32) {
    %c0_i32 = arith.constant 0 : i32
    %c0_i32_0 = arith.constant 0 : i32
    %c0_i32_1 = arith.constant 0 : i32
    return %c0_i32, %c0_i32_0 : i32, i32
  }
  func.func @transform_1(%arg0: i32) -> (i32, i32) {
    %c0_i32 = arith.constant 0 : i32
    %c0_i32_0 = arith.constant 0 : i32
    return %c0_i32, %arg0 : i32, i32
  }
  func.func @transform_2(%arg0: i32) -> (i32, i32) {
    %c0_i32 = arith.constant 0 : i32
    %c0_i32_0 = arith.constant 0 : i32
    %c0_i32_1 = arith.constant 0 : i32
    return %c0_i32, %c0_i32_0 : i32, i32
  }
  func.func @transform_3(%arg0: i32) -> (i32, i32) {
    %c0_i32 = arith.constant 0 : i32
    %c0_i32_0 = arith.constant 0 : i32
    %c0_i32_1 = arith.constant 0 : i32
    return %c0_i32, %c0_i32_0 : i32, i32
  }
  func.func @transform_4(%arg0: i32) -> (i32, i32) {
    %c0_i32 = arith.constant 0 : i32
    %c0_i32_0 = arith.constant 0 : i32
    return %c0_i32, %arg0 : i32, i32
  }
}

module attributes {stable_mosaic.version = 11 : i64} {
  func.func @_conv_fused_kernel(%arg0: i32, %arg1: memref<32x288xbf16, #tpu.memory_space<vmem>>, %arg2: memref<288x128xbf16, #tpu.memory_space<vmem>>, %arg3: memref<32x1xf32, #tpu.memory_space<vmem>>, %arg4: memref<32x1xf32, #tpu.memory_space<vmem>>, %arg5: memref<32x128xbf16, #tpu.memory_space<vmem>>, %arg6: memref<32x128xbf16, #tpu.memory_space<vmem>>) attributes {dimension_semantics = [#tpu.dimension_semantics<parallel>], iteration_bounds = array<i64: 1>, scalar_prefetch = 0 : i64, scratch_operands = 0 : i64, tpu.core_type = #tpu.core_type<tc>, window_params = [{pipeline_mode = #tpu.pipeline_mode<synchronous>, transform_indices = @transform_0, window_bounds = array<i64: 32, 288>}, {transform_indices = @transform_1, window_bounds = array<i64: 288, 128>}, {pipeline_mode = #tpu.pipeline_mode<synchronous>, transform_indices = @transform_2, window_bounds = array<i64: 32, 1>}, {pipeline_mode = #tpu.pipeline_mode<synchronous>, transform_indices = @transform_3, window_bounds = array<i64: 32, 1>}, {transform_indices = @transform_4, window_bounds = array<i64: 32, 128>}, {transform_indices = @transform_5, window_bounds = array<i64: 32, 128>}]} {
    %c0 = arith.constant 0 : index
    %c0_0 = arith.constant 0 : index
    %0 = vector.load %arg1[%c0, %c0_0] : memref<32x288xbf16, #tpu.memory_space<vmem>>, vector<32x288xbf16>
    %c0_1 = arith.constant 0 : index
    %c0_2 = arith.constant 0 : index
    %1 = vector.load %arg2[%c0_1, %c0_2] : memref<288x128xbf16, #tpu.memory_space<vmem>>, vector<288x128xbf16>
    %cst = arith.constant dense<0.000000e+00> : vector<32x128xf32>
    %2 = tpu.matmul %0, %1, %cst {dimension_numbers = #tpu.dot_dimension_numbers<[1], [0], [0], [1], [0, 0, 1, 1], [], []>} : vector<32x288xbf16>, vector<288x128xbf16>, vector<32x128xf32> -> vector<32x128xf32>
    %c0_3 = arith.constant 0 : index
    %c0_4 = arith.constant 0 : index
    %3 = vector.load %arg3[%c0_3, %c0_4] : memref<32x1xf32, #tpu.memory_space<vmem>>, vector<32x1xf32>
    %4 = vector.broadcast %3 : vector<32x1xf32> to vector<32x128xf32>
    %5 = arith.mulf %2, %4 : vector<32x128xf32>
    %c0_5 = arith.constant 0 : index
    %c0_6 = arith.constant 0 : index
    %6 = vector.load %arg4[%c0_5, %c0_6] : memref<32x1xf32, #tpu.memory_space<vmem>>, vector<32x1xf32>
    %7 = vector.broadcast %6 : vector<32x1xf32> to vector<32x128xf32>
    %8 = arith.addf %5, %7 : vector<32x128xf32>
    %c0_7 = arith.constant 0 : index
    %c0_8 = arith.constant 0 : index
    %9 = vector.load %arg5[%c0_7, %c0_8] : memref<32x128xbf16, #tpu.memory_space<vmem>>, vector<32x128xbf16>
    %10 = arith.extf %9 : vector<32x128xbf16> to vector<32x128xf32>
    %11 = arith.addf %8, %10 : vector<32x128xf32>
    %cst_9 = arith.constant 0.000000e+00 : f32
    %12 = vector.broadcast %cst_9 : f32 to vector<32x128xf32>
    %13 = arith.maximumf %11, %12 : vector<32x128xf32>
    %14 = arith.truncf %13 : vector<32x128xf32> to vector<32x128xbf16>
    %c0_10 = arith.constant 0 : index
    %c0_11 = arith.constant 0 : index
    %15 = vector.load %arg6[%c0_10, %c0_11] : memref<32x128xbf16, #tpu.memory_space<vmem>>, vector<32x128xbf16>
    tpu.vector_store %arg6[%c0_10, %c0_11], %14 {strides = array<i32>} : memref<32x128xbf16, #tpu.memory_space<vmem>>, vector<32x128xbf16>,
    return
  }
  func.func @transform_0(%arg0: i32) -> (i32, i32) {
    %c0_i32 = arith.constant 0 : i32
    %c0_i32_0 = arith.constant 0 : i32
    %c0_i32_1 = arith.constant 0 : i32
    return %c0_i32, %c0_i32_0 : i32, i32
  }
  func.func @transform_1(%arg0: i32) -> (i32, i32) {
    %c0_i32 = arith.constant 0 : i32
    %c0_i32_0 = arith.constant 0 : i32
    return %c0_i32, %arg0 : i32, i32
  }
  func.func @transform_2(%arg0: i32) -> (i32, i32) {
    %c0_i32 = arith.constant 0 : i32
    %c0_i32_0 = arith.constant 0 : i32
    %c0_i32_1 = arith.constant 0 : i32
    return %c0_i32, %c0_i32_0 : i32, i32
  }
  func.func @transform_3(%arg0: i32) -> (i32, i32) {
    %c0_i32 = arith.constant 0 : i32
    %c0_i32_0 = arith.constant 0 : i32
    %c0_i32_1 = arith.constant 0 : i32
    return %c0_i32, %c0_i32_0 : i32, i32
  }
  func.func @transform_4(%arg0: i32) -> (i32, i32) {
    %c0_i32 = arith.constant 0 : i32
    %c0_i32_0 = arith.constant 0 : i32
    return %c0_i32, %arg0 : i32, i32
  }
  func.func @transform_5(%arg0: i32) -> (i32, i32) {
    %c0_i32 = arith.constant 0 : i32
    %c0_i32_0 = arith.constant 0 : i32
    return %c0_i32, %arg0 : i32, i32
  }
}

module attributes {stable_mosaic.version = 11 : i64} {
  func.func @_gap_fc_kernel(%arg0: i32, %arg1: memref<2x64x32xbf16, #tpu.memory_space<vmem>>, %arg2: memref<32x10xf32, #tpu.memory_space<vmem>>, %arg3: memref<1x10xf32, #tpu.memory_space<vmem>>, %arg4: memref<2x10xf32, #tpu.memory_space<vmem>>, %arg5: memref<2x32xf32, #tpu.memory_space<vmem>>) attributes {dimension_semantics = [#tpu.dimension_semantics<arbitrary>], iteration_bounds = array<i64: 1>, scalar_prefetch = 0 : i64, scratch_operands = 0 : i64, tpu.core_type = #tpu.core_type<tc>, window_params = [{pipeline_mode = #tpu.pipeline_mode<synchronous>, transform_indices = @transform_0, window_bounds = array<i64: 2, 64, 32>}, {pipeline_mode = #tpu.pipeline_mode<synchronous>, transform_indices = @transform_1, window_bounds = array<i64: 32, 10>}, {pipeline_mode = #tpu.pipeline_mode<synchronous>, transform_indices = @transform_2, window_bounds = array<i64: 1, 10>}, {pipeline_mode = #tpu.pipeline_mode<synchronous>, transform_indices = @transform_3, window_bounds = array<i64: 2, 10>}, {pipeline_mode = #tpu.pipeline_mode<synchronous>, transform_indices = @transform_4, window_bounds = array<i64: 2, 32>}]} {
    %c0 = arith.constant 0 : index
    %c0_0 = arith.constant 0 : index
    %c0_1 = arith.constant 0 : index
    %0 = vector.load %arg1[%c0, %c0_0, %c0_1] : memref<2x64x32xbf16, #tpu.memory_space<vmem>>, vector<2x64x32xbf16>
    %1 = arith.extf %0 : vector<2x64x32xbf16> to vector<2x64x32xf32>
    %cst = arith.constant dense<0.000000e+00> : vector<2x32xf32>
    %2 = vector.multi_reduction <add>, %1, %cst [1] : vector<2x64x32xf32> to vector<2x32xf32>
    %cst_2 = arith.constant 6.400000e+01 : f32
    %3 = vector.broadcast %cst_2 : f32 to vector<2x32xf32>
    %4 = arith.divf %2, %3 : vector<2x32xf32>
    %c0_3 = arith.constant 0 : index
    %c0_4 = arith.constant 0 : index
    %5 = vector.load %arg5[%c0_3, %c0_4] : memref<2x32xf32, #tpu.memory_space<vmem>>, vector<2x32xf32>
    tpu.vector_store %arg5[%c0_3, %c0_4], %4 {strides = array<i32>} : memref<2x32xf32, #tpu.memory_space<vmem>>, vector<2x32xf32>,
    %c0_5 = arith.constant 0 : index
    %c0_6 = arith.constant 0 : index
    %6 = vector.load %arg2[%c0_5, %c0_6] : memref<32x10xf32, #tpu.memory_space<vmem>>, vector<32x10xf32>
    %cst_7 = arith.constant dense<0.000000e+00> : vector<2x10xf32>
    %7 = tpu.matmul %4, %6, %cst_7 {dimension_numbers = #tpu.dot_dimension_numbers<[1], [0], [0], [1], [0, 0, 1, 1], [], []>} : vector<2x32xf32>, vector<32x10xf32>, vector<2x10xf32> -> vector<2x10xf32>
    %c0_8 = arith.constant 0 : index
    %c0_9 = arith.constant 0 : index
    %8 = vector.load %arg3[%c0_8, %c0_9] : memref<1x10xf32, #tpu.memory_space<vmem>>, vector<1x10xf32>
    %9 = vector.broadcast %8 : vector<1x10xf32> to vector<2x10xf32>
    %10 = arith.addf %7, %9 : vector<2x10xf32>
    %c0_10 = arith.constant 0 : index
    %c0_11 = arith.constant 0 : index
    %11 = vector.load %arg4[%c0_10, %c0_11] : memref<2x10xf32, #tpu.memory_space<vmem>>, vector<2x10xf32>
    tpu.vector_store %arg4[%c0_10, %c0_11], %10 {strides = array<i32>} : memref<2x10xf32, #tpu.memory_space<vmem>>, vector<2x10xf32>,
    return
  }
  func.func @transform_0(%arg0: i32) -> (i32, i32, i32) {
    %c0_i32 = arith.constant 0 : i32
    %c0_i32_0 = arith.constant 0 : i32
    %c0_i32_1 = arith.constant 0 : i32
    %c0_i32_2 = arith.constant 0 : i32
    return %c0_i32, %c0_i32_0, %c0_i32_1 : i32, i32, i32
  }
  func.func @transform_1(%arg0: i32) -> (i32, i32) {
    %c0_i32 = arith.constant 0 : i32
    %c0_i32_0 = arith.constant 0 : i32
    %c0_i32_1 = arith.constant 0 : i32
    return %c0_i32, %c0_i32_0 : i32, i32
  }
  func.func @transform_2(%arg0: i32) -> (i32, i32) {
    %c0_i32 = arith.constant 0 : i32
    %c0_i32_0 = arith.constant 0 : i32
    %c0_i32_1 = arith.constant 0 : i32
    return %c0_i32, %c0_i32_0 : i32, i32
  }
  func.func @transform_3(%arg0: i32) -> (i32, i32) {
    %c0_i32 = arith.constant 0 : i32
    %c0_i32_0 = arith.constant 0 : i32
    %c0_i32_1 = arith.constant 0 : i32
    return %c0_i32, %c0_i32_0 : i32, i32
  }
  func.func @transform_4(%arg0: i32) -> (i32, i32) {
    %c0_i32 = arith.constant 0 : i32
    %c0_i32_0 = arith.constant 0 : i32
    %c0_i32_1 = arith.constant 0 : i32
    return %c0_i32, %c0_i32_0 : i32, i32
  }
}

module attributes {stable_mosaic.version = 11 : i64} {
  func.func @_conv_fused_kernel(%arg0: i32, %arg1: memref<32x16xbf16, #tpu.memory_space<vmem>>, %arg2: memref<16x128xbf16, #tpu.memory_space<vmem>>, %arg3: memref<32x1xf32, #tpu.memory_space<vmem>>, %arg4: memref<32x1xf32, #tpu.memory_space<vmem>>, %arg5: memref<32x128xbf16, #tpu.memory_space<vmem>>) attributes {dimension_semantics = [#tpu.dimension_semantics<parallel>], iteration_bounds = array<i64: 1>, scalar_prefetch = 0 : i64, scratch_operands = 0 : i64, tpu.core_type = #tpu.core_type<tc>, window_params = [{pipeline_mode = #tpu.pipeline_mode<synchronous>, transform_indices = @transform_0, window_bounds = array<i64: 32, 16>}, {transform_indices = @transform_1, window_bounds = array<i64: 16, 128>}, {pipeline_mode = #tpu.pipeline_mode<synchronous>, transform_indices = @transform_2, window_bounds = array<i64: 32, 1>}, {pipeline_mode = #tpu.pipeline_mode<synchronous>, transform_indices = @transform_3, window_bounds = array<i64: 32, 1>}, {transform_indices = @transform_4, window_bounds = array<i64: 32, 128>}]} {
    %c0 = arith.constant 0 : index
    %c0_0 = arith.constant 0 : index
    %0 = vector.load %arg1[%c0, %c0_0] : memref<32x16xbf16, #tpu.memory_space<vmem>>, vector<32x16xbf16>
    %c0_1 = arith.constant 0 : index
    %c0_2 = arith.constant 0 : index
    %1 = vector.load %arg2[%c0_1, %c0_2] : memref<16x128xbf16, #tpu.memory_space<vmem>>, vector<16x128xbf16>
    %cst = arith.constant dense<0.000000e+00> : vector<32x128xf32>
    %2 = tpu.matmul %0, %1, %cst {dimension_numbers = #tpu.dot_dimension_numbers<[1], [0], [0], [1], [0, 0, 1, 1], [], []>} : vector<32x16xbf16>, vector<16x128xbf16>, vector<32x128xf32> -> vector<32x128xf32>
    %c0_3 = arith.constant 0 : index
    %c0_4 = arith.constant 0 : index
    %3 = vector.load %arg3[%c0_3, %c0_4] : memref<32x1xf32, #tpu.memory_space<vmem>>, vector<32x1xf32>
    %4 = vector.broadcast %3 : vector<32x1xf32> to vector<32x128xf32>
    %5 = arith.mulf %2, %4 : vector<32x128xf32>
    %c0_5 = arith.constant 0 : index
    %c0_6 = arith.constant 0 : index
    %6 = vector.load %arg4[%c0_5, %c0_6] : memref<32x1xf32, #tpu.memory_space<vmem>>, vector<32x1xf32>
    %7 = vector.broadcast %6 : vector<32x1xf32> to vector<32x128xf32>
    %8 = arith.addf %5, %7 : vector<32x128xf32>
    %9 = arith.truncf %8 : vector<32x128xf32> to vector<32x128xbf16>
    %c0_7 = arith.constant 0 : index
    %c0_8 = arith.constant 0 : index
    %10 = vector.load %arg5[%c0_7, %c0_8] : memref<32x128xbf16, #tpu.memory_space<vmem>>, vector<32x128xbf16>
    tpu.vector_store %arg5[%c0_7, %c0_8], %9 {strides = array<i32>} : memref<32x128xbf16, #tpu.memory_space<vmem>>, vector<32x128xbf16>,
    return
  }
  func.func @transform_0(%arg0: i32) -> (i32, i32) {
    %c0_i32 = arith.constant 0 : i32
    %c0_i32_0 = arith.constant 0 : i32
    %c0_i32_1 = arith.constant 0 : i32
    return %c0_i32, %c0_i32_0 : i32, i32
  }
  func.func @transform_1(%arg0: i32) -> (i32, i32) {
    %c0_i32 = arith.constant 0 : i32
    %c0_i32_0 = arith.constant 0 : i32
    return %c0_i32, %arg0 : i32, i32
  }
  func.func @transform_2(%arg0: i32) -> (i32, i32) {
    %c0_i32 = arith.constant 0 : i32
    %c0_i32_0 = arith.constant 0 : i32
    %c0_i32_1 = arith.constant 0 : i32
    return %c0_i32, %c0_i32_0 : i32, i32
  }
  func.func @transform_3(%arg0: i32) -> (i32, i32) {
    %c0_i32 = arith.constant 0 : i32
    %c0_i32_0 = arith.constant 0 : i32
    %c0_i32_1 = arith.constant 0 : i32
    return %c0_i32, %c0_i32_0 : i32, i32
  }
  func.func @transform_4(%arg0: i32) -> (i32, i32) {
    %c0_i32 = arith.constant 0 : i32
    %c0_i32_0 = arith.constant 0 : i32
    return %c0_i32, %arg0 : i32, i32
  }
}

</mosaic_0001>

<llo_original>
// kernel: resnet_fed_forward.7
$region0: #{resnet_fed_forward.7}
  #allocation0 [shape = 'u32[]', space=smem, size = 0x4, offset = 0x4, fixed_abs, tag = 'smem constant byte address 0x4 - core index']
  #allocation1 [shape = 'u32[144,128]{1,0:T(1,128)}', space=vmem, size = 0x12000, scoped, tag = 'internal scratch']
  %s0 = inlined_call_operand.vmem [shape: bf16[16,27], index: 0, kind: input, shape index: {}]
  %s1 = inlined_call_operand.vmem [shape: bf16[27,512], index: 1, kind: input, shape index: {}]
  %s2 = inlined_call_operand.vmem [shape: f32[16,1], index: 2, kind: input, shape index: {}]
  %s3 = inlined_call_operand.vmem [shape: f32[16,1], index: 3, kind: input, shape index: {}]
  %s4 = inlined_call_operand.vmem [shape: bf16[16,512], index: 4, kind: output, shape index: {}]
  %s5 = sld [smem:[#allocation0]]
  $region121: #{resnet_fed_forward.7} parent=0
    _
  %s7 = ssub.s32 1, %s5
  %s8 = scalar_select 0, %s7, %s5
  $region1: #{resnet_fed_forward.7} parent=0
    #allocation2 [shape = 'u8[32768]{0}', space=vmem, size = 0x8000, scoped, tag = 'input window, operand 1']
    #allocation3 [shape = 'u8[16384]{0}', space=vmem, size = 0x4000, scoped, tag = 'output window, operand 0']
    loop: start=0, step=1, limit=4
    $region2: #{resnet_fed_forward.7} parent=1 // loop_pre_header
      _
    $region3: #{resnet_fed_forward.7} parent=1 // loop_header
      %s10 = sphi 0, %s14
      %p11 = scmp.ge.s32.totalorder %s10, 4
      %s18 = sphi 0, %s18
      %s20 = sphi 0, %s18
      %s21 = sphi 0, %s20
      %s35 = sphi 0, %s21
      %s41 = sphi 0, %s43
      %s44 = sphi 0, %s41
      %s45 = sphi 0, %s44
      %s61 = sphi 0, %s45
      %s65 = sphi 0, %s65
      %s67 = sphi 0, %s65
      %s68 = sphi 0, %s67
      %s82 = sphi 0, %s68
      %s86 = sphi 0, %s86
      %s88 = sphi 0, %s86
      %s89 = sphi 0, %s88
      %s103 = sphi 0, %s89
      %s109 = sphi 0, %s111
      %s112 = sphi 0, %s109
      %s113 = sphi 0, %s112
      %s129 = sphi 0, %s113
    $region4: #{resnet_fed_forward.7} parent=1 // loop_header_branch
      %13 = sbr.rel (%p11) target = $region8
    $region5: #{resnet_fed_forward.7} parent=1 // loop_body
      %s15 = ssub.s32 %s10, 1
      %s16 = ssub.s32 %s10, 2
      %s17 = sadd.s32 %s10, 1
      %s19 = sadd.s32 %s18, 1
      %p22 = scmp.eq.s32.totalorder %s10, 1
      %p23 = scmp.ne.s32.totalorder %s18, %s20
      %p24 = scmp.eq.s32.totalorder %s10, 0
      %p25 = por %p23, %p24
      %p26 = scmp.ne.s32.totalorder %s18, %s20
      %p27 = scmp.eq.s32.totalorder %s15, 1
      %p28 = por %p26, %p27
      %p29 = scmp.ne.s32.totalorder %s20, %s21
      %p30 = scmp.eq.s32.totalorder %s15, 0
      %p31 = por %p29, %p30
      %p32 = scmp.ne.s32.totalorder %s20, %s21
      %p33 = scmp.eq.s32.totalorder %s16, 1
      %p34 = por %p32, %p33
      %p36 = scmp.ne.s32.totalorder %s21, %s35
      %p37 = scmp.eq.s32.totalorder %s16, 0
      %p38 = por %p36, %p37
      %s39 = ssub.s32 %s10, %s17
      %p40 = scmp.eq.s32.totalorder %s39, 0
      %s42 = sadd.s32 %s41, 1
      %s43 = scalar_select %p40, %s41, %s42
      %p46 = pneg %p40
      %p47 = scmp.eq.s32.totalorder %s10, 1
      %p48 = por %p46, %p47
      %p49 = scmp.ne.s32.totalorder %s41, %s44
      %p50 = scmp.eq.s32.totalorder %s10, 0
      %p51 = por %p49, %p50
      %p52 = scmp.ne.s32.totalorder %s41, %s44
      %p53 = scmp.eq.s32.totalorder %s15, 1
      %p54 = por %p52, %p53
      %p55 = scmp.ne.s32.totalorder %s44, %s45
      %p56 = scmp.eq.s32.totalorder %s15, 0
      %p57 = por %p55, %p56
      %p58 = scmp.ne.s32.totalorder %s44, %s45
      %p59 = scmp.eq.s32.totalorder %s16, 1
      %p60 = por %p58, %p59
      %p62 = scmp.ne.s32.totalorder %s45, %s61
      %p63 = scmp.eq.s32.totalorder %s16, 0
      %p64 = por %p62, %p63
      %s66 = sadd.s32 %s65, 1
      %p69 = scmp.eq.s32.totalorder %s10, 1
      %p70 = scmp.ne.s32.totalorder %s65, %s67
      %p71 = scmp.eq.s32.totalorder %s10, 0
      %p72 = por %p70, %p71
      %p73 = scmp.ne.s32.totalorder %s65, %s67
      %p74 = scmp.eq.s32.totalorder %s15, 1
      %p75 = por %p73, %p74
      %p76 = scmp.ne.s32.totalorder %s67, %s68
      %p77 = scmp.eq.s32.totalorder %s15, 0
      %p78 = por %p76, %p77
      %p79 = scmp.ne.s32.totalorder %s67, %s68
      %p80 = scmp.eq.s32.totalorder %s16, 1
      %p81 = por %p79, %p80
      %p83 = scmp.ne.s32.totalorder %s68, %s82
      %p84 = scmp.eq.s32.totalorder %s16, 0
      %p85 = por %p83, %p84
      %s87 = sadd.s32 %s86, 1
      %p90 = scmp.eq.s32.totalorder %s10, 1
      %p91 = scmp.ne.s32.totalorder %s86, %s88
      %p92 = scmp.eq.s32.totalorder %s10, 0
      %p93 = por %p91, %p92
      %p94 = scmp.ne.s32.totalorder %s86, %s88
      %p95 = scmp.eq.s32.totalorder %s15, 1
      %p96 = por %p94, %p95
      %p97 = scmp.ne.s32.totalorder %s88, %s89
      %p98 = scmp.eq.s32.totalorder %s15, 0
      %p99 = por %p97, %p98
      %p100 = scmp.ne.s32.totalorder %s88, %s89
      %p101 = scmp.eq.s32.totalorder %s16, 1
      %p102 = por %p100, %p101
      %p104 = scmp.ne.s32.totalorder %s89, %s103
      %p105 = scmp.eq.s32.totalorder %s16, 0
      %p106 = por %p104, %p105
      %s107 = ssub.s32 %s10, %s17
      %p108 = scmp.eq.s32.totalorder %s107, 0
      %s110 = sadd.s32 %s109, 1
      %s111 = scalar_select %p108, %s109, %s110
      %p114 = pneg %p108
      %p115 = scmp.eq.s32.totalorder %s10, 1
      %p116 = por %p114, %p115
      %p117 = scmp.ne.s32.totalorder %s109, %s112
      %p118 = scmp.eq.s32.totalorder %s10, 0
      %p119 = por %p117, %p118
      %p120 = scmp.ne.s32.totalorder %s109, %s112
      %p121 = scmp.eq.s32.totalorder %s15, 1
      %p122 = por %p120, %p121
      %p123 = scmp.ne.s32.totalorder %s112, %s113
      %p124 = scmp.eq.s32.totalorder %s15, 0
      %p125 = por %p123, %p124
      %p126 = scmp.ne.s32.totalorder %s112, %s113
      %p127 = scmp.eq.s32.totalorder %s16, 1
      %p128 = por %p126, %p127
      %p130 = scmp.ne.s32.totalorder %s113, %s129
      %p131 = scmp.eq.s32.totalorder %s16, 0
      %p132 = por %p130, %p131
      %p133 = scmp.le.s32.totalorder 1, %s10
      %p134 = scmp.lt.s32.totalorder %s10, 3
      %p135 = pnand %p133, %p134
      %p136 = pneg %p135
      // Predicated region
      $region9: #{resnet_fed_forward.7} parent=5 // pred_check
        _
      $region10: #{resnet_fed_forward.7} parent=5 // pred_check_branch
        %138 = sbr.rel (%p135) target = $region12
      $region11: #{resnet_fed_forward.7} parent=5 // pred_region
        %s139 = ssub.s32 %s10, 1
        // Predicated region
        $region13: #{resnet_fed_forward.7} parent=11 // pred_check
          %p140 = pneg %p31
        $region14: #{resnet_fed_forward.7} parent=11 // pred_check_branch
          %142 = sbr.rel (%p140) target = $region16
        $region15: #{resnet_fed_forward.7} parent=11 // pred_region
          _
        $region16: #{resnet_fed_forward.7} parent=11 // pred_fallthru
          _
        // Predicated region
        $region17: #{resnet_fed_forward.7} parent=11 // pred_check
          %p143 = pneg %p78
        $region18: #{resnet_fed_forward.7} parent=11 // pred_check_branch
          %145 = sbr.rel (%p143) target = $region20
        $region19: #{resnet_fed_forward.7} parent=11 // pred_region
          _
        $region20: #{resnet_fed_forward.7} parent=11 // pred_fallthru
          _
        // Predicated region
        $region21: #{resnet_fed_forward.7} parent=11 // pred_check
          %p146 = pneg %p99
        $region22: #{resnet_fed_forward.7} parent=11 // pred_check_branch
          %148 = sbr.rel (%p146) target = $region24
        $region23: #{resnet_fed_forward.7} parent=11 // pred_region
          _
        $region24: #{resnet_fed_forward.7} parent=11 // pred_fallthru
          _
      $region12: #{resnet_fed_forward.7} parent=5 // pred_fallthru
        _
      %p149 = scmp.lt.s32.totalorder %s10, 2
      // Predicated region
      $region25: #{resnet_fed_forward.7} parent=5 // pred_check
        %p150 = pneg %p149
      $region26: #{resnet_fed_forward.7} parent=5 // pred_check_branch
        %152 = sbr.rel (%p150) target = $region28
      $region27: #{resnet_fed_forward.7} parent=5 // pred_region
        // Predicated region
        $region29: #{resnet_fed_forward.7} parent=27 // pred_check
          %p153 = pneg %p51
        $region30: #{resnet_fed_forward.7} parent=27 // pred_check_branch
          %155 = sbr.rel (%p153) target = $region32
        $region31: #{resnet_fed_forward.7} parent=27 // pred_region
          %s156 = sand.u32 %s41, 1
          %s157 = sand.u32 %s41, 1
          %s158 = smul.addr %s157, 32
          %s159 = scalar_lea.vmem [#allocation2], %s158
          %s160 = smul.u32 2, %s10
          %s161 = smul.addr %s160, 4
          %s162 = scalar_lea.vmem %s1, %s161
          // Predicated region
          $region33: #{resnet_fed_forward.7} parent=31 // pred_check
            _
          $region34: #{resnet_fed_forward.7} parent=31 // pred_check_branch
            %164 = sbr.rel (0) target = $region36
          $region35: #{resnet_fed_forward.7} parent=31 // pred_region
            // Predicated region
            $region37: #{resnet_fed_forward.7} parent=35 // pred_check
              _
            $region38: #{resnet_fed_forward.7} parent=35 // pred_check_branch
              %166 = sbr.rel (0) target = $region40
            $region39: #{resnet_fed_forward.7} parent=35 // pred_region
              // Predicated region
              $region52: #{resnet_fed_forward.7} parent=39 // pred_check
                _
              $region53: #{resnet_fed_forward.7} parent=39 // pred_check_branch
                %188 = sbr.rel (0) target = $region55
              $region54: #{resnet_fed_forward.7} parent=39 // pred_region
                loop: start=0, step=1, limit=1
                $region56: #{resnet_fed_forward.7} parent=54 // loop_pre_header
                  _
                $region57: #{resnet_fed_forward.7} parent=54 // loop_header
                  %s190 = sphi 0, %s194
                  %p191 = scmp.ge.s32.totalorder %s190, 1
                  %s195 = sphi %s162, %s162
                  %s196 = sphi %s159, %s159
                $region58: #{resnet_fed_forward.7} parent=54 // loop_header_branch
                  %193 = sbr.rel (%p191) target = $region62
                $region59: #{resnet_fed_forward.7} parent=54 // loop_body
                  %v197 = vld [vmem:[%s195] sm:$0xff]
                  %198 = vst [vmem:[%s196] sm:$0xff] %v197
                  %v199 = vld [vmem:[%s195 + $0x10] sm:$0xff]
                  %200 = vst [vmem:[%s196 + $0x8] sm:$0xff] %v199
                  %v201 = vld [vmem:[%s195 + $0x20] sm:$0xff]
                  %202 = vst [vmem:[%s196 + $0x10] sm:$0xff] %v201
                  %v203 = vld [vmem:[%s195 + $0x30] sm:$0xff]
                  %204 = vst [vmem:[%s196 + $0x18] sm:$0xff] %v203
                $region60: #{resnet_fed_forward.7} parent=54 // loop_footer
                  %s194 = sadd.s32 1, %s190
                $region61: #{resnet_fed_forward.7} parent=54 // loop_footer_branch
                  %189 = sbr.rel target = $region57
                $region62: #{resnet_fed_forward.7} parent=54 // loop_exit
                  _
              $region55: #{resnet_fed_forward.7} parent=39 // pred_fallthru
                _
              // Predicated region
              $region63: #{resnet_fed_forward.7} parent=39 // pred_check
                _
              $region64: #{resnet_fed_forward.7} parent=39 // pred_check_branch
                %206 = sbr.rel target = $region66
              $region65: #{resnet_fed_forward.7} parent=39 // pred_region
                _
              $region66: #{resnet_fed_forward.7} parent=39 // pred_fallthru
                _
            $region40: #{resnet_fed_forward.7} parent=35 // pred_fallthru
              _
            // Predicated region
            $region41: #{resnet_fed_forward.7} parent=35 // pred_check
              _
            $region42: #{resnet_fed_forward.7} parent=35 // pred_check_branch
              %168 = sbr.rel target = $region44
            $region43: #{resnet_fed_forward.7} parent=35 // pred_region
              %s170 = ssub.s32 256, 1
              loop: start=0, step=1, limit=1
              $region45: #{resnet_fed_forward.7} parent=43 // loop_pre_header
                _
              $region46: #{resnet_fed_forward.7} parent=43 // loop_header
                %s172 = sphi 0, %s176
                %p173 = scmp.ge.s32.totalorder %s172, 1
                %s177 = sphi %s162, %s162
                %s178 = sphi %s159, %s159
              $region47: #{resnet_fed_forward.7} parent=43 // loop_header_branch
                %175 = sbr.rel (%p173) target = $region51
              $region48: #{resnet_fed_forward.7} parent=43 // loop_body
                %v179 = vld [vmem:[%s177] sm:%s170]
                %180 = vst [vmem:[%s178] sm:%s170] %v179
                %v181 = vld [vmem:[%s177 + $0x10] sm:%s170]
                %182 = vst [vmem:[%s178 + $0x8] sm:%s170] %v181
                %v183 = vld [vmem:[%s177 + $0x20] sm:%s170]
                %184 = vst [vmem:[%s178 + $0x10] sm:%s170] %v183
                %v185 = vld [vmem:[%s177 + $0x30] sm:%s170]
                %186 = vst [vmem:[%s178 + $0x18] sm:%s170] %v185
              $region49: #{resnet_fed_forward.7} parent=43 // loop_footer
                %s176 = sadd.s32 1, %s172
              $region50: #{resnet_fed_forward.7} parent=43 // loop_footer_branch
                %171 = sbr.rel target = $region46
              $region51: #{resnet_fed_forward.7} parent=43 // loop_exit
                _
            $region44: #{resnet_fed_forward.7} parent=35 // pred_fallthru
              _
          $region36: #{resnet_fed_forward.7} parent=31 // pred_fallthru
            _
          %207 = vnop
        $region32: #{resnet_fed_forward.7} parent=27 // pred_fallthru
          _
      $region28: #{resnet_fed_forward.7} parent=5 // pred_fallthru
        _
      %p208 = scmp.le.s32.totalorder 1, %s10
      %p209 = scmp.lt.s32.totalorder %s10, 3
      %p210 = pnand %p208, %p209
      %p211 = pneg %p210
      // Predicated region
      $region67: #{resnet_fed_forward.7} parent=5 // pred_check
        _
      $region68: #{resnet_fed_forward.7} parent=5 // pred_check_branch
        %213 = sbr.rel (%p210) target = $region70
      $region69: #{resnet_fed_forward.7} parent=5 // pred_region
        %s214 = ssub.s32 %s10, 1
        %s215 = sand.u32 %s44, 1
        %s216 = sand.u32 %s44, 1
        %s217 = smul.addr %s216, 32
        %s218 = scalar_lea.vmem [#allocation2], %s217
        // Predicated region
        $region71: #{resnet_fed_forward.7} parent=69 // pred_check
          %p219 = pneg %p57
        $region72: #{resnet_fed_forward.7} parent=69 // pred_check_branch
          %221 = sbr.rel (%p219) target = $region74
        $region73: #{resnet_fed_forward.7} parent=69 // pred_region
          _
        $region74: #{resnet_fed_forward.7} parent=69 // pred_fallthru
          _
        %p222 = pneg %p31
        %p223 = pneg %p28
        %s224 = sand.u32 %s44, 1
        %s225 = sand.u32 %s44, 1
        %s226 = smul.addr %s225, 32
        %s227 = scalar_lea.vmem [#allocation2], %s226
        %p228 = pneg %p57
        %p229 = pneg %p54
        %p230 = pneg %p78
        %p231 = pneg %p75
        %p232 = pneg %p99
        %p233 = pneg %p96
        %p234 = pneg %p125
        %p235 = pneg %p122
        %s236 = sand.u32 %s112, 1
        %s237 = sand.u32 %s112, 1
        %s238 = smul.addr %s237, 16
        %s239 = scalar_lea.vmem [#allocation3], %s238
        %s240 = smul.u32 2, %s15
        %s241 = smul.u32 2, %s15
        %v243 = vld [vmem:[%s0] sm:$0xf]
        %v244 = vld [vmem:[%s0 + $0x4] sm:$0xf]
        %v245 = vld [vmem:[%s218] sm:$0xff]
        %v246 = vld [vmem:[%s218 + $0x8] sm:$0xff]
        %v247 = vld [vmem:[%s218 + $0x10] sm:$0xff]
        %v248 = vld [vmem:[%s218 + $0x18] sm:$0x33]
        %v251 = vunpack.c.l.b16 %v243
        %v252 = vunpack.c.l.b16 %v244
        %v253 = vpack.c.b16 %v252, %v251
        %v258 = vunpack.c.l.b16 %v245
        %v259 = vunpack.c.h.b16 %v245
        %v260 = vunpack.c.l.b16 %v246
        %v261 = vunpack.c.h.b16 %v246
        %v262 = vunpack.c.l.b16 %v247
        %v263 = vunpack.c.h.b16 %v247
        %v264 = vunpack.c.l.b16 %v248
        %v265 = vunpack.c.h.b16 %v248
        %v266 = vpack.c.b16 %v260, %v258
        %v267 = vpack.c.b16 %v261, %v259
        %v268 = vpack.c.b16 %v264, %v262
        %v269 = vpack.c.b16 %v265, %v263
        %vm272 = vcmask 220160
        %v274 = vsel %vm272, %v253, 0
        %vm276 = vcmask 1044480
        %vm277 = vcmask 1045504
        %v278 = vsel %vm276, 4294967295, 65535
        %v279 = vsel %vm277, %v278, 0
        %v281 = vand.u32 %v268, %v279
        %v284 = vand.u32 %v269, %v279
        %286 = vmatprep.subr.bf16.mxu0 0
        %287 = vmatpush1.bf16.msra.mxu0 0
        %288 = vmatprep.subr.bf16.mxu0 0
        %289 = vmatpush1.bf16.msra.mxu0 0
        %290 = vmatprep.subr.bf16.mxu0 0
        %291 = vmatpush1.bf16.msra.mxu0 0
        %292 = vmatprep.subr.bf16.mxu0 0
        %293 = vmatpush1.bf16.msra.mxu0 0
        %294 = vmatprep.subr.bf16.mxu0 0
        %295 = vmatpush1.bf16.msra.mxu0 0
        %296 = vmatprep.subr.bf16.mxu0 0
        %297 = vmatpush1.bf16.msra.mxu0 0
        %298 = vmatprep.subr.bf16.mxu0 %v284
        %299 = vmatpush1.bf16.msra.mxu0 %v281
        %300 = vmatprep.subr.bf16.mxu0 %v267
        %301 = vmatpush1.bf16.msra.mxu0 %v266
        %302 = vmatprep.subr.bf16.mxu0 0
        %303 = vmatpush2.bf16.msra.mxu0 0
        %304 = vmatprep.subr.bf16.mxu0 0
        %305 = vmatpush2.bf16.msra.mxu0 0
        %306 = vmatprep.subr.bf16.mxu0 0
        %307 = vmatpush2.bf16.msra.mxu0 0
        %308 = vmatprep.subr.bf16.mxu0 0
        %309 = vmatpush2.bf16.msra.mxu0 0
        %310 = vmatprep.subr.bf16.mxu0 0
        %311 = vmatpush2.bf16.msra.mxu0 0
        %312 = vmatprep.subr.bf16.mxu0 0
        %313 = vmatpush2.bf16.msra.mxu0 0
        %314 = vmatprep.subr.bf16.mxu0 0
        %315 = vmatpush2.bf16.msra.mxu0 0
        %316 = vmatprep.subr.bf16.mxu0 0
        %317 = vmatpush2.bf16.msra.mxu0 0
        %318 = vmatprep.mubr.bf16.mxu0 0
        %319 = vmatmul.mubr.bf16.gmra.mxu0 %v274
        %v320 = vpop.f32.mrf.mxu0
        %v321 = vadd.f32 0.0, %v320
        %v322 = vpop.f32.mrf.mxu0
        %v323 = vadd.f32 0.0, %v322
        %v324 = vpop.f32.mrf.mxu0
        %v325 = vadd.f32 0.0, %v324
        %v326 = vpop.f32.mrf.mxu0
        %v327 = vadd.f32 0.0, %v326
        %328 = vdwg.mxu0
        %v329 = vld [vmem:[%s2] sm:$0xff]
        %v330 = vld [vmem:[%s2 + $0x8] sm:$0xff]
        %332 = vset.pattern.permute.xlu0 0
        %333 = vperm.xlu0 %332, %v329
        %v334 = vpop.permute.xlu0 %333
        %337 = vset.pattern.permute.xlu0 0
        %338 = vperm.xlu0 %337, %v330
        %v339 = vpop.permute.xlu0 %338
        %v341 = vmul.f32 %v321, %v334
        %v342 = vmul.f32 %v323, %v334
        %v343 = vmul.f32 %v325, %v339
        %v344 = vmul.f32 %v327, %v339
        %v345 = vld [vmem:[%s3] sm:$0xff]
        %v346 = vld [vmem:[%s3 + $0x8] sm:$0xff]
        %348 = vset.pattern.permute.xlu0 0
        %349 = vperm.xlu0 %348, %v345
        %v350 = vpop.permute.xlu0 %349
        %353 = vset.pattern.permute.xlu0 0
        %354 = vperm.xlu0 %353, %v346
        %v355 = vpop.permute.xlu0 %354
        %v357 = vadd.f32 %v341, %v350
        %v358 = vadd.f32 %v342, %v350
        %v359 = vadd.f32 %v343, %v355
        %v360 = vadd.f32 %v344, %v355
        %v361 = vmax.f32 %v357, 0.0
        %v362 = vmax.f32 %v358, 0.0
        %v363 = vmax.f32 %v359, 0.0
        %v364 = vmax.f32 %v360, 0.0
        %v365 = vpack.c.bf16 %v363, %v361
        %v366 = vpack.c.bf16 %v364, %v362
        %v369 = vunpack.c.l.b16 %v365
        %v370 = vunpack.c.l.b16 %v366
        %v371 = vunpack.c.h.b16 %v365
        %v372 = vunpack.c.h.b16 %v366
        %v373 = vpack.c.b16 %v370, %v369
        %v374 = vpack.c.b16 %v372, %v371
        %377 = vst [vmem:[%s239] sm:$0xff] %v373
        %378 = vst [vmem:[%s239 + $0x8] sm:$0xff] %v374
        %s379 = sand.u32 %s112, 1
        %s380 = sand.u32 %s112, 1
        %s381 = smul.addr %s380, 16
        %s382 = scalar_lea.vmem [#allocation3], %s381
        // Predicated region
        $region75: #{resnet_fed_forward.7} parent=69 // pred_check
          %p383 = pneg %p122
        $region76: #{resnet_fed_forward.7} parent=69 // pred_check_branch
          %385 = sbr.rel (%p383) target = $region78
        $region77: #{resnet_fed_forward.7} parent=69 // pred_region
          %s386 = smul.u32 2, %s15
          %s387 = smul.addr %s386, 4
          %s388 = scalar_lea.vmem %s4, %s387
          // Predicated region
          $region79: #{resnet_fed_forward.7} parent=77 // pred_check
            _
          $region80: #{resnet_fed_forward.7} parent=77 // pred_check_branch
            %390 = sbr.rel (0) target = $region82
          $region81: #{resnet_fed_forward.7} parent=77 // pred_region
            // Predicated region
            $region83: #{resnet_fed_forward.7} parent=81 // pred_check
              _
            $region84: #{resnet_fed_forward.7} parent=81 // pred_check_branch
              %392 = sbr.rel (0) target = $region86
            $region85: #{resnet_fed_forward.7} parent=81 // pred_region
              // Predicated region
              $region98: #{resnet_fed_forward.7} parent=85 // pred_check
                _
              $region99: #{resnet_fed_forward.7} parent=85 // pred_check_branch
                %410 = sbr.rel (0) target = $region101
              $region100: #{resnet_fed_forward.7} parent=85 // pred_region
                loop: start=0, step=1, limit=1
                $region102: #{resnet_fed_forward.7} parent=100 // loop_pre_header
                  _
                $region103: #{resnet_fed_forward.7} parent=100 // loop_header
                  %s412 = sphi 0, %s416
                  %p413 = scmp.ge.s32.totalorder %s412, 1
                  %s417 = sphi %s382, %s382
                  %s418 = sphi %s388, %s388
                $region104: #{resnet_fed_forward.7} parent=100 // loop_header_branch
                  %415 = sbr.rel (%p413) target = $region108
                $region105: #{resnet_fed_forward.7} parent=100 // loop_body
                  %v419 = vld [vmem:[%s417] sm:$0xff]
                  %420 = vst [vmem:[%s418] sm:$0xff] %v419
                  %v421 = vld [vmem:[%s417 + $0x8] sm:$0xff]
                  %422 = vst [vmem:[%s418 + $0x10] sm:$0xff] %v421
                $region106: #{resnet_fed_forward.7} parent=100 // loop_footer
                  %s416 = sadd.s32 1, %s412
                $region107: #{resnet_fed_forward.7} parent=100 // loop_footer_branch
                  %411 = sbr.rel target = $region103
                $region108: #{resnet_fed_forward.7} parent=100 // loop_exit
                  _
              $region101: #{resnet_fed_forward.7} parent=85 // pred_fallthru
                _
              // Predicated region
              $region109: #{resnet_fed_forward.7} parent=85 // pred_check
                _
              $region110: #{resnet_fed_forward.7} parent=85 // pred_check_branch
                %424 = sbr.rel target = $region112
              $region111: #{resnet_fed_forward.7} parent=85 // pred_region
                _
              $region112: #{resnet_fed_forward.7} parent=85 // pred_fallthru
                _
            $region86: #{resnet_fed_forward.7} parent=81 // pred_fallthru
              _
            // Predicated region
            $region87: #{resnet_fed_forward.7} parent=81 // pred_check
              _
            $region88: #{resnet_fed_forward.7} parent=81 // pred_check_branch
              %394 = sbr.rel target = $region90
            $region89: #{resnet_fed_forward.7} parent=81 // pred_region
              %s396 = ssub.s32 256, 1
              loop: start=0, step=1, limit=1
              $region91: #{resnet_fed_forward.7} parent=89 // loop_pre_header
                _
              $region92: #{resnet_fed_forward.7} parent=89 // loop_header
                %s398 = sphi 0, %s402
                %p399 = scmp.ge.s32.totalorder %s398, 1
                %s403 = sphi %s382, %s382
                %s404 = sphi %s388, %s388
              $region93: #{resnet_fed_forward.7} parent=89 // loop_header_branch
                %401 = sbr.rel (%p399) target = $region97
              $region94: #{resnet_fed_forward.7} parent=89 // loop_body
                %v405 = vld [vmem:[%s403] sm:%s396]
                %406 = vst [vmem:[%s404] sm:%s396] %v405
                %v407 = vld [vmem:[%s403 + $0x8] sm:%s396]
                %408 = vst [vmem:[%s404 + $0x10] sm:%s396] %v407
              $region95: #{resnet_fed_forward.7} parent=89 // loop_footer
                %s402 = sadd.s32 1, %s398
              $region96: #{resnet_fed_forward.7} parent=89 // loop_footer_branch
                %397 = sbr.rel target = $region92
              $region97: #{resnet_fed_forward.7} parent=89 // loop_exit
                _
            $region90: #{resnet_fed_forward.7} parent=81 // pred_fallthru
              _
          $region82: #{resnet_fed_forward.7} parent=77 // pred_fallthru
            _
          %425 = vnop
        $region78: #{resnet_fed_forward.7} parent=69 // pred_fallthru
          _
      $region70: #{resnet_fed_forward.7} parent=5 // pred_fallthru
        _
      %p426 = scmp.le.s32.totalorder 2, %s10
      // Predicated region
      $region113: #{resnet_fed_forward.7} parent=5 // pred_check
        %p427 = pneg %p426
      $region114: #{resnet_fed_forward.7} parent=5 // pred_check_branch
        %429 = sbr.rel (%p427) target = $region116
      $region115: #{resnet_fed_forward.7} parent=5 // pred_region
        %s430 = ssub.s32 %s10, 2
        // Predicated region
        $region117: #{resnet_fed_forward.7} parent=115 // pred_check
          %p431 = pneg %p128
        $region118: #{resnet_fed_forward.7} parent=115 // pred_check_branch
          %433 = sbr.rel (%p431) target = $region120
        $region119: #{resnet_fed_forward.7} parent=115 // pred_region
          %s434 = sand.u32 %s113, 1
          %s435 = sand.u32 %s113, 1
          %s436 = smul.addr %s435, 16
          %s437 = scalar_lea.vmem [#allocation3], %s436
        $region120: #{resnet_fed_forward.7} parent=115 // pred_fallthru
          _
      $region116: #{resnet_fed_forward.7} parent=5 // pred_fallthru
        _
    $region6: #{resnet_fed_forward.7} parent=1 // loop_footer
      %s14 = sadd.s32 1, %s10
    $region7: #{resnet_fed_forward.7} parent=1 // loop_footer_branch
      %9 = sbr.rel target = $region3
    $region8: #{resnet_fed_forward.7} parent=1 // loop_exit
      _

// kernel: resnet_fed_forward.8
$region0: #{resnet_fed_forward.8}
  #allocation0 [shape = 'u32[]', space=smem, size = 0x4, offset = 0x4, fixed_abs, tag = 'smem constant byte address 0x4 - core index']
  #allocation1 [shape = 'u32[144,128]{1,0:T(1,128)}', space=vmem, size = 0x12000, scoped, tag = 'internal scratch']
  %s0 = inlined_call_operand.vmem [shape: bf16[16,144], index: 0, kind: input, shape index: {}]
  %s1 = inlined_call_operand.vmem [shape: bf16[144,512], index: 1, kind: input, shape index: {}]
  %s2 = inlined_call_operand.vmem [shape: f32[16,1], index: 2, kind: input, shape index: {}]
  %s3 = inlined_call_operand.vmem [shape: f32[16,1], index: 3, kind: input, shape index: {}]
  %s4 = inlined_call_operand.vmem [shape: bf16[16,512], index: 4, kind: output, shape index: {}]
  %s5 = sld [smem:[#allocation0]]
  $region121: #{resnet_fed_forward.8} parent=0
    _
  %s7 = ssub.s32 1, %s5
  %s8 = scalar_select 0, %s7, %s5
  $region1: #{resnet_fed_forward.8} parent=0
    #allocation2 [shape = 'u8[147456]{0}', space=vmem, size = 0x24000, scoped, tag = 'input window, operand 1']
    #allocation3 [shape = 'u8[16384]{0}', space=vmem, size = 0x4000, scoped, tag = 'output window, operand 0']
    loop: start=0, step=1, limit=4
    $region2: #{resnet_fed_forward.8} parent=1 // loop_pre_header
      _
    $region3: #{resnet_fed_forward.8} parent=1 // loop_header
      %s10 = sphi 0, %s14
      %p11 = scmp.ge.s32.totalorder %s10, 4
      %s18 = sphi 0, %s18
      %s20 = sphi 0, %s18
      %s21 = sphi 0, %s20
      %s35 = sphi 0, %s21
      %s41 = sphi 0, %s43
      %s44 = sphi 0, %s41
      %s45 = sphi 0, %s44
      %s61 = sphi 0, %s45
      %s65 = sphi 0, %s65
      %s67 = sphi 0, %s65
      %s68 = sphi 0, %s67
      %s82 = sphi 0, %s68
      %s86 = sphi 0, %s86
      %s88 = sphi 0, %s86
      %s89 = sphi 0, %s88
      %s103 = sphi 0, %s89
      %s109 = sphi 0, %s111
      %s112 = sphi 0, %s109
      %s113 = sphi 0, %s112
      %s129 = sphi 0, %s113
    $region4: #{resnet_fed_forward.8} parent=1 // loop_header_branch
      %13 = sbr.rel (%p11) target = $region8
    $region5: #{resnet_fed_forward.8} parent=1 // loop_body
      %s15 = ssub.s32 %s10, 1
      %s16 = ssub.s32 %s10, 2
      %s17 = sadd.s32 %s10, 1
      %s19 = sadd.s32 %s18, 1
      %p22 = scmp.eq.s32.totalorder %s10, 1
      %p23 = scmp.ne.s32.totalorder %s18, %s20
      %p24 = scmp.eq.s32.totalorder %s10, 0
      %p25 = por %p23, %p24
      %p26 = scmp.ne.s32.totalorder %s18, %s20
      %p27 = scmp.eq.s32.totalorder %s15, 1
      %p28 = por %p26, %p27
      %p29 = scmp.ne.s32.totalorder %s20, %s21
      %p30 = scmp.eq.s32.totalorder %s15, 0
      %p31 = por %p29, %p30
      %p32 = scmp.ne.s32.totalorder %s20, %s21
      %p33 = scmp.eq.s32.totalorder %s16, 1
      %p34 = por %p32, %p33
      %p36 = scmp.ne.s32.totalorder %s21, %s35
      %p37 = scmp.eq.s32.totalorder %s16, 0
      %p38 = por %p36, %p37
      %s39 = ssub.s32 %s10, %s17
      %p40 = scmp.eq.s32.totalorder %s39, 0
      %s42 = sadd.s32 %s41, 1
      %s43 = scalar_select %p40, %s41, %s42
      %p46 = pneg %p40
      %p47 = scmp.eq.s32.totalorder %s10, 1
      %p48 = por %p46, %p47
      %p49 = scmp.ne.s32.totalorder %s41, %s44
      %p50 = scmp.eq.s32.totalorder %s10, 0
      %p51 = por %p49, %p50
      %p52 = scmp.ne.s32.totalorder %s41, %s44
      %p53 = scmp.eq.s32.totalorder %s15, 1
      %p54 = por %p52, %p53
      %p55 = scmp.ne.s32.totalorder %s44, %s45
      %p56 = scmp.eq.s32.totalorder %s15, 0
      %p57 = por %p55, %p56
      %p58 = scmp.ne.s32.totalorder %s44, %s45
      %p59 = scmp.eq.s32.totalorder %s16, 1
      %p60 = por %p58, %p59
      %p62 = scmp.ne.s32.totalorder %s45, %s61
      %p63 = scmp.eq.s32.totalorder %s16, 0
      %p64 = por %p62, %p63
      %s66 = sadd.s32 %s65, 1
      %p69 = scmp.eq.s32.totalorder %s10, 1
      %p70 = scmp.ne.s32.totalorder %s65, %s67
      %p71 = scmp.eq.s32.totalorder %s10, 0
      %p72 = por %p70, %p71
      %p73 = scmp.ne.s32.totalorder %s65, %s67
      %p74 = scmp.eq.s32.totalorder %s15, 1
      %p75 = por %p73, %p74
      %p76 = scmp.ne.s32.totalorder %s67, %s68
      %p77 = scmp.eq.s32.totalorder %s15, 0
      %p78 = por %p76, %p77
      %p79 = scmp.ne.s32.totalorder %s67, %s68
      %p80 = scmp.eq.s32.totalorder %s16, 1
      %p81 = por %p79, %p80
      %p83 = scmp.ne.s32.totalorder %s68, %s82
      %p84 = scmp.eq.s32.totalorder %s16, 0
      %p85 = por %p83, %p84
      %s87 = sadd.s32 %s86, 1
      %p90 = scmp.eq.s32.totalorder %s10, 1
      %p91 = scmp.ne.s32.totalorder %s86, %s88
      %p92 = scmp.eq.s32.totalorder %s10, 0
      %p93 = por %p91, %p92
      %p94 = scmp.ne.s32.totalorder %s86, %s88
      %p95 = scmp.eq.s32.totalorder %s15, 1
      %p96 = por %p94, %p95
      %p97 = scmp.ne.s32.totalorder %s88, %s89
      %p98 = scmp.eq.s32.totalorder %s15, 0
      %p99 = por %p97, %p98
      %p100 = scmp.ne.s32.totalorder %s88, %s89
      %p101 = scmp.eq.s32.totalorder %s16, 1
      %p102 = por %p100, %p101
      %p104 = scmp.ne.s32.totalorder %s89, %s103
      %p105 = scmp.eq.s32.totalorder %s16, 0
      %p106 = por %p104, %p105
      %s107 = ssub.s32 %s10, %s17
      %p108 = scmp.eq.s32.totalorder %s107, 0
      %s110 = sadd.s32 %s109, 1
      %s111 = scalar_select %p108, %s109, %s110
      %p114 = pneg %p108
      %p115 = scmp.eq.s32.totalorder %s10, 1
      %p116 = por %p114, %p115
      %p117 = scmp.ne.s32.totalorder %s109, %s112
      %p118 = scmp.eq.s32.totalorder %s10, 0
      %p119 = por %p117, %p118
      %p120 = scmp.ne.s32.totalorder %s109, %s112
      %p121 = scmp.eq.s32.totalorder %s15, 1
      %p122 = por %p120, %p121
      %p123 = scmp.ne.s32.totalorder %s112, %s113
      %p124 = scmp.eq.s32.totalorder %s15, 0
      %p125 = por %p123, %p124
      %p126 = scmp.ne.s32.totalorder %s112, %s113
      %p127 = scmp.eq.s32.totalorder %s16, 1
      %p128 = por %p126, %p127
      %p130 = scmp.ne.s32.totalorder %s113, %s129
      %p131 = scmp.eq.s32.totalorder %s16, 0
      %p132 = por %p130, %p131
      %p133 = scmp.le.s32.totalorder 1, %s10
      %p134 = scmp.lt.s32.totalorder %s10, 3
      %p135 = pnand %p133, %p134
      %p136 = pneg %p135
      // Predicated region
      $region9: #{resnet_fed_forward.8} parent=5 // pred_check
        _
      $region10: #{resnet_fed_forward.8} parent=5 // pred_check_branch
        %138 = sbr.rel (%p135) target = $region12
      $region11: #{resnet_fed_forward.8} parent=5 // pred_region
        %s139 = ssub.s32 %s10, 1
        // Predicated region
        $region13: #{resnet_fed_forward.8} parent=11 // pred_check
          %p140 = pneg %p31
        $region14: #{resnet_fed_forward.8} parent=11 // pred_check_branch
          %142 = sbr.rel (%p140) target = $region16
        $region15: #{resnet_fed_forward.8} parent=11 // pred_region
          _
        $region16: #{resnet_fed_forward.8} parent=11 // pred_fallthru
          _
        // Predicated region
        $region17: #{resnet_fed_forward.8} parent=11 // pred_check
          %p143 = pneg %p78
        $region18: #{resnet_fed_forward.8} parent=11 // pred_check_branch
          %145 = sbr.rel (%p143) target = $region20
        $region19: #{resnet_fed_forward.8} parent=11 // pred_region
          _
        $region20: #{resnet_fed_forward.8} parent=11 // pred_fallthru
          _
        // Predicated region
        $region21: #{resnet_fed_forward.8} parent=11 // pred_check
          %p146 = pneg %p99
        $region22: #{resnet_fed_forward.8} parent=11 // pred_check_branch
          %148 = sbr.rel (%p146) target = $region24
        $region23: #{resnet_fed_forward.8} parent=11 // pred_region
          _
        $region24: #{resnet_fed_forward.8} parent=11 // pred_fallthru
          _
      $region12: #{resnet_fed_forward.8} parent=5 // pred_fallthru
        _
      %p149 = scmp.lt.s32.totalorder %s10, 2
      // Predicated region
      $region25: #{resnet_fed_forward.8} parent=5 // pred_check
        %p150 = pneg %p149
      $region26: #{resnet_fed_forward.8} parent=5 // pred_check_branch
        %152 = sbr.rel (%p150) target = $region28
      $region27: #{resnet_fed_forward.8} parent=5 // pred_region
        // Predicated region
        $region29: #{resnet_fed_forward.8} parent=27 // pred_check
          %p153 = pneg %p51
        $region30: #{resnet_fed_forward.8} parent=27 // pred_check_branch
          %155 = sbr.rel (%p153) target = $region32
        $region31: #{resnet_fed_forward.8} parent=27 // pred_region
          %s156 = sand.u32 %s41, 1
          %s157 = sand.u32 %s41, 1
          %s158 = smul.addr %s157, 144
          %s159 = scalar_lea.vmem [#allocation2], %s158
          %s160 = smul.u32 2, %s10
          %s161 = smul.addr %s160, 4
          %s162 = scalar_lea.vmem %s1, %s161
          // Predicated region
          $region33: #{resnet_fed_forward.8} parent=31 // pred_check
            _
          $region34: #{resnet_fed_forward.8} parent=31 // pred_check_branch
            %164 = sbr.rel (0) target = $region36
          $region35: #{resnet_fed_forward.8} parent=31 // pred_region
            // Predicated region
            $region37: #{resnet_fed_forward.8} parent=35 // pred_check
              _
            $region38: #{resnet_fed_forward.8} parent=35 // pred_check_branch
              %166 = sbr.rel (0) target = $region40
            $region39: #{resnet_fed_forward.8} parent=35 // pred_region
              // Predicated region
              $region52: #{resnet_fed_forward.8} parent=39 // pred_check
                _
              $region53: #{resnet_fed_forward.8} parent=39 // pred_check_branch
                %216 = sbr.rel (0) target = $region55
              $region54: #{resnet_fed_forward.8} parent=39 // pred_region
                loop: start=0, step=1, limit=1
                $region56: #{resnet_fed_forward.8} parent=54 // loop_pre_header
                  _
                $region57: #{resnet_fed_forward.8} parent=54 // loop_header
                  %s218 = sphi 0, %s222
                  %p219 = scmp.ge.s32.totalorder %s218, 1
                  %s223 = sphi %s162, %s162
                  %s224 = sphi %s159, %s159
                $region58: #{resnet_fed_forward.8} parent=54 // loop_header_branch
                  %221 = sbr.rel (%p219) target = $region62
                $region59: #{resnet_fed_forward.8} parent=54 // loop_body
                  %v225 = vld [vmem:[%s223] sm:$0xff]
                  %226 = vst [vmem:[%s224] sm:$0xff] %v225
                  %v227 = vld [vmem:[%s223 + $0x10] sm:$0xff]
                  %228 = vst [vmem:[%s224 + $0x8] sm:$0xff] %v227
                  %v229 = vld [vmem:[%s223 + $0x20] sm:$0xff]
                  %230 = vst [vmem:[%s224 + $0x10] sm:$0xff] %v229
                  %v231 = vld [vmem:[%s223 + $0x30] sm:$0xff]
                  %232 = vst [vmem:[%s224 + $0x18] sm:$0xff] %v231
                  %v233 = vld [vmem:[%s223 + $0x40] sm:$0xff]
                  %234 = vst [vmem:[%s224 + $0x20] sm:$0xff] %v233
                  %v235 = vld [vmem:[%s223 + $0x50] sm:$0xff]
                  %236 = vst [vmem:[%s224 + $0x28] sm:$0xff] %v235
                  %v237 = vld [vmem:[%s223 + $0x60] sm:$0xff]
                  %238 = vst [vmem:[%s224 + $0x30] sm:$0xff] %v237
                  %v239 = vld [vmem:[%s223 + $0x70] sm:$0xff]
                  %240 = vst [vmem:[%s224 + $0x38] sm:$0xff] %v239
                  %v241 = vld [vmem:[%s223 + $0x80] sm:$0xff]
                  %242 = vst [vmem:[%s224 + $0x40] sm:$0xff] %v241
                  %v243 = vld [vmem:[%s223 + $0x90] sm:$0xff]
                  %244 = vst [vmem:[%s224 + $0x48] sm:$0xff] %v243
                  %v245 = vld [vmem:[%s223 + $0xa0] sm:$0xff]
                  %246 = vst [vmem:[%s224 + $0x50] sm:$0xff] %v245
                  %v247 = vld [vmem:[%s223 + $0xb0] sm:$0xff]
                  %248 = vst [vmem:[%s224 + $0x58] sm:$0xff] %v247
                  %v249 = vld [vmem:[%s223 + $0xc0] sm:$0xff]
                  %250 = vst [vmem:[%s224 + $0x60] sm:$0xff] %v249
                  %v251 = vld [vmem:[%s223 + $0xd0] sm:$0xff]
                  %252 = vst [vmem:[%s224 + $0x68] sm:$0xff] %v251
                  %v253 = vld [vmem:[%s223 + $0xe0] sm:$0xff]
                  %254 = vst [vmem:[%s224 + $0x70] sm:$0xff] %v253
                  %v255 = vld [vmem:[%s223 + $0xf0] sm:$0xff]
                  %256 = vst [vmem:[%s224 + $0x78] sm:$0xff] %v255
                  %v257 = vld [vmem:[%s223 + $0x100] sm:$0xff]
                  %258 = vst [vmem:[%s224 + $0x80] sm:$0xff] %v257
                  %v259 = vld [vmem:[%s223 + $0x110] sm:$0xff]
                  %260 = vst [vmem:[%s224 + $0x88] sm:$0xff] %v259
                $region60: #{resnet_fed_forward.8} parent=54 // loop_footer
                  %s222 = sadd.s32 1, %s218
                $region61: #{resnet_fed_forward.8} parent=54 // loop_footer_branch
                  %217 = sbr.rel target = $region57
                $region62: #{resnet_fed_forward.8} parent=54 // loop_exit
                  _
              $region55: #{resnet_fed_forward.8} parent=39 // pred_fallthru
                _
              // Predicated region
              $region63: #{resnet_fed_forward.8} parent=39 // pred_check
                _
              $region64: #{resnet_fed_forward.8} parent=39 // pred_check_branch
                %262 = sbr.rel target = $region66
              $region65: #{resnet_fed_forward.8} parent=39 // pred_region
                _
              $region66: #{resnet_fed_forward.8} parent=39 // pred_fallthru
                _
            $region40: #{resnet_fed_forward.8} parent=35 // pred_fallthru
              _
            // Predicated region
            $region41: #{resnet_fed_forward.8} parent=35 // pred_check
              _
            $region42: #{resnet_fed_forward.8} parent=35 // pred_check_branch
              %168 = sbr.rel target = $region44
            $region43: #{resnet_fed_forward.8} parent=35 // pred_region
              %s170 = ssub.s32 256, 1
              loop: start=0, step=1, limit=1
              $region45: #{resnet_fed_forward.8} parent=43 // loop_pre_header
                _
              $region46: #{resnet_fed_forward.8} parent=43 // loop_header
                %s172 = sphi 0, %s176
                %p173 = scmp.ge.s32.totalorder %s172, 1
                %s177 = sphi %s162, %s162
                %s178 = sphi %s159, %s159
              $region47: #{resnet_fed_forward.8} parent=43 // loop_header_branch
                %175 = sbr.rel (%p173) target = $region51
              $region48: #{resnet_fed_forward.8} parent=43 // loop_body
                %v179 = vld [vmem:[%s177] sm:%s170]
                %180 = vst [vmem:[%s178] sm:%s170] %v179
                %v181 = vld [vmem:[%s177 + $0x10] sm:%s170]
                %182 = vst [vmem:[%s178 + $0x8] sm:%s170] %v181
                %v183 = vld [vmem:[%s177 + $0x20] sm:%s170]
                %184 = vst [vmem:[%s178 + $0x10] sm:%s170] %v183
                %v185 = vld [vmem:[%s177 + $0x30] sm:%s170]
                %186 = vst [vmem:[%s178 + $0x18] sm:%s170] %v185
                %v187 = vld [vmem:[%s177 + $0x40] sm:%s170]
                %188 = vst [vmem:[%s178 + $0x20] sm:%s170] %v187
                %v189 = vld [vmem:[%s177 + $0x50] sm:%s170]
                %190 = vst [vmem:[%s178 + $0x28] sm:%s170] %v189
                %v191 = vld [vmem:[%s177 + $0x60] sm:%s170]
                %192 = vst [vmem:[%s178 + $0x30] sm:%s170] %v191
                %v193 = vld [vmem:[%s177 + $0x70] sm:%s170]
                %194 = vst [vmem:[%s178 + $0x38] sm:%s170] %v193
                %v195 = vld [vmem:[%s177 + $0x80] sm:%s170]
                %196 = vst [vmem:[%s178 + $0x40] sm:%s170] %v195
                %v197 = vld [vmem:[%s177 + $0x90] sm:%s170]
                %198 = vst [vmem:[%s178 + $0x48] sm:%s170] %v197
                %v199 = vld [vmem:[%s177 + $0xa0] sm:%s170]
                %200 = vst [vmem:[%s178 + $0x50] sm:%s170] %v199
                %v201 = vld [vmem:[%s177 + $0xb0] sm:%s170]
                %202 = vst [vmem:[%s178 + $0x58] sm:%s170] %v201
                %v203 = vld [vmem:[%s177 + $0xc0] sm:%s170]
                %204 = vst [vmem:[%s178 + $0x60] sm:%s170] %v203
                %v205 = vld [vmem:[%s177 + $0xd0] sm:%s170]
                %206 = vst [vmem:[%s178 + $0x68] sm:%s170] %v205
                %v207 = vld [vmem:[%s177 + $0xe0] sm:%s170]
                %208 = vst [vmem:[%s178 + $0x70] sm:%s170] %v207
                %v209 = vld [vmem:[%s177 + $0xf0] sm:%s170]
                %210 = vst [vmem:[%s178 + $0x78] sm:%s170] %v209
                %v211 = vld [vmem:[%s177 + $0x100] sm:%s170]
                %212 = vst [vmem:[%s178 + $0x80] sm:%s170] %v211
                %v213 = vld [vmem:[%s177 + $0x110] sm:%s170]
                %214 = vst [vmem:[%s178 + $0x88] sm:%s170] %v213
              $region49: #{resnet_fed_forward.8} parent=43 // loop_footer
                %s176 = sadd.s32 1, %s172
              $region50: #{resnet_fed_forward.8} parent=43 // loop_footer_branch
                %171 = sbr.rel target = $region46
              $region51: #{resnet_fed_forward.8} parent=43 // loop_exit
                _
            $region44: #{resnet_fed_forward.8} parent=35 // pred_fallthru
              _
          $region36: #{resnet_fed_forward.8} parent=31 // pred_fallthru
            _
          %263 = vnop
        $region32: #{resnet_fed_forward.8} parent=27 // pred_fallthru
          _
      $region28: #{resnet_fed_forward.8} parent=5 // pred_fallthru
        _
      %p264 = scmp.le.s32.totalorder 1, %s10
      %p265 = scmp.lt.s32.totalorder %s10, 3
      %p266 = pnand %p264, %p265
      %p267 = pneg %p266
      // Predicated region
      $region67: #{resnet_fed_forward.8} parent=5 // pred_check
        _
      $region68: #{resnet_fed_forward.8} parent=5 // pred_check_branch
        %269 = sbr.rel (%p266) target = $region70
      $region69: #{resnet_fed_forward.8} parent=5 // pred_region
        %s270 = ssub.s32 %s10, 1
        %s271 = sand.u32 %s44, 1
        %s272 = sand.u32 %s44, 1
        %s273 = smul.addr %s272, 144
        %s274 = scalar_lea.vmem [#allocation2], %s273
        // Predicated region
        $region71: #{resnet_fed_forward.8} parent=69 // pred_check
          %p275 = pneg %p57
        $region72: #{resnet_fed_forward.8} parent=69 // pred_check_branch
          %277 = sbr.rel (%p275) target = $region74
        $region73: #{resnet_fed_forward.8} parent=69 // pred_region
          _
        $region74: #{resnet_fed_forward.8} parent=69 // pred_fallthru
          _
        %p278 = pneg %p31
        %p279 = pneg %p28
        %s280 = sand.u32 %s44, 1
        %s281 = sand.u32 %s44, 1
        %s282 = smul.addr %s281, 144
        %s283 = scalar_lea.vmem [#allocation2], %s282
        %p284 = pneg %p57
        %p285 = pneg %p54
        %p286 = pneg %p78
        %p287 = pneg %p75
        %p288 = pneg %p99
        %p289 = pneg %p96
        %p290 = pneg %p125
        %p291 = pneg %p122
        %s292 = sand.u32 %s112, 1
        %s293 = sand.u32 %s112, 1
        %s294 = smul.addr %s293, 16
        %s295 = scalar_lea.vmem [#allocation3], %s294
        %s296 = smul.u32 2, %s15
        %s297 = smul.u32 2, %s15
        %v299 = vld [vmem:[%s0] sm:$0xff]
        %v300 = vld [vmem:[%s0 + $0x8] sm:$0xff]
        %v301 = vld [vmem:[%s274] sm:$0xff]
        %v302 = vld [vmem:[%s274 + $0x8] sm:$0xff]
        %v303 = vld [vmem:[%s274 + $0x10] sm:$0xff]
        %v304 = vld [vmem:[%s274 + $0x18] sm:$0xff]
        %v305 = vld [vmem:[%s274 + $0x20] sm:$0xff]
        %v306 = vld [vmem:[%s274 + $0x28] sm:$0xff]
        %v307 = vld [vmem:[%s274 + $0x30] sm:$0xff]
        %v308 = vld [vmem:[%s274 + $0x38] sm:$0xff]
        %v309 = vld [vmem:[%s274 + $0x40] sm:$0xff]
        %v310 = vld [vmem:[%s274 + $0x48] sm:$0xff]
        %v311 = vld [vmem:[%s274 + $0x50] sm:$0xff]
        %v312 = vld [vmem:[%s274 + $0x58] sm:$0xff]
        %v313 = vld [vmem:[%s274 + $0x60] sm:$0xff]
        %v314 = vld [vmem:[%s274 + $0x68] sm:$0xff]
        %v315 = vld [vmem:[%s274 + $0x70] sm:$0xff]
        %v316 = vld [vmem:[%s274 + $0x78] sm:$0xff]
        %v317 = vld [vmem:[%s274 + $0x80] sm:$0xff]
        %v318 = vld [vmem:[%s274 + $0x88] sm:$0xff]
        %v321 = vunpack.c.l.b16 %v299
        %v322 = vunpack.c.h.b16 %v299
        %v323 = vunpack.c.l.b16 %v300
        %v324 = vunpack.c.h.b16 %v300
        %v325 = vpack.c.b16 %v323, %v321
        %v326 = vpack.c.b16 %v324, %v322
        %v346 = vunpack.c.l.b16 %v301
        %v347 = vunpack.c.h.b16 %v301
        %v348 = vunpack.c.l.b16 %v302
        %v349 = vunpack.c.h.b16 %v302
        %v350 = vunpack.c.l.b16 %v303
        %v351 = vunpack.c.h.b16 %v303
        %v352 = vunpack.c.l.b16 %v304
        %v353 = vunpack.c.h.b16 %v304
        %v354 = vunpack.c.l.b16 %v305
        %v355 = vunpack.c.h.b16 %v305
        %v356 = vunpack.c.l.b16 %v306
        %v357 = vunpack.c.h.b16 %v306
        %v358 = vunpack.c.l.b16 %v307
        %v359 = vunpack.c.h.b16 %v307
        %v360 = vunpack.c.l.b16 %v308
        %v361 = vunpack.c.h.b16 %v308
        %v362 = vunpack.c.l.b16 %v309
        %v363 = vunpack.c.h.b16 %v309
        %v364 = vunpack.c.l.b16 %v310
        %v365 = vunpack.c.h.b16 %v310
        %v366 = vunpack.c.l.b16 %v311
        %v367 = vunpack.c.h.b16 %v311
        %v368 = vunpack.c.l.b16 %v312
        %v369 = vunpack.c.h.b16 %v312
        %v370 = vunpack.c.l.b16 %v313
        %v371 = vunpack.c.h.b16 %v313
        %v372 = vunpack.c.l.b16 %v314
        %v373 = vunpack.c.h.b16 %v314
        %v374 = vunpack.c.l.b16 %v315
        %v375 = vunpack.c.h.b16 %v315
        %v376 = vunpack.c.l.b16 %v316
        %v377 = vunpack.c.h.b16 %v316
        %v378 = vunpack.c.l.b16 %v317
        %v379 = vunpack.c.h.b16 %v317
        %v380 = vunpack.c.l.b16 %v318
        %v381 = vunpack.c.h.b16 %v318
        %v382 = vpack.c.b16 %v348, %v346
        %v383 = vpack.c.b16 %v349, %v347
        %v384 = vpack.c.b16 %v352, %v350
        %v385 = vpack.c.b16 %v353, %v351
        %v386 = vpack.c.b16 %v356, %v354
        %v387 = vpack.c.b16 %v357, %v355
        %v388 = vpack.c.b16 %v360, %v358
        %v389 = vpack.c.b16 %v361, %v359
        %v390 = vpack.c.b16 %v364, %v362
        %v391 = vpack.c.b16 %v365, %v363
        %v392 = vpack.c.b16 %v368, %v366
        %v393 = vpack.c.b16 %v369, %v367
        %v394 = vpack.c.b16 %v372, %v370
        %v395 = vpack.c.b16 %v373, %v371
        %v396 = vpack.c.b16 %v376, %v374
        %v397 = vpack.c.b16 %v377, %v375
        %v398 = vpack.c.b16 %v380, %v378
        %v399 = vpack.c.b16 %v381, %v379
        %vm418 = vcmask 130048
        %v420 = vsel %vm418, %v326, 0
        %422 = vmatprep.subr.bf16.mxu0 %v397
        %423 = vmatpush1.bf16.msra.mxu0 %v396
        %424 = vmatprep.subr.bf16.mxu0 %v395
        %425 = vmatpush1.bf16.msra.mxu0 %v394
        %426 = vmatprep.subr.bf16.mxu0 %v393
        %427 = vmatpush1.bf16.msra.mxu0 %v392
        %428 = vmatprep.subr.bf16.mxu0 %v391
        %429 = vmatpush1.bf16.msra.mxu0 %v390
        %430 = vmatprep.subr.bf16.mxu0 %v389
        %431 = vmatpush1.bf16.msra.mxu0 %v388
        %432 = vmatprep.subr.bf16.mxu0 %v387
        %433 = vmatpush1.bf16.msra.mxu0 %v386
        %434 = vmatprep.subr.bf16.mxu0 %v385
        %435 = vmatpush1.bf16.msra.mxu0 %v384
        %436 = vmatprep.subr.bf16.mxu0 %v383
        %437 = vmatpush1.bf16.msra.mxu0 %v382
        %438 = vmatprep.subr.bf16.mxu0 0
        %439 = vmatpush2.bf16.msra.mxu0 0
        %440 = vmatprep.subr.bf16.mxu0 0
        %441 = vmatpush2.bf16.msra.mxu0 0
        %442 = vmatprep.subr.bf16.mxu0 0
        %443 = vmatpush2.bf16.msra.mxu0 0
        %444 = vmatprep.subr.bf16.mxu0 0
        %445 = vmatpush2.bf16.msra.mxu0 0
        %446 = vmatprep.subr.bf16.mxu0 0
        %447 = vmatpush2.bf16.msra.mxu0 0
        %448 = vmatprep.subr.bf16.mxu0 0
        %449 = vmatpush2.bf16.msra.mxu0 0
        %450 = vmatprep.subr.bf16.mxu0 0
        %451 = vmatpush2.bf16.msra.mxu0 0
        %452 = vmatprep.subr.bf16.mxu0 %v399
        %453 = vmatpush2.bf16.msra.mxu0 %v398
        %454 = vmatprep.mubr.bf16.mxu0 %v420
        %455 = vmatmul.mubr.bf16.gmra.mxu0 %v325
        %v456 = vpop.f32.mrf.mxu0
        %v457 = vadd.f32 0.0, %v456
        %v458 = vpop.f32.mrf.mxu0
        %v459 = vadd.f32 0.0, %v458
        %v460 = vpop.f32.mrf.mxu0
        %v461 = vadd.f32 0.0, %v460
        %v462 = vpop.f32.mrf.mxu0
        %v463 = vadd.f32 0.0, %v462
        %464 = vdwg.mxu0
        %v465 = vld [vmem:[%s2] sm:$0xff]
        %v466 = vld [vmem:[%s2 + $0x8] sm:$0xff]
        %468 = vset.pattern.permute.xlu0 0
        %469 = vperm.xlu0 %468, %v465
        %v470 = vpop.permute.xlu0 %469
        %473 = vset.pattern.permute.xlu0 0
        %474 = vperm.xlu0 %473, %v466
        %v475 = vpop.permute.xlu0 %474
        %v477 = vmul.f32 %v457, %v470
        %v478 = vmul.f32 %v459, %v470
        %v479 = vmul.f32 %v461, %v475
        %v480 = vmul.f32 %v463, %v475
        %v481 = vld [vmem:[%s3] sm:$0xff]
        %v482 = vld [vmem:[%s3 + $0x8] sm:$0xff]
        %484 = vset.pattern.permute.xlu0 0
        %485 = vperm.xlu0 %484, %v481
        %v486 = vpop.permute.xlu0 %485
        %489 = vset.pattern.permute.xlu0 0
        %490 = vperm.xlu0 %489, %v482
        %v491 = vpop.permute.xlu0 %490
        %v493 = vadd.f32 %v477, %v486
        %v494 = vadd.f32 %v478, %v486
        %v495 = vadd.f32 %v479, %v491
        %v496 = vadd.f32 %v480, %v491
        %v497 = vmax.f32 %v493, 0.0
        %v498 = vmax.f32 %v494, 0.0
        %v499 = vmax.f32 %v495, 0.0
        %v500 = vmax.f32 %v496, 0.0
        %v501 = vpack.c.bf16 %v499, %v497
        %v502 = vpack.c.bf16 %v500, %v498
        %v505 = vunpack.c.l.b16 %v501
        %v506 = vunpack.c.l.b16 %v502
        %v507 = vunpack.c.h.b16 %v501
        %v508 = vunpack.c.h.b16 %v502
        %v509 = vpack.c.b16 %v506, %v505
        %v510 = vpack.c.b16 %v508, %v507
        %513 = vst [vmem:[%s295] sm:$0xff] %v509
        %514 = vst [vmem:[%s295 + $0x8] sm:$0xff] %v510
        %s515 = sand.u32 %s112, 1
        %s516 = sand.u32 %s112, 1
        %s517 = smul.addr %s516, 16
        %s518 = scalar_lea.vmem [#allocation3], %s517
        // Predicated region
        $region75: #{resnet_fed_forward.8} parent=69 // pred_check
          %p519 = pneg %p122
        $region76: #{resnet_fed_forward.8} parent=69 // pred_check_branch
          %521 = sbr.rel (%p519) target = $region78
        $region77: #{resnet_fed_forward.8} parent=69 // pred_region
          %s522 = smul.u32 2, %s15
          %s523 = smul.addr %s522, 4
          %s524 = scalar_lea.vmem %s4, %s523
          // Predicated region
          $region79: #{resnet_fed_forward.8} parent=77 // pred_check
            _
          $region80: #{resnet_fed_forward.8} parent=77 // pred_check_branch
            %526 = sbr.rel (0) target = $region82
          $region81: #{resnet_fed_forward.8} parent=77 // pred_region
            // Predicated region
            $region83: #{resnet_fed_forward.8} parent=81 // pred_check
              _
            $region84: #{resnet_fed_forward.8} parent=81 // pred_check_branch
              %528 = sbr.rel (0) target = $region86
            $region85: #{resnet_fed_forward.8} parent=81 // pred_region
              // Predicated region
              $region98: #{resnet_fed_forward.8} parent=85 // pred_check
                _
              $region99: #{resnet_fed_forward.8} parent=85 // pred_check_branch
                %546 = sbr.rel (0) target = $region101
              $region100: #{resnet_fed_forward.8} parent=85 // pred_region
                loop: start=0, step=1, limit=1
                $region102: #{resnet_fed_forward.8} parent=100 // loop_pre_header
                  _
                $region103: #{resnet_fed_forward.8} parent=100 // loop_header
                  %s548 = sphi 0, %s552
                  %p549 = scmp.ge.s32.totalorder %s548, 1
                  %s553 = sphi %s518, %s518
                  %s554 = sphi %s524, %s524
                $region104: #{resnet_fed_forward.8} parent=100 // loop_header_branch
                  %551 = sbr.rel (%p549) target = $region108
                $region105: #{resnet_fed_forward.8} parent=100 // loop_body
                  %v555 = vld [vmem:[%s553] sm:$0xff]
                  %556 = vst [vmem:[%s554] sm:$0xff] %v555
                  %v557 = vld [vmem:[%s553 + $0x8] sm:$0xff]
                  %558 = vst [vmem:[%s554 + $0x10] sm:$0xff] %v557
                $region106: #{resnet_fed_forward.8} parent=100 // loop_footer
                  %s552 = sadd.s32 1, %s548
                $region107: #{resnet_fed_forward.8} parent=100 // loop_footer_branch
                  %547 = sbr.rel target = $region103
                $region108: #{resnet_fed_forward.8} parent=100 // loop_exit
                  _
              $region101: #{resnet_fed_forward.8} parent=85 // pred_fallthru
                _
              // Predicated region
              $region109: #{resnet_fed_forward.8} parent=85 // pred_check
                _
              $region110: #{resnet_fed_forward.8} parent=85 // pred_check_branch
                %560 = sbr.rel target = $region112
              $region111: #{resnet_fed_forward.8} parent=85 // pred_region
                _
              $region112: #{resnet_fed_forward.8} parent=85 // pred_fallthru
                _
            $region86: #{resnet_fed_forward.8} parent=81 // pred_fallthru
              _
            // Predicated region
            $region87: #{resnet_fed_forward.8} parent=81 // pred_check
              _
            $region88: #{resnet_fed_forward.8} parent=81 // pred_check_branch
              %530 = sbr.rel target = $region90
            $region89: #{resnet_fed_forward.8} parent=81 // pred_region
              %s532 = ssub.s32 256, 1
              loop: start=0, step=1, limit=1
              $region91: #{resnet_fed_forward.8} parent=89 // loop_pre_header
                _
              $region92: #{resnet_fed_forward.8} parent=89 // loop_header
                %s534 = sphi 0, %s538
                %p535 = scmp.ge.s32.totalorder %s534, 1
                %s539 = sphi %s518, %s518
                %s540 = sphi %s524, %s524
              $region93: #{resnet_fed_forward.8} parent=89 // loop_header_branch
                %537 = sbr.rel (%p535) target = $region97
              $region94: #{resnet_fed_forward.8} parent=89 // loop_body
                %v541 = vld [vmem:[%s539] sm:%s532]
                %542 = vst [vmem:[%s540] sm:%s532] %v541
                %v543 = vld [vmem:[%s539 + $0x8] sm:%s532]
                %544 = vst [vmem:[%s540 + $0x10] sm:%s532] %v543
              $region95: #{resnet_fed_forward.8} parent=89 // loop_footer
                %s538 = sadd.s32 1, %s534
              $region96: #{resnet_fed_forward.8} parent=89 // loop_footer_branch
                %533 = sbr.rel target = $region92
              $region97: #{resnet_fed_forward.8} parent=89 // loop_exit
                _
            $region90: #{resnet_fed_forward.8} parent=81 // pred_fallthru
              _
          $region82: #{resnet_fed_forward.8} parent=77 // pred_fallthru
            _
          %561 = vnop
        $region78: #{resnet_fed_forward.8} parent=69 // pred_fallthru
          _
      $region70: #{resnet_fed_forward.8} parent=5 // pred_fallthru
        _
      %p562 = scmp.le.s32.totalorder 2, %s10
      // Predicated region
      $region113: #{resnet_fed_forward.8} parent=5 // pred_check
        %p563 = pneg %p562
      $region114: #{resnet_fed_forward.8} parent=5 // pred_check_branch
        %565 = sbr.rel (%p563) target = $region116
      $region115: #{resnet_fed_forward.8} parent=5 // pred_region
        %s566 = ssub.s32 %s10, 2
        // Predicated region
        $region117: #{resnet_fed_forward.8} parent=115 // pred_check
          %p567 = pneg %p128
        $region118: #{resnet_fed_forward.8} parent=115 // pred_check_branch
          %569 = sbr.rel (%p567) target = $region120
        $region119: #{resnet_fed_forward.8} parent=115 // pred_region
          %s570 = sand.u32 %s113, 1
          %s571 = sand.u32 %s113, 1
          %s572 = smul.addr %s571, 16
          %s573 = scalar_lea.vmem [#allocation3], %s572
        $region120: #{resnet_fed_forward.8} parent=115 // pred_fallthru
          _
      $region116: #{resnet_fed_forward.8} parent=5 // pred_fallthru
        _
    $region6: #{resnet_fed_forward.8} parent=1 // loop_footer
      %s14 = sadd.s32 1, %s10
    $region7: #{resnet_fed_forward.8} parent=1 // loop_footer_branch
      %9 = sbr.rel target = $region3
    $region8: #{resnet_fed_forward.8} parent=1 // loop_exit
      _

// kernel: resnet_fed_forward.9
$region0: #{resnet_fed_forward.9}
  #allocation0 [shape = 'u32[]', space=smem, size = 0x4, offset = 0x4, fixed_abs, tag = 'smem constant byte address 0x4 - core index']
  #allocation1 [shape = 'u32[144,128]{1,0:T(1,128)}', space=vmem, size = 0x12000, scoped, tag = 'internal scratch']
  %s0 = inlined_call_operand.vmem [shape: bf16[16,144], index: 0, kind: input, shape index: {}]
  %s1 = inlined_call_operand.vmem [shape: bf16[144,512], index: 1, kind: input, shape index: {}]
  %s2 = inlined_call_operand.vmem [shape: f32[16,1], index: 2, kind: input, shape index: {}]
  %s3 = inlined_call_operand.vmem [shape: f32[16,1], index: 3, kind: input, shape index: {}]
  %s4 = inlined_call_operand.vmem [shape: bf16[16,512], index: 4, kind: input, shape index: {}]
  %s5 = inlined_call_operand.vmem [shape: bf16[16,512], index: 5, kind: output, shape index: {}]
  %s6 = sld [smem:[#allocation0]]
  $region163: #{resnet_fed_forward.9} parent=0
    _
  %s8 = ssub.s32 1, %s6
  %s9 = scalar_select 0, %s8, %s6
  $region1: #{resnet_fed_forward.9} parent=0
    #allocation2 [shape = 'u8[147456]{0}', space=vmem, size = 0x24000, scoped, tag = 'input window, operand 1']
    #allocation3 [shape = 'u8[16384]{0}', space=vmem, size = 0x4000, scoped, tag = 'input window, operand 4']
    #allocation4 [shape = 'u8[16384]{0}', space=vmem, size = 0x4000, scoped, tag = 'output window, operand 0']
    loop: start=0, step=1, limit=4
    $region2: #{resnet_fed_forward.9} parent=1 // loop_pre_header
      _
    $region3: #{resnet_fed_forward.9} parent=1 // loop_header
      %s11 = sphi 0, %s15
      %p12 = scmp.ge.s32.totalorder %s11, 4
      %s19 = sphi 0, %s19
      %s21 = sphi 0, %s19
      %s22 = sphi 0, %s21
      %s36 = sphi 0, %s22
      %s42 = sphi 0, %s44
      %s45 = sphi 0, %s42
      %s46 = sphi 0, %s45
      %s62 = sphi 0, %s46
      %s66 = sphi 0, %s66
      %s68 = sphi 0, %s66
      %s69 = sphi 0, %s68
      %s83 = sphi 0, %s69
      %s87 = sphi 0, %s87
      %s89 = sphi 0, %s87
      %s90 = sphi 0, %s89
      %s104 = sphi 0, %s90
      %s110 = sphi 0, %s112
      %s113 = sphi 0, %s110
      %s114 = sphi 0, %s113
      %s130 = sphi 0, %s114
      %s136 = sphi 0, %s138
      %s139 = sphi 0, %s136
      %s140 = sphi 0, %s139
      %s156 = sphi 0, %s140
    $region4: #{resnet_fed_forward.9} parent=1 // loop_header_branch
      %14 = sbr.rel (%p12) target = $region8
    $region5: #{resnet_fed_forward.9} parent=1 // loop_body
      %s16 = ssub.s32 %s11, 1
      %s17 = ssub.s32 %s11, 2
      %s18 = sadd.s32 %s11, 1
      %s20 = sadd.s32 %s19, 1
      %p23 = scmp.eq.s32.totalorder %s11, 1
      %p24 = scmp.ne.s32.totalorder %s19, %s21
      %p25 = scmp.eq.s32.totalorder %s11, 0
      %p26 = por %p24, %p25
      %p27 = scmp.ne.s32.totalorder %s19, %s21
      %p28 = scmp.eq.s32.totalorder %s16, 1
      %p29 = por %p27, %p28
      %p30 = scmp.ne.s32.totalorder %s21, %s22
      %p31 = scmp.eq.s32.totalorder %s16, 0
      %p32 = por %p30, %p31
      %p33 = scmp.ne.s32.totalorder %s21, %s22
      %p34 = scmp.eq.s32.totalorder %s17, 1
      %p35 = por %p33, %p34
      %p37 = scmp.ne.s32.totalorder %s22, %s36
      %p38 = scmp.eq.s32.totalorder %s17, 0
      %p39 = por %p37, %p38
      %s40 = ssub.s32 %s11, %s18
      %p41 = scmp.eq.s32.totalorder %s40, 0
      %s43 = sadd.s32 %s42, 1
      %s44 = scalar_select %p41, %s42, %s43
      %p47 = pneg %p41
      %p48 = scmp.eq.s32.totalorder %s11, 1
      %p49 = por %p47, %p48
      %p50 = scmp.ne.s32.totalorder %s42, %s45
      %p51 = scmp.eq.s32.totalorder %s11, 0
      %p52 = por %p50, %p51
      %p53 = scmp.ne.s32.totalorder %s42, %s45
      %p54 = scmp.eq.s32.totalorder %s16, 1
      %p55 = por %p53, %p54
      %p56 = scmp.ne.s32.totalorder %s45, %s46
      %p57 = scmp.eq.s32.totalorder %s16, 0
      %p58 = por %p56, %p57
      %p59 = scmp.ne.s32.totalorder %s45, %s46
      %p60 = scmp.eq.s32.totalorder %s17, 1
      %p61 = por %p59, %p60
      %p63 = scmp.ne.s32.totalorder %s46, %s62
      %p64 = scmp.eq.s32.totalorder %s17, 0
      %p65 = por %p63, %p64
      %s67 = sadd.s32 %s66, 1
      %p70 = scmp.eq.s32.totalorder %s11, 1
      %p71 = scmp.ne.s32.totalorder %s66, %s68
      %p72 = scmp.eq.s32.totalorder %s11, 0
      %p73 = por %p71, %p72
      %p74 = scmp.ne.s32.totalorder %s66, %s68
      %p75 = scmp.eq.s32.totalorder %s16, 1
      %p76 = por %p74, %p75
      %p77 = scmp.ne.s32.totalorder %s68, %s69
      %p78 = scmp.eq.s32.totalorder %s16, 0
      %p79 = por %p77, %p78
      %p80 = scmp.ne.s32.totalorder %s68, %s69
      %p81 = scmp.eq.s32.totalorder %s17, 1
      %p82 = por %p80, %p81
      %p84 = scmp.ne.s32.totalorder %s69, %s83
      %p85 = scmp.eq.s32.totalorder %s17, 0
      %p86 = por %p84, %p85
      %s88 = sadd.s32 %s87, 1
      %p91 = scmp.eq.s32.totalorder %s11, 1
      %p92 = scmp.ne.s32.totalorder %s87, %s89
      %p93 = scmp.eq.s32.totalorder %s11, 0
      %p94 = por %p92, %p93
      %p95 = scmp.ne.s32.totalorder %s87, %s89
      %p96 = scmp.eq.s32.totalorder %s16, 1
      %p97 = por %p95, %p96
      %p98 = scmp.ne.s32.totalorder %s89, %s90
      %p99 = scmp.eq.s32.totalorder %s16, 0
      %p100 = por %p98, %p99
      %p101 = scmp.ne.s32.totalorder %s89, %s90
      %p102 = scmp.eq.s32.totalorder %s17, 1
      %p103 = por %p101, %p102
      %p105 = scmp.ne.s32.totalorder %s90, %s104
      %p106 = scmp.eq.s32.totalorder %s17, 0
      %p107 = por %p105, %p106
      %s108 = ssub.s32 %s11, %s18
      %p109 = scmp.eq.s32.totalorder %s108, 0
      %s111 = sadd.s32 %s110, 1
      %s112 = scalar_select %p109, %s110, %s111
      %p115 = pneg %p109
      %p116 = scmp.eq.s32.totalorder %s11, 1
      %p117 = por %p115, %p116
      %p118 = scmp.ne.s32.totalorder %s110, %s113
      %p119 = scmp.eq.s32.totalorder %s11, 0
      %p120 = por %p118, %p119
      %p121 = scmp.ne.s32.totalorder %s110, %s113
      %p122 = scmp.eq.s32.totalorder %s16, 1
      %p123 = por %p121, %p122
      %p124 = scmp.ne.s32.totalorder %s113, %s114
      %p125 = scmp.eq.s32.totalorder %s16, 0
      %p126 = por %p124, %p125
      %p127 = scmp.ne.s32.totalorder %s113, %s114
      %p128 = scmp.eq.s32.totalorder %s17, 1
      %p129 = por %p127, %p128
      %p131 = scmp.ne.s32.totalorder %s114, %s130
      %p132 = scmp.eq.s32.totalorder %s17, 0
      %p133 = por %p131, %p132
      %s134 = ssub.s32 %s11, %s18
      %p135 = scmp.eq.s32.totalorder %s134, 0
      %s137 = sadd.s32 %s136, 1
      %s138 = scalar_select %p135, %s136, %s137
      %p141 = pneg %p135
      %p142 = scmp.eq.s32.totalorder %s11, 1
      %p143 = por %p141, %p142
      %p144 = scmp.ne.s32.totalorder %s136, %s139
      %p145 = scmp.eq.s32.totalorder %s11, 0
      %p146 = por %p144, %p145
      %p147 = scmp.ne.s32.totalorder %s136, %s139
      %p148 = scmp.eq.s32.totalorder %s16, 1
      %p149 = por %p147, %p148
      %p150 = scmp.ne.s32.totalorder %s139, %s140
      %p151 = scmp.eq.s32.totalorder %s16, 0
      %p152 = por %p150, %p151
      %p153 = scmp.ne.s32.totalorder %s139, %s140
      %p154 = scmp.eq.s32.totalorder %s17, 1
      %p155 = por %p153, %p154
      %p157 = scmp.ne.s32.totalorder %s140, %s156
      %p158 = scmp.eq.s32.totalorder %s17, 0
      %p159 = por %p157, %p158
      %p160 = scmp.le.s32.totalorder 1, %s11
      %p161 = scmp.lt.s32.totalorder %s11, 3
      %p162 = pnand %p160, %p161
      %p163 = pneg %p162
      // Predicated region
      $region9: #{resnet_fed_forward.9} parent=5 // pred_check
        _
      $region10: #{resnet_fed_forward.9} parent=5 // pred_check_branch
        %165 = sbr.rel (%p162) target = $region12
      $region11: #{resnet_fed_forward.9} parent=5 // pred_region
        %s166 = ssub.s32 %s11, 1
        // Predicated region
        $region13: #{resnet_fed_forward.9} parent=11 // pred_check
          %p167 = pneg %p32
        $region14: #{resnet_fed_forward.9} parent=11 // pred_check_branch
          %169 = sbr.rel (%p167) target = $region16
        $region15: #{resnet_fed_forward.9} parent=11 // pred_region
          _
        $region16: #{resnet_fed_forward.9} parent=11 // pred_fallthru
          _
        // Predicated region
        $region17: #{resnet_fed_forward.9} parent=11 // pred_check
          %p170 = pneg %p79
        $region18: #{resnet_fed_forward.9} parent=11 // pred_check_branch
          %172 = sbr.rel (%p170) target = $region20
        $region19: #{resnet_fed_forward.9} parent=11 // pred_region
          _
        $region20: #{resnet_fed_forward.9} parent=11 // pred_fallthru
          _
        // Predicated region
        $region21: #{resnet_fed_forward.9} parent=11 // pred_check
          %p173 = pneg %p100
        $region22: #{resnet_fed_forward.9} parent=11 // pred_check_branch
          %175 = sbr.rel (%p173) target = $region24
        $region23: #{resnet_fed_forward.9} parent=11 // pred_region
          _
        $region24: #{resnet_fed_forward.9} parent=11 // pred_fallthru
          _
      $region12: #{resnet_fed_forward.9} parent=5 // pred_fallthru
        _
      %p176 = scmp.lt.s32.totalorder %s11, 2
      // Predicated region
      $region25: #{resnet_fed_forward.9} parent=5 // pred_check
        %p177 = pneg %p176
      $region26: #{resnet_fed_forward.9} parent=5 // pred_check_branch
        %179 = sbr.rel (%p177) target = $region28
      $region27: #{resnet_fed_forward.9} parent=5 // pred_region
        // Predicated region
        $region29: #{resnet_fed_forward.9} parent=27 // pred_check
          %p180 = pneg %p52
        $region30: #{resnet_fed_forward.9} parent=27 // pred_check_branch
          %182 = sbr.rel (%p180) target = $region32
        $region31: #{resnet_fed_forward.9} parent=27 // pred_region
          %s183 = sand.u32 %s42, 1
          %s184 = sand.u32 %s42, 1
          %s185 = smul.addr %s184, 144
          %s186 = scalar_lea.vmem [#allocation2], %s185
          %s187 = smul.u32 2, %s11
          %s188 = smul.addr %s187, 4
          %s189 = scalar_lea.vmem %s1, %s188
          // Predicated region
          $region33: #{resnet_fed_forward.9} parent=31 // pred_check
            _
          $region34: #{resnet_fed_forward.9} parent=31 // pred_check_branch
            %191 = sbr.rel (0) target = $region36
          $region35: #{resnet_fed_forward.9} parent=31 // pred_region
            // Predicated region
            $region37: #{resnet_fed_forward.9} parent=35 // pred_check
              _
            $region38: #{resnet_fed_forward.9} parent=35 // pred_check_branch
              %193 = sbr.rel (0) target = $region40
            $region39: #{resnet_fed_forward.9} parent=35 // pred_region
              // Predicated region
              $region52: #{resnet_fed_forward.9} parent=39 // pred_check
                _
              $region53: #{resnet_fed_forward.9} parent=39 // pred_check_branch
                %243 = sbr.rel (0) target = $region55
              $region54: #{resnet_fed_forward.9} parent=39 // pred_region
                loop: start=0, step=1, limit=1
                $region56: #{resnet_fed_forward.9} parent=54 // loop_pre_header
                  _
                $region57: #{resnet_fed_forward.9} parent=54 // loop_header
                  %s245 = sphi 0, %s249
                  %p246 = scmp.ge.s32.totalorder %s245, 1
                  %s250 = sphi %s189, %s189
                  %s251 = sphi %s186, %s186
                $region58: #{resnet_fed_forward.9} parent=54 // loop_header_branch
                  %248 = sbr.rel (%p246) target = $region62
                $region59: #{resnet_fed_forward.9} parent=54 // loop_body
                  %v252 = vld [vmem:[%s250] sm:$0xff]
                  %253 = vst [vmem:[%s251] sm:$0xff] %v252
                  %v254 = vld [vmem:[%s250 + $0x10] sm:$0xff]
                  %255 = vst [vmem:[%s251 + $0x8] sm:$0xff] %v254
                  %v256 = vld [vmem:[%s250 + $0x20] sm:$0xff]
                  %257 = vst [vmem:[%s251 + $0x10] sm:$0xff] %v256
                  %v258 = vld [vmem:[%s250 + $0x30] sm:$0xff]
                  %259 = vst [vmem:[%s251 + $0x18] sm:$0xff] %v258
                  %v260 = vld [vmem:[%s250 + $0x40] sm:$0xff]
                  %261 = vst [vmem:[%s251 + $0x20] sm:$0xff] %v260
                  %v262 = vld [vmem:[%s250 + $0x50] sm:$0xff]
                  %263 = vst [vmem:[%s251 + $0x28] sm:$0xff] %v262
                  %v264 = vld [vmem:[%s250 + $0x60] sm:$0xff]
                  %265 = vst [vmem:[%s251 + $0x30] sm:$0xff] %v264
                  %v266 = vld [vmem:[%s250 + $0x70] sm:$0xff]
                  %267 = vst [vmem:[%s251 + $0x38] sm:$0xff] %v266
                  %v268 = vld [vmem:[%s250 + $0x80] sm:$0xff]
                  %269 = vst [vmem:[%s251 + $0x40] sm:$0xff] %v268
                  %v270 = vld [vmem:[%s250 + $0x90] sm:$0xff]
                  %271 = vst [vmem:[%s251 + $0x48] sm:$0xff] %v270
                  %v272 = vld [vmem:[%s250 + $0xa0] sm:$0xff]
                  %273 = vst [vmem:[%s251 + $0x50] sm:$0xff] %v272
                  %v274 = vld [vmem:[%s250 + $0xb0] sm:$0xff]
                  %275 = vst [vmem:[%s251 + $0x58] sm:$0xff] %v274
                  %v276 = vld [vmem:[%s250 + $0xc0] sm:$0xff]
                  %277 = vst [vmem:[%s251 + $0x60] sm:$0xff] %v276
                  %v278 = vld [vmem:[%s250 + $0xd0] sm:$0xff]
                  %279 = vst [vmem:[%s251 + $0x68] sm:$0xff] %v278
                  %v280 = vld [vmem:[%s250 + $0xe0] sm:$0xff]
                  %281 = vst [vmem:[%s251 + $0x70] sm:$0xff] %v280
                  %v282 = vld [vmem:[%s250 + $0xf0] sm:$0xff]
                  %283 = vst [vmem:[%s251 + $0x78] sm:$0xff] %v282
                  %v284 = vld [vmem:[%s250 + $0x100] sm:$0xff]
                  %285 = vst [vmem:[%s251 + $0x80] sm:$0xff] %v284
                  %v286 = vld [vmem:[%s250 + $0x110] sm:$0xff]
                  %287 = vst [vmem:[%s251 + $0x88] sm:$0xff] %v286
                $region60: #{resnet_fed_forward.9} parent=54 // loop_footer
                  %s249 = sadd.s32 1, %s245
                $region61: #{resnet_fed_forward.9} parent=54 // loop_footer_branch
                  %244 = sbr.rel target = $region57
                $region62: #{resnet_fed_forward.9} parent=54 // loop_exit
                  _
              $region55: #{resnet_fed_forward.9} parent=39 // pred_fallthru
                _
              // Predicated region
              $region63: #{resnet_fed_forward.9} parent=39 // pred_check
                _
              $region64: #{resnet_fed_forward.9} parent=39 // pred_check_branch
                %289 = sbr.rel target = $region66
              $region65: #{resnet_fed_forward.9} parent=39 // pred_region
                _
              $region66: #{resnet_fed_forward.9} parent=39 // pred_fallthru
                _
            $region40: #{resnet_fed_forward.9} parent=35 // pred_fallthru
              _
            // Predicated region
            $region41: #{resnet_fed_forward.9} parent=35 // pred_check
              _
            $region42: #{resnet_fed_forward.9} parent=35 // pred_check_branch
              %195 = sbr.rel target = $region44
            $region43: #{resnet_fed_forward.9} parent=35 // pred_region
              %s197 = ssub.s32 256, 1
              loop: start=0, step=1, limit=1
              $region45: #{resnet_fed_forward.9} parent=43 // loop_pre_header
                _
              $region46: #{resnet_fed_forward.9} parent=43 // loop_header
                %s199 = sphi 0, %s203
                %p200 = scmp.ge.s32.totalorder %s199, 1
                %s204 = sphi %s189, %s189
                %s205 = sphi %s186, %s186
              $region47: #{resnet_fed_forward.9} parent=43 // loop_header_branch
                %202 = sbr.rel (%p200) target = $region51
              $region48: #{resnet_fed_forward.9} parent=43 // loop_body
                %v206 = vld [vmem:[%s204] sm:%s197]
                %207 = vst [vmem:[%s205] sm:%s197] %v206
                %v208 = vld [vmem:[%s204 + $0x10] sm:%s197]
                %209 = vst [vmem:[%s205 + $0x8] sm:%s197] %v208
                %v210 = vld [vmem:[%s204 + $0x20] sm:%s197]
                %211 = vst [vmem:[%s205 + $0x10] sm:%s197] %v210
                %v212 = vld [vmem:[%s204 + $0x30] sm:%s197]
                %213 = vst [vmem:[%s205 + $0x18] sm:%s197] %v212
                %v214 = vld [vmem:[%s204 + $0x40] sm:%s197]
                %215 = vst [vmem:[%s205 + $0x20] sm:%s197] %v214
                %v216 = vld [vmem:[%s204 + $0x50] sm:%s197]
                %217 = vst [vmem:[%s205 + $0x28] sm:%s197] %v216
                %v218 = vld [vmem:[%s204 + $0x60] sm:%s197]
                %219 = vst [vmem:[%s205 + $0x30] sm:%s197] %v218
                %v220 = vld [vmem:[%s204 + $0x70] sm:%s197]
                %221 = vst [vmem:[%s205 + $0x38] sm:%s197] %v220
                %v222 = vld [vmem:[%s204 + $0x80] sm:%s197]
                %223 = vst [vmem:[%s205 + $0x40] sm:%s197] %v222
                %v224 = vld [vmem:[%s204 + $0x90] sm:%s197]
                %225 = vst [vmem:[%s205 + $0x48] sm:%s197] %v224
                %v226 = vld [vmem:[%s204 + $0xa0] sm:%s197]
                %227 = vst [vmem:[%s205 + $0x50] sm:%s197] %v226
                %v228 = vld [vmem:[%s204 + $0xb0] sm:%s197]
                %229 = vst [vmem:[%s205 + $0x58] sm:%s197] %v228
                %v230 = vld [vmem:[%s204 + $0xc0] sm:%s197]
                %231 = vst [vmem:[%s205 + $0x60] sm:%s197] %v230
                %v232 = vld [vmem:[%s204 + $0xd0] sm:%s197]
                %233 = vst [vmem:[%s205 + $0x68] sm:%s197] %v232
                %v234 = vld [vmem:[%s204 + $0xe0] sm:%s197]
                %235 = vst [vmem:[%s205 + $0x70] sm:%s197] %v234
                %v236 = vld [vmem:[%s204 + $0xf0] sm:%s197]
                %237 = vst [vmem:[%s205 + $0x78] sm:%s197] %v236
                %v238 = vld [vmem:[%s204 + $0x100] sm:%s197]
                %239 = vst [vmem:[%s205 + $0x80] sm:%s197] %v238
                %v240 = vld [vmem:[%s204 + $0x110] sm:%s197]
                %241 = vst [vmem:[%s205 + $0x88] sm:%s197] %v240
              $region49: #{resnet_fed_forward.9} parent=43 // loop_footer
                %s203 = sadd.s32 1, %s199
              $region50: #{resnet_fed_forward.9} parent=43 // loop_footer_branch
                %198 = sbr.rel target = $region46
              $region51: #{resnet_fed_forward.9} parent=43 // loop_exit
                _
            $region44: #{resnet_fed_forward.9} parent=35 // pred_fallthru
              _
          $region36: #{resnet_fed_forward.9} parent=31 // pred_fallthru
            _
          %290 = vnop
        $region32: #{resnet_fed_forward.9} parent=27 // pred_fallthru
          _
        // Predicated region
        $region67: #{resnet_fed_forward.9} parent=27 // pred_check
          %p291 = pneg %p120
        $region68: #{resnet_fed_forward.9} parent=27 // pred_check_branch
          %293 = sbr.rel (%p291) target = $region70
        $region69: #{resnet_fed_forward.9} parent=27 // pred_region
          %s294 = sand.u32 %s110, 1
          %s295 = sand.u32 %s110, 1
          %s296 = smul.addr %s295, 16
          %s297 = scalar_lea.vmem [#allocation3], %s296
          %s298 = smul.u32 2, %s11
          %s299 = smul.addr %s298, 4
          %s300 = scalar_lea.vmem %s4, %s299
          // Predicated region
          $region71: #{resnet_fed_forward.9} parent=69 // pred_check
            _
          $region72: #{resnet_fed_forward.9} parent=69 // pred_check_branch
            %302 = sbr.rel (0) target = $region74
          $region73: #{resnet_fed_forward.9} parent=69 // pred_region
            // Predicated region
            $region75: #{resnet_fed_forward.9} parent=73 // pred_check
              _
            $region76: #{resnet_fed_forward.9} parent=73 // pred_check_branch
              %304 = sbr.rel (0) target = $region78
            $region77: #{resnet_fed_forward.9} parent=73 // pred_region
              // Predicated region
              $region90: #{resnet_fed_forward.9} parent=77 // pred_check
                _
              $region91: #{resnet_fed_forward.9} parent=77 // pred_check_branch
                %322 = sbr.rel (0) target = $region93
              $region92: #{resnet_fed_forward.9} parent=77 // pred_region
                loop: start=0, step=1, limit=1
                $region94: #{resnet_fed_forward.9} parent=92 // loop_pre_header
                  _
                $region95: #{resnet_fed_forward.9} parent=92 // loop_header
                  %s324 = sphi 0, %s328
                  %p325 = scmp.ge.s32.totalorder %s324, 1
                  %s329 = sphi %s300, %s300
                  %s330 = sphi %s297, %s297
                $region96: #{resnet_fed_forward.9} parent=92 // loop_header_branch
                  %327 = sbr.rel (%p325) target = $region100
                $region97: #{resnet_fed_forward.9} parent=92 // loop_body
                  %v331 = vld [vmem:[%s329] sm:$0xff]
                  %332 = vst [vmem:[%s330] sm:$0xff] %v331
                  %v333 = vld [vmem:[%s329 + $0x10] sm:$0xff]
                  %334 = vst [vmem:[%s330 + $0x8] sm:$0xff] %v333
                $region98: #{resnet_fed_forward.9} parent=92 // loop_footer
                  %s328 = sadd.s32 1, %s324
                $region99: #{resnet_fed_forward.9} parent=92 // loop_footer_branch
                  %323 = sbr.rel target = $region95
                $region100: #{resnet_fed_forward.9} parent=92 // loop_exit
                  _
              $region93: #{resnet_fed_forward.9} parent=77 // pred_fallthru
                _
              // Predicated region
              $region101: #{resnet_fed_forward.9} parent=77 // pred_check
                _
              $region102: #{resnet_fed_forward.9} parent=77 // pred_check_branch
                %336 = sbr.rel target = $region104
              $region103: #{resnet_fed_forward.9} parent=77 // pred_region
                _
              $region104: #{resnet_fed_forward.9} parent=77 // pred_fallthru
                _
            $region78: #{resnet_fed_forward.9} parent=73 // pred_fallthru
              _
            // Predicated region
            $region79: #{resnet_fed_forward.9} parent=73 // pred_check
              _
            $region80: #{resnet_fed_forward.9} parent=73 // pred_check_branch
              %306 = sbr.rel target = $region82
            $region81: #{resnet_fed_forward.9} parent=73 // pred_region
              %s308 = ssub.s32 256, 1
              loop: start=0, step=1, limit=1
              $region83: #{resnet_fed_forward.9} parent=81 // loop_pre_header
                _
              $region84: #{resnet_fed_forward.9} parent=81 // loop_header
                %s310 = sphi 0, %s314
                %p311 = scmp.ge.s32.totalorder %s310, 1
                %s315 = sphi %s300, %s300
                %s316 = sphi %s297, %s297
              $region85: #{resnet_fed_forward.9} parent=81 // loop_header_branch
                %313 = sbr.rel (%p311) target = $region89
              $region86: #{resnet_fed_forward.9} parent=81 // loop_body
                %v317 = vld [vmem:[%s315] sm:%s308]
                %318 = vst [vmem:[%s316] sm:%s308] %v317
                %v319 = vld [vmem:[%s315 + $0x10] sm:%s308]
                %320 = vst [vmem:[%s316 + $0x8] sm:%s308] %v319
              $region87: #{resnet_fed_forward.9} parent=81 // loop_footer
                %s314 = sadd.s32 1, %s310
              $region88: #{resnet_fed_forward.9} parent=81 // loop_footer_branch
                %309 = sbr.rel target = $region84
              $region89: #{resnet_fed_forward.9} parent=81 // loop_exit
                _
            $region82: #{resnet_fed_forward.9} parent=73 // pred_fallthru
              _
          $region74: #{resnet_fed_forward.9} parent=69 // pred_fallthru
            _
          %337 = vnop
        $region70: #{resnet_fed_forward.9} parent=27 // pred_fallthru
          _
      $region28: #{resnet_fed_forward.9} parent=5 // pred_fallthru
        _
      %p338 = scmp.le.s32.totalorder 1, %s11
      %p339 = scmp.lt.s32.totalorder %s11, 3
      %p340 = pnand %p338, %p339
      %p341 = pneg %p340
      // Predicated region
      $region105: #{resnet_fed_forward.9} parent=5 // pred_check
        _
      $region106: #{resnet_fed_forward.9} parent=5 // pred_check_branch
        %343 = sbr.rel (%p340) target = $region108
      $region107: #{resnet_fed_forward.9} parent=5 // pred_region
        %s344 = ssub.s32 %s11, 1
        %s345 = sand.u32 %s45, 1
        %s346 = sand.u32 %s45, 1
        %s347 = smul.addr %s346, 144
        %s348 = scalar_lea.vmem [#allocation2], %s347
        // Predicated region
        $region109: #{resnet_fed_forward.9} parent=107 // pred_check
          %p349 = pneg %p58
        $region110: #{resnet_fed_forward.9} parent=107 // pred_check_branch
          %351 = sbr.rel (%p349) target = $region112
        $region111: #{resnet_fed_forward.9} parent=107 // pred_region
          _
        $region112: #{resnet_fed_forward.9} parent=107 // pred_fallthru
          _
        %s352 = sand.u32 %s113, 1
        %s353 = sand.u32 %s113, 1
        %s354 = smul.addr %s353, 16
        %s355 = scalar_lea.vmem [#allocation3], %s354
        // Predicated region
        $region113: #{resnet_fed_forward.9} parent=107 // pred_check
          %p356 = pneg %p126
        $region114: #{resnet_fed_forward.9} parent=107 // pred_check_branch
          %358 = sbr.rel (%p356) target = $region116
        $region115: #{resnet_fed_forward.9} parent=107 // pred_region
          _
        $region116: #{resnet_fed_forward.9} parent=107 // pred_fallthru
          _
        %p359 = pneg %p32
        %p360 = pneg %p29
        %s361 = sand.u32 %s45, 1
        %s362 = sand.u32 %s45, 1
        %s363 = smul.addr %s362, 144
        %s364 = scalar_lea.vmem [#allocation2], %s363
        %p365 = pneg %p58
        %p366 = pneg %p55
        %p367 = pneg %p79
        %p368 = pneg %p76
        %p369 = pneg %p100
        %p370 = pneg %p97
        %s371 = sand.u32 %s113, 1
        %s372 = sand.u32 %s113, 1
        %s373 = smul.addr %s372, 16
        %s374 = scalar_lea.vmem [#allocation3], %s373
        %p375 = pneg %p126
        %p376 = pneg %p123
        %p377 = pneg %p152
        %p378 = pneg %p149
        %s379 = sand.u32 %s139, 1
        %s380 = sand.u32 %s139, 1
        %s381 = smul.addr %s380, 16
        %s382 = scalar_lea.vmem [#allocation4], %s381
        %s383 = smul.u32 2, %s16
        %s384 = smul.u32 2, %s16
        %s385 = smul.u32 2, %s16
        %v387 = vld [vmem:[%s0] sm:$0xff]
        %v388 = vld [vmem:[%s0 + $0x8] sm:$0xff]
        %v389 = vld [vmem:[%s348] sm:$0xff]
        %v390 = vld [vmem:[%s348 + $0x8] sm:$0xff]
        %v391 = vld [vmem:[%s348 + $0x10] sm:$0xff]
        %v392 = vld [vmem:[%s348 + $0x18] sm:$0xff]
        %v393 = vld [vmem:[%s348 + $0x20] sm:$0xff]
        %v394 = vld [vmem:[%s348 + $0x28] sm:$0xff]
        %v395 = vld [vmem:[%s348 + $0x30] sm:$0xff]
        %v396 = vld [vmem:[%s348 + $0x38] sm:$0xff]
        %v397 = vld [vmem:[%s348 + $0x40] sm:$0xff]
        %v398 = vld [vmem:[%s348 + $0x48] sm:$0xff]
        %v399 = vld [vmem:[%s348 + $0x50] sm:$0xff]
        %v400 = vld [vmem:[%s348 + $0x58] sm:$0xff]
        %v401 = vld [vmem:[%s348 + $0x60] sm:$0xff]
        %v402 = vld [vmem:[%s348 + $0x68] sm:$0xff]
        %v403 = vld [vmem:[%s348 + $0x70] sm:$0xff]
        %v404 = vld [vmem:[%s348 + $0x78] sm:$0xff]
        %v405 = vld [vmem:[%s348 + $0x80] sm:$0xff]
        %v406 = vld [vmem:[%s348 + $0x88] sm:$0xff]
        %v409 = vunpack.c.l.b16 %v387
        %v410 = vunpack.c.h.b16 %v387
        %v411 = vunpack.c.l.b16 %v388
        %v412 = vunpack.c.h.b16 %v388
        %v413 = vpack.c.b16 %v411, %v409
        %v414 = vpack.c.b16 %v412, %v410
        %v434 = vunpack.c.l.b16 %v389
        %v435 = vunpack.c.h.b16 %v389
        %v436 = vunpack.c.l.b16 %v390
        %v437 = vunpack.c.h.b16 %v390
        %v438 = vunpack.c.l.b16 %v391
        %v439 = vunpack.c.h.b16 %v391
        %v440 = vunpack.c.l.b16 %v392
        %v441 = vunpack.c.h.b16 %v392
        %v442 = vunpack.c.l.b16 %v393
        %v443 = vunpack.c.h.b16 %v393
        %v444 = vunpack.c.l.b16 %v394
        %v445 = vunpack.c.h.b16 %v394
        %v446 = vunpack.c.l.b16 %v395
        %v447 = vunpack.c.h.b16 %v395
        %v448 = vunpack.c.l.b16 %v396
        %v449 = vunpack.c.h.b16 %v396
        %v450 = vunpack.c.l.b16 %v397
        %v451 = vunpack.c.h.b16 %v397
        %v452 = vunpack.c.l.b16 %v398
        %v453 = vunpack.c.h.b16 %v398
        %v454 = vunpack.c.l.b16 %v399
        %v455 = vunpack.c.h.b16 %v399
        %v456 = vunpack.c.l.b16 %v400
        %v457 = vunpack.c.h.b16 %v400
        %v458 = vunpack.c.l.b16 %v401
        %v459 = vunpack.c.h.b16 %v401
        %v460 = vunpack.c.l.b16 %v402
        %v461 = vunpack.c.h.b16 %v402
        %v462 = vunpack.c.l.b16 %v403
        %v463 = vunpack.c.h.b16 %v403
        %v464 = vunpack.c.l.b16 %v404
        %v465 = vunpack.c.h.b16 %v404
        %v466 = vunpack.c.l.b16 %v405
        %v467 = vunpack.c.h.b16 %v405
        %v468 = vunpack.c.l.b16 %v406
        %v469 = vunpack.c.h.b16 %v406
        %v470 = vpack.c.b16 %v436, %v434
        %v471 = vpack.c.b16 %v437, %v435
        %v472 = vpack.c.b16 %v440, %v438
        %v473 = vpack.c.b16 %v441, %v439
        %v474 = vpack.c.b16 %v444, %v442
        %v475 = vpack.c.b16 %v445, %v443
        %v476 = vpack.c.b16 %v448, %v446
        %v477 = vpack.c.b16 %v449, %v447
        %v478 = vpack.c.b16 %v452, %v450
        %v479 = vpack.c.b16 %v453, %v451
        %v480 = vpack.c.b16 %v456, %v454
        %v481 = vpack.c.b16 %v457, %v455
        %v482 = vpack.c.b16 %v460, %v458
        %v483 = vpack.c.b16 %v461, %v459
        %v484 = vpack.c.b16 %v464, %v462
        %v485 = vpack.c.b16 %v465, %v463
        %v486 = vpack.c.b16 %v468, %v466
        %v487 = vpack.c.b16 %v469, %v467
        %vm506 = vcmask 130048
        %v508 = vsel %vm506, %v414, 0
        %510 = vmatprep.subr.bf16.mxu0 %v485
        %511 = vmatpush1.bf16.msra.mxu0 %v484
        %512 = vmatprep.subr.bf16.mxu0 %v483
        %513 = vmatpush1.bf16.msra.mxu0 %v482
        %514 = vmatprep.subr.bf16.mxu0 %v481
        %515 = vmatpush1.bf16.msra.mxu0 %v480
        %516 = vmatprep.subr.bf16.mxu0 %v479
        %517 = vmatpush1.bf16.msra.mxu0 %v478
        %518 = vmatprep.subr.bf16.mxu0 %v477
        %519 = vmatpush1.bf16.msra.mxu0 %v476
        %520 = vmatprep.subr.bf16.mxu0 %v475
        %521 = vmatpush1.bf16.msra.mxu0 %v474
        %522 = vmatprep.subr.bf16.mxu0 %v473
        %523 = vmatpush1.bf16.msra.mxu0 %v472
        %524 = vmatprep.subr.bf16.mxu0 %v471
        %525 = vmatpush1.bf16.msra.mxu0 %v470
        %526 = vmatprep.subr.bf16.mxu0 0
        %527 = vmatpush2.bf16.msra.mxu0 0
        %528 = vmatprep.subr.bf16.mxu0 0
        %529 = vmatpush2.bf16.msra.mxu0 0
        %530 = vmatprep.subr.bf16.mxu0 0
        %531 = vmatpush2.bf16.msra.mxu0 0
        %532 = vmatprep.subr.bf16.mxu0 0
        %533 = vmatpush2.bf16.msra.mxu0 0
        %534 = vmatprep.subr.bf16.mxu0 0
        %535 = vmatpush2.bf16.msra.mxu0 0
        %536 = vmatprep.subr.bf16.mxu0 0
        %537 = vmatpush2.bf16.msra.mxu0 0
        %538 = vmatprep.subr.bf16.mxu0 0
        %539 = vmatpush2.bf16.msra.mxu0 0
        %540 = vmatprep.subr.bf16.mxu0 %v487
        %541 = vmatpush2.bf16.msra.mxu0 %v486
        %542 = vmatprep.mubr.bf16.mxu0 %v508
        %543 = vmatmul.mubr.bf16.gmra.mxu0 %v413
        %v544 = vpop.f32.mrf.mxu0
        %v545 = vadd.f32 0.0, %v544
        %v546 = vpop.f32.mrf.mxu0
        %v547 = vadd.f32 0.0, %v546
        %v548 = vpop.f32.mrf.mxu0
        %v549 = vadd.f32 0.0, %v548
        %v550 = vpop.f32.mrf.mxu0
        %v551 = vadd.f32 0.0, %v550
        %552 = vdwg.mxu0
        %v553 = vld [vmem:[%s2] sm:$0xff]
        %v554 = vld [vmem:[%s2 + $0x8] sm:$0xff]
        %556 = vset.pattern.permute.xlu0 0
        %557 = vperm.xlu0 %556, %v553
        %v558 = vpop.permute.xlu0 %557
        %561 = vset.pattern.permute.xlu0 0
        %562 = vperm.xlu0 %561, %v554
        %v563 = vpop.permute.xlu0 %562
        %v565 = vmul.f32 %v545, %v558
        %v566 = vmul.f32 %v547, %v558
        %v567 = vmul.f32 %v549, %v563
        %v568 = vmul.f32 %v551, %v563
        %v569 = vld [vmem:[%s3] sm:$0xff]
        %v570 = vld [vmem:[%s3 + $0x8] sm:$0xff]
        %572 = vset.pattern.permute.xlu0 0
        %573 = vperm.xlu0 %572, %v569
        %v574 = vpop.permute.xlu0 %573
        %577 = vset.pattern.permute.xlu0 0
        %578 = vperm.xlu0 %577, %v570
        %v579 = vpop.permute.xlu0 %578
        %v581 = vadd.f32 %v565, %v574
        %v582 = vadd.f32 %v566, %v574
        %v583 = vadd.f32 %v567, %v579
        %v584 = vadd.f32 %v568, %v579
        %v585 = vld [vmem:[%s355] sm:$0xff]
        %v586 = vld [vmem:[%s355 + $0x8] sm:$0xff]
        %v587 = vunpack.c.l.bf16 %v585
        %v588 = vunpack.c.h.bf16 %v585
        %v589 = vunpack.c.l.bf16 %v586
        %v590 = vunpack.c.h.bf16 %v586
        %v591 = vadd.f32 %v581, %v587
        %v592 = vadd.f32 %v582, %v588
        %v593 = vadd.f32 %v583, %v589
        %v594 = vadd.f32 %v584, %v590
        %v595 = vmax.f32 %v591, 0.0
        %v596 = vmax.f32 %v592, 0.0
        %v597 = vmax.f32 %v593, 0.0
        %v598 = vmax.f32 %v594, 0.0
        %v599 = vpack.c.bf16 %v597, %v595
        %v600 = vpack.c.bf16 %v598, %v596
        %v603 = vunpack.c.l.b16 %v599
        %v604 = vunpack.c.l.b16 %v600
        %v605 = vunpack.c.h.b16 %v599
        %v606 = vunpack.c.h.b16 %v600
        %v607 = vpack.c.b16 %v604, %v603
        %v608 = vpack.c.b16 %v606, %v605
        %611 = vst [vmem:[%s382] sm:$0xff] %v607
        %612 = vst [vmem:[%s382 + $0x8] sm:$0xff] %v608
        %s613 = sand.u32 %s139, 1
        %s614 = sand.u32 %s139, 1
        %s615 = smul.addr %s614, 16
        %s616 = scalar_lea.vmem [#allocation4], %s615
        // Predicated region
        $region117: #{resnet_fed_forward.9} parent=107 // pred_check
          %p617 = pneg %p149
        $region118: #{resnet_fed_forward.9} parent=107 // pred_check_branch
          %619 = sbr.rel (%p617) target = $region120
        $region119: #{resnet_fed_forward.9} parent=107 // pred_region
          %s620 = smul.u32 2, %s16
          %s621 = smul.addr %s620, 4
          %s622 = scalar_lea.vmem %s5, %s621
          // Predicated region
          $region121: #{resnet_fed_forward.9} parent=119 // pred_check
            _
          $region122: #{resnet_fed_forward.9} parent=119 // pred_check_branch
            %624 = sbr.rel (0) target = $region124
          $region123: #{resnet_fed_forward.9} parent=119 // pred_region
            // Predicated region
            $region125: #{resnet_fed_forward.9} parent=123 // pred_check
              _
            $region126: #{resnet_fed_forward.9} parent=123 // pred_check_branch
              %626 = sbr.rel (0) target = $region128
            $region127: #{resnet_fed_forward.9} parent=123 // pred_region
              // Predicated region
              $region140: #{resnet_fed_forward.9} parent=127 // pred_check
                _
              $region141: #{resnet_fed_forward.9} parent=127 // pred_check_branch
                %644 = sbr.rel (0) target = $region143
              $region142: #{resnet_fed_forward.9} parent=127 // pred_region
                loop: start=0, step=1, limit=1
                $region144: #{resnet_fed_forward.9} parent=142 // loop_pre_header
                  _
                $region145: #{resnet_fed_forward.9} parent=142 // loop_header
                  %s646 = sphi 0, %s650
                  %p647 = scmp.ge.s32.totalorder %s646, 1
                  %s651 = sphi %s616, %s616
                  %s652 = sphi %s622, %s622
                $region146: #{resnet_fed_forward.9} parent=142 // loop_header_branch
                  %649 = sbr.rel (%p647) target = $region150
                $region147: #{resnet_fed_forward.9} parent=142 // loop_body
                  %v653 = vld [vmem:[%s651] sm:$0xff]
                  %654 = vst [vmem:[%s652] sm:$0xff] %v653
                  %v655 = vld [vmem:[%s651 + $0x8] sm:$0xff]
                  %656 = vst [vmem:[%s652 + $0x10] sm:$0xff] %v655
                $region148: #{resnet_fed_forward.9} parent=142 // loop_footer
                  %s650 = sadd.s32 1, %s646
                $region149: #{resnet_fed_forward.9} parent=142 // loop_footer_branch
                  %645 = sbr.rel target = $region145
                $region150: #{resnet_fed_forward.9} parent=142 // loop_exit
                  _
              $region143: #{resnet_fed_forward.9} parent=127 // pred_fallthru
                _
              // Predicated region
              $region151: #{resnet_fed_forward.9} parent=127 // pred_check
                _
              $region152: #{resnet_fed_forward.9} parent=127 // pred_check_branch
                %658 = sbr.rel target = $region154
              $region153: #{resnet_fed_forward.9} parent=127 // pred_region
                _
              $region154: #{resnet_fed_forward.9} parent=127 // pred_fallthru
                _
            $region128: #{resnet_fed_forward.9} parent=123 // pred_fallthru
              _
            // Predicated region
            $region129: #{resnet_fed_forward.9} parent=123 // pred_check
              _
            $region130: #{resnet_fed_forward.9} parent=123 // pred_check_branch
              %628 = sbr.rel target = $region132
            $region131: #{resnet_fed_forward.9} parent=123 // pred_region
              %s630 = ssub.s32 256, 1
              loop: start=0, step=1, limit=1
              $region133: #{resnet_fed_forward.9} parent=131 // loop_pre_header
                _
              $region134: #{resnet_fed_forward.9} parent=131 // loop_header
                %s632 = sphi 0, %s636
                %p633 = scmp.ge.s32.totalorder %s632, 1
                %s637 = sphi %s616, %s616
                %s638 = sphi %s622, %s622
              $region135: #{resnet_fed_forward.9} parent=131 // loop_header_branch
                %635 = sbr.rel (%p633) target = $region139
              $region136: #{resnet_fed_forward.9} parent=131 // loop_body
                %v639 = vld [vmem:[%s637] sm:%s630]
                %640 = vst [vmem:[%s638] sm:%s630] %v639
                %v641 = vld [vmem:[%s637 + $0x8] sm:%s630]
                %642 = vst [vmem:[%s638 + $0x10] sm:%s630] %v641
              $region137: #{resnet_fed_forward.9} parent=131 // loop_footer
                %s636 = sadd.s32 1, %s632
              $region138: #{resnet_fed_forward.9} parent=131 // loop_footer_branch
                %631 = sbr.rel target = $region134
              $region139: #{resnet_fed_forward.9} parent=131 // loop_exit
                _
            $region132: #{resnet_fed_forward.9} parent=123 // pred_fallthru
              _
          $region124: #{resnet_fed_forward.9} parent=119 // pred_fallthru
            _
          %659 = vnop
        $region120: #{resnet_fed_forward.9} parent=107 // pred_fallthru
          _
      $region108: #{resnet_fed_forward.9} parent=5 // pred_fallthru
        _
      %p660 = scmp.le.s32.totalorder 2, %s11
      // Predicated region
      $region155: #{resnet_fed_forward.9} parent=5 // pred_check
        %p661 = pneg %p660
      $region156: #{resnet_fed_forward.9} parent=5 // pred_check_branch
        %663 = sbr.rel (%p661) target = $region158
      $region157: #{resnet_fed_forward.9} parent=5 // pred_region
        %s664 = ssub.s32 %s11, 2
        // Predicated region
        $region159: #{resnet_fed_forward.9} parent=157 // pred_check
          %p665 = pneg %p155
        $region160: #{resnet_fed_forward.9} parent=157 // pred_check_branch
          %667 = sbr.rel (%p665) target = $region162
        $region161: #{resnet_fed_forward.9} parent=157 // pred_region
          %s668 = sand.u32 %s140, 1
          %s669 = sand.u32 %s140, 1
          %s670 = smul.addr %s669, 16
          %s671 = scalar_lea.vmem [#allocation4], %s670
        $region162: #{resnet_fed_forward.9} parent=157 // pred_fallthru
          _
      $region158: #{resnet_fed_forward.9} parent=5 // pred_fallthru
        _
    $region6: #{resnet_fed_forward.9} parent=1 // loop_footer
      %s15 = sadd.s32 1, %s11
    $region7: #{resnet_fed_forward.9} parent=1 // loop_footer_branch
      %10 = sbr.rel target = $region3
    $region8: #{resnet_fed_forward.9} parent=1 // loop_exit
      _

// kernel: resnet_fed_forward.11
$region0: #{resnet_fed_forward.11}
  #allocation0 [shape = 'u32[]', space=smem, size = 0x4, offset = 0x4, fixed_abs, tag = 'smem constant byte address 0x4 - core index']
  #allocation1 [shape = 'u32[144,128]{1,0:T(1,128)}', space=vmem, size = 0x12000, scoped, tag = 'internal scratch']
  %s0 = inlined_call_operand.vmem [shape: bf16[32,144], index: 0, kind: input, shape index: {}]
  %s1 = inlined_call_operand.vmem [shape: bf16[144,128], index: 1, kind: input, shape index: {}]
  %s2 = inlined_call_operand.vmem [shape: f32[32,1], index: 2, kind: input, shape index: {}]
  %s3 = inlined_call_operand.vmem [shape: f32[32,1], index: 3, kind: input, shape index: {}]
  %s4 = inlined_call_operand.vmem [shape: bf16[32,128], index: 4, kind: output, shape index: {}]
  %s5 = sld [smem:[#allocation0]]
  $region26: #{resnet_fed_forward.11} parent=0
    _
  %s7 = ssub.s32 1, %s5
  %s8 = scalar_select 0, %s7, %s5
  // Predicated region
  $region2: #{resnet_fed_forward.11} parent=0 // pred_check
    _
  $region3: #{resnet_fed_forward.11} parent=0 // pred_check_branch
    %10 = sbr.rel (0) target = $region5
  $region4: #{resnet_fed_forward.11} parent=0 // pred_region
    _
  $region5: #{resnet_fed_forward.11} parent=0 // pred_fallthru
    _
  // Predicated region
  $region6: #{resnet_fed_forward.11} parent=0 // pred_check
    _
  $region7: #{resnet_fed_forward.11} parent=0 // pred_check_branch
    %12 = sbr.rel (0) target = $region9
  $region8: #{resnet_fed_forward.11} parent=0 // pred_region
    _
  $region9: #{resnet_fed_forward.11} parent=0 // pred_fallthru
    _
  // Predicated region
  $region10: #{resnet_fed_forward.11} parent=0 // pred_check
    _
  $region11: #{resnet_fed_forward.11} parent=0 // pred_check_branch
    %14 = sbr.rel (0) target = $region13
  $region12: #{resnet_fed_forward.11} parent=0 // pred_region
    _
  $region13: #{resnet_fed_forward.11} parent=0 // pred_fallthru
    _
  // Predicated region
  $region14: #{resnet_fed_forward.11} parent=0 // pred_check
    _
  $region15: #{resnet_fed_forward.11} parent=0 // pred_check_branch
    %16 = sbr.rel (0) target = $region17
  $region16: #{resnet_fed_forward.11} parent=0 // pred_region
    _
  $region17: #{resnet_fed_forward.11} parent=0 // pred_fallthru
    _
  %v18 = vld [vmem:[%s0] sm:$0xff]
  %v19 = vld [vmem:[%s0 + $0x8] sm:$0xff]
  %v20 = vld [vmem:[%s0 + $0x10] sm:$0xff]
  %v21 = vld [vmem:[%s0 + $0x18] sm:$0xff]
  %v22 = vld [vmem:[%s1] sm:$0xf]
  %v23 = vld [vmem:[%s1 + $0x4] sm:$0xf]
  %v24 = vld [vmem:[%s1 + $0x8] sm:$0xf]
  %v25 = vld [vmem:[%s1 + $0xc] sm:$0xf]
  %v26 = vld [vmem:[%s1 + $0x10] sm:$0xf]
  %v27 = vld [vmem:[%s1 + $0x14] sm:$0xf]
  %v28 = vld [vmem:[%s1 + $0x18] sm:$0xf]
  %v29 = vld [vmem:[%s1 + $0x1c] sm:$0xf]
  %v30 = vld [vmem:[%s1 + $0x20] sm:$0xf]
  %v31 = vld [vmem:[%s1 + $0x24] sm:$0xf]
  %v32 = vld [vmem:[%s1 + $0x28] sm:$0xf]
  %v33 = vld [vmem:[%s1 + $0x2c] sm:$0xf]
  %v34 = vld [vmem:[%s1 + $0x30] sm:$0xf]
  %v35 = vld [vmem:[%s1 + $0x34] sm:$0xf]
  %v36 = vld [vmem:[%s1 + $0x38] sm:$0xf]
  %v37 = vld [vmem:[%s1 + $0x3c] sm:$0xf]
  %v38 = vld [vmem:[%s1 + $0x40] sm:$0xf]
  %v39 = vld [vmem:[%s1 + $0x44] sm:$0xf]
  %v44 = vunpack.c.l.b16 %v18
  %v45 = vunpack.c.h.b16 %v18
  %v46 = vunpack.c.l.b16 %v19
  %v47 = vunpack.c.h.b16 %v19
  %v48 = vunpack.c.l.b16 %v20
  %v49 = vunpack.c.h.b16 %v20
  %v50 = vunpack.c.l.b16 %v21
  %v51 = vunpack.c.h.b16 %v21
  %v52 = vpack.c.b16 %v46, %v44
  %v53 = vpack.c.b16 %v47, %v45
  %v54 = vpack.c.b16 %v50, %v48
  %v55 = vpack.c.b16 %v51, %v49
  %v76 = vunpack.c.l.b16 %v22
  %v77 = vunpack.c.l.b16 %v23
  %v78 = vunpack.c.l.b16 %v24
  %v79 = vunpack.c.l.b16 %v25
  %v80 = vunpack.c.l.b16 %v26
  %v81 = vunpack.c.l.b16 %v27
  %v82 = vunpack.c.l.b16 %v28
  %v83 = vunpack.c.l.b16 %v29
  %v84 = vunpack.c.l.b16 %v30
  %v85 = vunpack.c.l.b16 %v31
  %v86 = vunpack.c.l.b16 %v32
  %v87 = vunpack.c.l.b16 %v33
  %v88 = vunpack.c.l.b16 %v34
  %v89 = vunpack.c.l.b16 %v35
  %v90 = vunpack.c.l.b16 %v36
  %v91 = vunpack.c.l.b16 %v37
  %v92 = vunpack.c.l.b16 %v38
  %v93 = vunpack.c.l.b16 %v39
  %v94 = vpack.c.b16 %v77, %v76
  %v95 = vpack.c.b16 %v79, %v78
  %v96 = vpack.c.b16 %v81, %v80
  %v97 = vpack.c.b16 %v83, %v82
  %v98 = vpack.c.b16 %v85, %v84
  %v99 = vpack.c.b16 %v87, %v86
  %v100 = vpack.c.b16 %v89, %v88
  %v101 = vpack.c.b16 %v91, %v90
  %v102 = vpack.c.b16 %v93, %v92
  %vm112 = vcmask 130048
  %v114 = vsel %vm112, %v53, 0
  %v117 = vsel %vm112, %v55, 0
  %119 = vmatprep.subr.bf16.mxu0 0
  %120 = vmatpush1.bf16.msra.mxu0 %v101
  %121 = vmatprep.subr.bf16.mxu0 0
  %122 = vmatpush1.bf16.msra.mxu0 %v100
  %123 = vmatprep.subr.bf16.mxu0 0
  %124 = vmatpush1.bf16.msra.mxu0 %v99
  %125 = vmatprep.subr.bf16.mxu0 0
  %126 = vmatpush1.bf16.msra.mxu0 %v98
  %127 = vmatprep.subr.bf16.mxu0 0
  %128 = vmatpush1.bf16.msra.mxu0 %v97
  %129 = vmatprep.subr.bf16.mxu0 0
  %130 = vmatpush1.bf16.msra.mxu0 %v96
  %131 = vmatprep.subr.bf16.mxu0 0
  %132 = vmatpush1.bf16.msra.mxu0 %v95
  %133 = vmatprep.subr.bf16.mxu0 0
  %134 = vmatpush1.bf16.msra.mxu0 %v94
  %135 = vmatprep.subr.bf16.mxu0 0
  %136 = vmatpush2.bf16.msra.mxu0 0
  %137 = vmatprep.subr.bf16.mxu0 0
  %138 = vmatpush2.bf16.msra.mxu0 0
  %139 = vmatprep.subr.bf16.mxu0 0
  %140 = vmatpush2.bf16.msra.mxu0 0
  %141 = vmatprep.subr.bf16.mxu0 0
  %142 = vmatpush2.bf16.msra.mxu0 0
  %143 = vmatprep.subr.bf16.mxu0 0
  %144 = vmatpush2.bf16.msra.mxu0 0
  %145 = vmatprep.subr.bf16.mxu0 0
  %146 = vmatpush2.bf16.msra.mxu0 0
  %147 = vmatprep.subr.bf16.mxu0 0
  %148 = vmatpush2.bf16.msra.mxu0 0
  %149 = vmatprep.subr.bf16.mxu0 0
  %150 = vmatpush2.bf16.msra.mxu0 %v102
  %151 = vmatprep.mubr.bf16.mxu0 %v114
  %152 = vmatmul.mubr.bf16.gmra.mxu0 %v52
  %v153 = vpop.f32.mrf.mxu0
  %v154 = vadd.f32 0.0, %v153
  %v155 = vpop.f32.mrf.mxu0
  %v156 = vpop.f32.mrf.mxu0
  %v157 = vadd.f32 0.0, %v156
  %v158 = vpop.f32.mrf.mxu0
  %159 = vmatprep.mubr.bf16.mxu0 %v117
  %160 = vmatmul.mubr.bf16.gmra.mxu0 %v54
  %v161 = vpop.f32.mrf.mxu0
  %v162 = vadd.f32 0.0, %v161
  %v163 = vpop.f32.mrf.mxu0
  %v164 = vpop.f32.mrf.mxu0
  %v165 = vadd.f32 0.0, %v164
  %v166 = vpop.f32.mrf.mxu0
  %167 = vdwg.mxu0
  %v168 = vld [vmem:[%s2] sm:$0xff]
  %v169 = vld [vmem:[%s2 + $0x8] sm:$0xff]
  %v170 = vld [vmem:[%s2 + $0x10] sm:$0xff]
  %v171 = vld [vmem:[%s2 + $0x18] sm:$0xff]
  %173 = vset.pattern.permute.xlu0 0
  %174 = vperm.xlu0 %173, %v168
  %v175 = vpop.permute.xlu0 %174
  %178 = vset.pattern.permute.xlu0 0
  %179 = vperm.xlu0 %178, %v169
  %v180 = vpop.permute.xlu0 %179
  %183 = vset.pattern.permute.xlu0 0
  %184 = vperm.xlu0 %183, %v170
  %v185 = vpop.permute.xlu0 %184
  %188 = vset.pattern.permute.xlu0 0
  %189 = vperm.xlu0 %188, %v171
  %v190 = vpop.permute.xlu0 %189
  %v192 = vmul.f32 %v154, %v175
  %v193 = vmul.f32 %v157, %v180
  %v194 = vmul.f32 %v162, %v185
  %v195 = vmul.f32 %v165, %v190
  %v196 = vld [vmem:[%s3] sm:$0xff]
  %v197 = vld [vmem:[%s3 + $0x8] sm:$0xff]
  %v198 = vld [vmem:[%s3 + $0x10] sm:$0xff]
  %v199 = vld [vmem:[%s3 + $0x18] sm:$0xff]
  %201 = vset.pattern.permute.xlu0 0
  %202 = vperm.xlu0 %201, %v196
  %v203 = vpop.permute.xlu0 %202
  %206 = vset.pattern.permute.xlu0 0
  %207 = vperm.xlu0 %206, %v197
  %v208 = vpop.permute.xlu0 %207
  %211 = vset.pattern.permute.xlu0 0
  %212 = vperm.xlu0 %211, %v198
  %v213 = vpop.permute.xlu0 %212
  %216 = vset.pattern.permute.xlu0 0
  %217 = vperm.xlu0 %216, %v199
  %v218 = vpop.permute.xlu0 %217
  %v220 = vadd.f32 %v192, %v203
  %v221 = vadd.f32 %v193, %v208
  %v222 = vadd.f32 %v194, %v213
  %v223 = vadd.f32 %v195, %v218
  %v224 = vmax.f32 %v220, 0.0
  %v225 = vmax.f32 %v221, 0.0
  %v226 = vmax.f32 %v222, 0.0
  %v227 = vmax.f32 %v223, 0.0
  %v228 = vpack.c.bf16 %v225, %v224
  %v229 = vpack.c.bf16 %v227, %v226
  %v232 = vunpack.c.l.b16 %v228
  %v233 = vunpack.c.h.b16 %v228
  %v234 = vunpack.c.l.b16 %v229
  %v235 = vunpack.c.h.b16 %v229
  %v236 = vpack.c.b16 %v232, %v232
  %v237 = vpack.c.b16 %v233, %v233
  %v238 = vpack.c.b16 %v234, %v234
  %v239 = vpack.c.b16 %v235, %v235
  %244 = vst [vmem:[%s4] sm:$0xf] %v236
  %245 = vst [vmem:[%s4 + $0x4] sm:$0xf] %v237
  %246 = vst [vmem:[%s4 + $0x8] sm:$0xf] %v238
  %247 = vst [vmem:[%s4 + $0xc] sm:$0xf] %v239
  // Predicated region
  $region18: #{resnet_fed_forward.11} parent=0 // pred_check
    _
  $region19: #{resnet_fed_forward.11} parent=0 // pred_check_branch
    %249 = sbr.rel (0) target = $region21
  $region20: #{resnet_fed_forward.11} parent=0 // pred_region
    _
  $region21: #{resnet_fed_forward.11} parent=0 // pred_fallthru
    _
  // Predicated region
  $region22: #{resnet_fed_forward.11} parent=0 // pred_check
    _
  $region23: #{resnet_fed_forward.11} parent=0 // pred_check_branch
    %251 = sbr.rel (0) target = $region25
  $region24: #{resnet_fed_forward.11} parent=0 // pred_region
    _
  $region25: #{resnet_fed_forward.11} parent=0 // pred_fallthru
    _

// kernel: resnet_fed_forward.13
$region0: #{resnet_fed_forward.13}
  #allocation0 [shape = 'u32[]', space=smem, size = 0x4, offset = 0x4, fixed_abs, tag = 'smem constant byte address 0x4 - core index']
  #allocation1 [shape = 'u32[144,128]{1,0:T(1,128)}', space=vmem, size = 0x12000, scoped, tag = 'internal scratch']
  %s0 = inlined_call_operand.vmem [shape: bf16[2,64,32], index: 0, kind: input, shape index: {}]
  %s1 = inlined_call_operand.vmem [shape: f32[32,10], index: 1, kind: input, shape index: {}]
  %s2 = inlined_call_operand.vmem [shape: f32[1,10], index: 2, kind: input, shape index: {}]
  %s3 = inlined_call_operand.hbm [shape: f32[2,10], index: 3, kind: output, shape index: {0}]
  %s4 = inlined_call_operand.hbm [shape: f32[2,32], index: 4, kind: output, shape index: {1}]
  %5 = xla_tuple %s3, %s4
  %s6 = sld [smem:[#allocation0]]
  $region30: #{resnet_fed_forward.13} parent=0
    _
  %s8 = ssub.s32 1, %s6
  %s9 = scalar_select 0, %s8, %s6
  $region1: #{resnet_fed_forward.13} parent=0
    #allocation2 [shape = 'u8[1024]{0}', space=vmem, size = 0x400, scoped, tag = 'output window, operand 0, single buffered']
    #allocation3 [shape = 's32[1]{0}', space=sflag, size = 0x4, scoped, tag = 'scoped memory for resnet_fed_forward.13']
    #allocation4 [shape = 'u8[1024]{0}', space=vmem, size = 0x400, scoped, tag = 'output window, operand 1, single buffered']
    #allocation5 [shape = 's32[1]{0}', space=sflag, size = 0x4, scoped, tag = 'scoped memory for resnet_fed_forward.13']
    %10 = vsyncpa [#allocation3], 0
    %11 = vsyncpa [#allocation5], 0
    // Predicated region
    $region2: #{resnet_fed_forward.13} parent=1 // pred_check
      _
    $region3: #{resnet_fed_forward.13} parent=1 // pred_check_branch
      %13 = sbr.rel (0) target = $region5
    $region4: #{resnet_fed_forward.13} parent=1 // pred_region
      _
    $region5: #{resnet_fed_forward.13} parent=1 // pred_fallthru
      _
    // Predicated region
    $region6: #{resnet_fed_forward.13} parent=1 // pred_check
      _
    $region7: #{resnet_fed_forward.13} parent=1 // pred_check_branch
      %15 = sbr.rel (0) target = $region9
    $region8: #{resnet_fed_forward.13} parent=1 // pred_region
      _
    $region9: #{resnet_fed_forward.13} parent=1 // pred_fallthru
      _
    // Predicated region
    $region10: #{resnet_fed_forward.13} parent=1 // pred_check
      _
    $region11: #{resnet_fed_forward.13} parent=1 // pred_check_branch
      %17 = sbr.rel (0) target = $region13
    $region12: #{resnet_fed_forward.13} parent=1 // pred_region
      _
    $region13: #{resnet_fed_forward.13} parent=1 // pred_fallthru
      _
    %v18 = vld [vmem:[%s0] sm:$0xf]
    %v19 = vld [vmem:[%s0 + $0x4] sm:$0xf]
    %v20 = vld [vmem:[%s0 + $0x8] sm:$0xf]
    %v21 = vld [vmem:[%s0 + $0xc] sm:$0xf]
    %v22 = vld [vmem:[%s0 + $0x10] sm:$0xf]
    %v23 = vld [vmem:[%s0 + $0x14] sm:$0xf]
    %v24 = vld [vmem:[%s0 + $0x18] sm:$0xf]
    %v25 = vld [vmem:[%s0 + $0x1c] sm:$0xf]
    %v26 = vld [vmem:[%s0 + $0x20] sm:$0xf]
    %v27 = vld [vmem:[%s0 + $0x24] sm:$0xf]
    %v28 = vld [vmem:[%s0 + $0x28] sm:$0xf]
    %v29 = vld [vmem:[%s0 + $0x2c] sm:$0xf]
    %v30 = vld [vmem:[%s0 + $0x30] sm:$0xf]
    %v31 = vld [vmem:[%s0 + $0x34] sm:$0xf]
    %v32 = vld [vmem:[%s0 + $0x38] sm:$0xf]
    %v33 = vld [vmem:[%s0 + $0x3c] sm:$0xf]
    %v34 = vunpack.c.l.bf16 %v18
    %v35 = vunpack.c.l.bf16 %v19
    %v36 = vunpack.c.l.bf16 %v20
    %v37 = vunpack.c.l.bf16 %v21
    %v38 = vunpack.c.l.bf16 %v22
    %v39 = vunpack.c.l.bf16 %v23
    %v40 = vunpack.c.l.bf16 %v24
    %v41 = vunpack.c.l.bf16 %v25
    %v42 = vunpack.c.l.bf16 %v26
    %v43 = vunpack.c.l.bf16 %v27
    %v44 = vunpack.c.l.bf16 %v28
    %v45 = vunpack.c.l.bf16 %v29
    %v46 = vunpack.c.l.bf16 %v30
    %v47 = vunpack.c.l.bf16 %v31
    %v48 = vunpack.c.l.bf16 %v32
    %v49 = vunpack.c.l.bf16 %v33
    %vm50 = vcmask 261120
    %v51 = vsel %vm50, %v34, 0.0
    %v52 = vsel %vm50, %v35, 0.0
    %v53 = vadd.f32 %v51, %v52
    %v54 = vsel %vm50, %v36, 0.0
    %v55 = vadd.f32 %v53, %v54
    %v56 = vsel %vm50, %v37, 0.0
    %v57 = vadd.f32 %v55, %v56
    %v58 = vsel %vm50, %v38, 0.0
    %v59 = vadd.f32 %v57, %v58
    %v60 = vsel %vm50, %v39, 0.0
    %v61 = vadd.f32 %v59, %v60
    %v62 = vsel %vm50, %v40, 0.0
    %v63 = vadd.f32 %v61, %v62
    %v64 = vsel %vm50, %v41, 0.0
    %v65 = vadd.f32 %v63, %v64
    %v66 = vrot.slane %v65, 4
    %v67 = vadd.f32 %v65, %v66
    %v68 = vrot.slane %v67, 2
    %v69 = vadd.f32 %v67, %v68
    %v70 = vrot.slane %v69, 1
    %v71 = vadd.f32 %v69, %v70
    %v72 = vsel %vm50, %v42, 0.0
    %v73 = vsel %vm50, %v43, 0.0
    %v74 = vadd.f32 %v72, %v73
    %v75 = vsel %vm50, %v44, 0.0
    %v76 = vadd.f32 %v74, %v75
    %v77 = vsel %vm50, %v45, 0.0
    %v78 = vadd.f32 %v76, %v77
    %v79 = vsel %vm50, %v46, 0.0
    %v80 = vadd.f32 %v78, %v79
    %v81 = vsel %vm50, %v47, 0.0
    %v82 = vadd.f32 %v80, %v81
    %v83 = vsel %vm50, %v48, 0.0
    %v84 = vadd.f32 %v82, %v83
    %v85 = vsel %vm50, %v49, 0.0
    %v86 = vadd.f32 %v84, %v85
    %v87 = vrot.slane %v86, 4
    %v88 = vadd.f32 %v86, %v87
    %v89 = vrot.slane %v88, 2
    %v90 = vadd.f32 %v88, %v89
    %v91 = vrot.slane %v90, 1
    %v92 = vadd.f32 %v90, %v91
    %v93 = vrcp.pop 64.0
    %v94 = vmul.f32 %v71, %v93
    %v95 = vmul.f32 %v92, %v93
    %vm98 = vcmask 1041409
    %v99 = vsel %vm98, %v95, %v94
    %vm101 = vcmask 254976
    %102 = vst.msk [vmem:[#allocation4] sm:$0x3] %vm101, %v99
    %v103 = vld [vmem:[%s1] sm:$0xff]
    %v104 = vld [vmem:[%s1 + $0x8] sm:$0xff]
    %v105 = vld [vmem:[%s1 + $0x10] sm:$0xff]
    %v106 = vld [vmem:[%s1 + $0x18] sm:$0xff]
    %v107 = vld [vmem:[%s2] sm:$0x1]
    %v109 = vlaneseq
    %v110 = vshrl.u32 %v109, 7
    %v111 = vsub.s32 0, %v110
    %v112 = vrot.slane %v107, %v111
    %v114 = vsel %vm50, %v99, 0
    %116 = vmatprep.subr.mxu0 0.0
    %117 = vmatpush1.msra.mxu0 0.0
    %118 = vmatprep.subr.mxu0 0.0
    %119 = vmatpush1.msra.mxu0 0.0
    %120 = vmatprep.subr.mxu0 0.0
    %121 = vmatpush1.msra.mxu0 0.0
    %122 = vmatprep.subr.mxu0 0.0
    %123 = vmatpush1.msra.mxu0 0.0
    %124 = vmatprep.subr.mxu0 0.0
    %125 = vmatpush1.msra.mxu0 0.0
    %126 = vmatprep.subr.mxu0 0.0
    %127 = vmatpush1.msra.mxu0 0.0
    %128 = vmatprep.subr.mxu0 0.0
    %129 = vmatpush1.msra.mxu0 0.0
    %130 = vmatprep.subr.mxu0 0.0
    %131 = vmatpush1.msra.mxu0 0.0
    %132 = vmatprep.subr.mxu0 0.0
    %133 = vmatpush1.msra.mxu0 0.0
    %134 = vmatprep.subr.mxu0 0.0
    %135 = vmatpush1.msra.mxu0 0.0
    %136 = vmatprep.subr.mxu0 0.0
    %137 = vmatpush1.msra.mxu0 0.0
    %138 = vmatprep.subr.mxu0 0.0
    %139 = vmatpush1.msra.mxu0 0.0
    %140 = vmatprep.subr.mxu0 0.0
    %141 = vmatpush1.msra.mxu0 %v106
    %142 = vmatprep.subr.mxu0 0.0
    %143 = vmatpush1.msra.mxu0 %v105
    %144 = vmatprep.subr.mxu0 0.0
    %145 = vmatpush1.msra.mxu0 %v104
    %146 = vmatprep.subr.mxu0 0.0
    %147 = vmatpush1.msra.mxu0 %v103
    %148 = vmatprep.subr.mxu0 0.0
    %149 = vmatpush2.msra.mxu0 0.0
    %150 = vmatprep.subr.mxu0 0.0
    %151 = vmatpush2.msra.mxu0 0.0
    %152 = vmatprep.subr.mxu0 0.0
    %153 = vmatpush2.msra.mxu0 0.0
    %154 = vmatprep.subr.mxu0 0.0
    %155 = vmatpush2.msra.mxu0 0.0
    %156 = vmatprep.subr.mxu0 0.0
    %157 = vmatpush2.msra.mxu0 0.0
    %158 = vmatprep.subr.mxu0 0.0
    %159 = vmatpush2.msra.mxu0 0.0
    %160 = vmatprep.subr.mxu0 0.0
    %161 = vmatpush2.msra.mxu0 0.0
    %162 = vmatprep.subr.mxu0 0.0
    %163 = vmatpush2.msra.mxu0 0.0
    %164 = vmatprep.subr.mxu0 0.0
    %165 = vmatpush2.msra.mxu0 0.0
    %166 = vmatprep.subr.mxu0 0.0
    %167 = vmatpush2.msra.mxu0 0.0
    %168 = vmatprep.subr.mxu0 0.0
    %169 = vmatpush2.msra.mxu0 0.0
    %170 = vmatprep.subr.mxu0 0.0
    %171 = vmatpush2.msra.mxu0 0.0
    %172 = vmatprep.subr.mxu0 0.0
    %173 = vmatpush2.msra.mxu0 0.0
    %174 = vmatprep.subr.mxu0 0.0
    %175 = vmatpush2.msra.mxu0 0.0
    %176 = vmatprep.subr.mxu0 0.0
    %177 = vmatpush2.msra.mxu0 0.0
    %178 = vmatprep.subr.mxu0 0.0
    %179 = vmatpush2.msra.mxu0 0.0
    %180 = vmatprep.mubr.f32.mxu0 0.0
    %181 = vmatmul.mubr.f32.gmra.mxu0 %v114
    %v182 = vpop.f32.mrf.mxu0
    %v183 = vadd.f32 %v112, %v182
    %v184 = vpop.f32.mrf.mxu0
    %185 = vdwg.mxu0
    %vm186 = vcmask 74752
    %187 = vst.msk [vmem:[#allocation2] sm:$0x3] %vm186, %v183
    // Predicated region
    $region14: #{resnet_fed_forward.13} parent=1 // pred_check
      _
    $region15: #{resnet_fed_forward.13} parent=1 // pred_check_branch
      %189 = sbr.rel (0) target = $region17
    $region16: #{resnet_fed_forward.13} parent=1 // pred_region
      %s191 = ssub.s32 32, 32
      %192 = vsyncadd [#allocation3], %s191
      %s194 = sshll.u32 [#allocation2], 4
      %s195 = int_to_ptr.vmem [resolvable:$true] %s194
      %197 = dma.vmem_to_hbm [thread:$0]  %s195, 32, %s3, [#allocation3]
    $region17: #{resnet_fed_forward.13} parent=1 // pred_fallthru
      _
    // Predicated region
    $region18: #{resnet_fed_forward.13} parent=1 // pred_check
      _
    $region19: #{resnet_fed_forward.13} parent=1 // pred_check_branch
      %199 = sbr.rel (0) target = $region21
    $region20: #{resnet_fed_forward.13} parent=1 // pred_region
      %s201 = ssub.s32 32, 32
      %202 = vsyncadd [#allocation5], %s201
      %s204 = sshll.u32 [#allocation4], 4
      %s205 = int_to_ptr.vmem [resolvable:$true] %s204
      %207 = dma.vmem_to_hbm [thread:$0]  %s205, 32, %s4, [#allocation5]
    $region21: #{resnet_fed_forward.13} parent=1 // pred_fallthru
      _
    // Predicated region
    $region22: #{resnet_fed_forward.13} parent=1 // pred_check
      _
    $region23: #{resnet_fed_forward.13} parent=1 // pred_check_branch
      %209 = sbr.rel (0) target = $region25
    $region24: #{resnet_fed_forward.13} parent=1 // pred_region
      %210 = dma.done [#allocation3], 32
    $region25: #{resnet_fed_forward.13} parent=1 // pred_fallthru
      _
    // Predicated region
    $region26: #{resnet_fed_forward.13} parent=1 // pred_check
      _
    $region27: #{resnet_fed_forward.13} parent=1 // pred_check_branch
      %212 = sbr.rel (0) target = $region29
    $region28: #{resnet_fed_forward.13} parent=1 // pred_region
      %213 = dma.done [#allocation5], 32
    $region29: #{resnet_fed_forward.13} parent=1 // pred_fallthru
      _
    %214 = vsyncpa [#allocation3], 1
    %215 = vsyncpa [#allocation5], 1

// kernel: resnet_fed_forward.10
$region0: #{resnet_fed_forward.10}
  #allocation0 [shape = 'u32[]', space=smem, size = 0x4, offset = 0x4, fixed_abs, tag = 'smem constant byte address 0x4 - core index']
  #allocation1 [shape = 'u32[144,128]{1,0:T(1,128)}', space=vmem, size = 0x12000, scoped, tag = 'internal scratch']
  %s0 = inlined_call_operand.vmem [shape: bf16[32,16], index: 0, kind: input, shape index: {}]
  %s1 = inlined_call_operand.vmem [shape: bf16[16,128], index: 1, kind: input, shape index: {}]
  %s2 = inlined_call_operand.vmem [shape: f32[32,1], index: 2, kind: input, shape index: {}]
  %s3 = inlined_call_operand.vmem [shape: f32[32,1], index: 3, kind: input, shape index: {}]
  %s4 = inlined_call_operand.vmem [shape: bf16[32,128], index: 4, kind: output, shape index: {}]
  %s5 = sld [smem:[#allocation0]]
  $region26: #{resnet_fed_forward.10} parent=0
    _
  %s7 = ssub.s32 1, %s5
  %s8 = scalar_select 0, %s7, %s5
  // Predicated region
  $region2: #{resnet_fed_forward.10} parent=0 // pred_check
    _
  $region3: #{resnet_fed_forward.10} parent=0 // pred_check_branch
    %10 = sbr.rel (0) target = $region5
  $region4: #{resnet_fed_forward.10} parent=0 // pred_region
    _
  $region5: #{resnet_fed_forward.10} parent=0 // pred_fallthru
    _
  // Predicated region
  $region6: #{resnet_fed_forward.10} parent=0 // pred_check
    _
  $region7: #{resnet_fed_forward.10} parent=0 // pred_check_branch
    %12 = sbr.rel (0) target = $region9
  $region8: #{resnet_fed_forward.10} parent=0 // pred_region
    _
  $region9: #{resnet_fed_forward.10} parent=0 // pred_fallthru
    _
  // Predicated region
  $region10: #{resnet_fed_forward.10} parent=0 // pred_check
    _
  $region11: #{resnet_fed_forward.10} parent=0 // pred_check_branch
    %14 = sbr.rel (0) target = $region13
  $region12: #{resnet_fed_forward.10} parent=0 // pred_region
    _
  $region13: #{resnet_fed_forward.10} parent=0 // pred_fallthru
    _
  // Predicated region
  $region14: #{resnet_fed_forward.10} parent=0 // pred_check
    _
  $region15: #{resnet_fed_forward.10} parent=0 // pred_check_branch
    %16 = sbr.rel (0) target = $region17
  $region16: #{resnet_fed_forward.10} parent=0 // pred_region
    _
  $region17: #{resnet_fed_forward.10} parent=0 // pred_fallthru
    _
  %v18 = vld [vmem:[%s0] sm:$0xf]
  %v19 = vld [vmem:[%s0 + $0x4] sm:$0xf]
  %v20 = vld [vmem:[%s0 + $0x8] sm:$0xf]
  %v21 = vld [vmem:[%s0 + $0xc] sm:$0xf]
  %v22 = vld [vmem:[%s1] sm:$0xf]
  %v23 = vld [vmem:[%s1 + $0x4] sm:$0xf]
  %v28 = vunpack.c.l.b16 %v18
  %v29 = vunpack.c.l.b16 %v19
  %v30 = vunpack.c.l.b16 %v20
  %v31 = vunpack.c.l.b16 %v21
  %v32 = vpack.c.b16 %v29, %v28
  %v33 = vpack.c.b16 %v31, %v30
  %v36 = vunpack.c.l.b16 %v22
  %v37 = vunpack.c.l.b16 %v23
  %v38 = vpack.c.b16 %v37, %v36
  %vm40 = vcmask 130048
  %v42 = vsel %vm40, %v32, 0
  %v45 = vsel %vm40, %v33, 0
  %47 = vmatprep.subr.bf16.mxu0 0
  %48 = vmatpush1.bf16.msra.mxu0 0
  %49 = vmatprep.subr.bf16.mxu0 0
  %50 = vmatpush1.bf16.msra.mxu0 0
  %51 = vmatprep.subr.bf16.mxu0 0
  %52 = vmatpush1.bf16.msra.mxu0 0
  %53 = vmatprep.subr.bf16.mxu0 0
  %54 = vmatpush1.bf16.msra.mxu0 0
  %55 = vmatprep.subr.bf16.mxu0 0
  %56 = vmatpush1.bf16.msra.mxu0 0
  %57 = vmatprep.subr.bf16.mxu0 0
  %58 = vmatpush1.bf16.msra.mxu0 0
  %59 = vmatprep.subr.bf16.mxu0 0
  %60 = vmatpush1.bf16.msra.mxu0 0
  %61 = vmatprep.subr.bf16.mxu0 0
  %62 = vmatpush1.bf16.msra.mxu0 %v38
  %63 = vmatprep.subr.bf16.mxu0 0
  %64 = vmatpush2.bf16.msra.mxu0 0
  %65 = vmatprep.subr.bf16.mxu0 0
  %66 = vmatpush2.bf16.msra.mxu0 0
  %67 = vmatprep.subr.bf16.mxu0 0
  %68 = vmatpush2.bf16.msra.mxu0 0
  %69 = vmatprep.subr.bf16.mxu0 0
  %70 = vmatpush2.bf16.msra.mxu0 0
  %71 = vmatprep.subr.bf16.mxu0 0
  %72 = vmatpush2.bf16.msra.mxu0 0
  %73 = vmatprep.subr.bf16.mxu0 0
  %74 = vmatpush2.bf16.msra.mxu0 0
  %75 = vmatprep.subr.bf16.mxu0 0
  %76 = vmatpush2.bf16.msra.mxu0 0
  %77 = vmatprep.subr.bf16.mxu0 0
  %78 = vmatpush2.bf16.msra.mxu0 0
  %79 = vmatprep.mubr.bf16.mxu0 0
  %80 = vmatmul.mubr.bf16.gmra.mxu0 %v42
  %v81 = vpop.f32.mrf.mxu0
  %v82 = vadd.f32 0.0, %v81
  %v83 = vpop.f32.mrf.mxu0
  %v84 = vpop.f32.mrf.mxu0
  %v85 = vadd.f32 0.0, %v84
  %v86 = vpop.f32.mrf.mxu0
  %87 = vmatprep.mubr.bf16.mxu0 0
  %88 = vmatmul.mubr.bf16.gmra.mxu0 %v45
  %v89 = vpop.f32.mrf.mxu0
  %v90 = vadd.f32 0.0, %v89
  %v91 = vpop.f32.mrf.mxu0
  %v92 = vpop.f32.mrf.mxu0
  %v93 = vadd.f32 0.0, %v92
  %v94 = vpop.f32.mrf.mxu0
  %95 = vdwg.mxu0
  %v96 = vld [vmem:[%s2] sm:$0xff]
  %v97 = vld [vmem:[%s2 + $0x8] sm:$0xff]
  %v98 = vld [vmem:[%s2 + $0x10] sm:$0xff]
  %v99 = vld [vmem:[%s2 + $0x18] sm:$0xff]
  %101 = vset.pattern.permute.xlu0 0
  %102 = vperm.xlu0 %101, %v96
  %v103 = vpop.permute.xlu0 %102
  %106 = vset.pattern.permute.xlu0 0
  %107 = vperm.xlu0 %106, %v97
  %v108 = vpop.permute.xlu0 %107
  %111 = vset.pattern.permute.xlu0 0
  %112 = vperm.xlu0 %111, %v98
  %v113 = vpop.permute.xlu0 %112
  %116 = vset.pattern.permute.xlu0 0
  %117 = vperm.xlu0 %116, %v99
  %v118 = vpop.permute.xlu0 %117
  %v120 = vmul.f32 %v82, %v103
  %v121 = vmul.f32 %v85, %v108
  %v122 = vmul.f32 %v90, %v113
  %v123 = vmul.f32 %v93, %v118
  %v124 = vld [vmem:[%s3] sm:$0xff]
  %v125 = vld [vmem:[%s3 + $0x8] sm:$0xff]
  %v126 = vld [vmem:[%s3 + $0x10] sm:$0xff]
  %v127 = vld [vmem:[%s3 + $0x18] sm:$0xff]
  %129 = vset.pattern.permute.xlu0 0
  %130 = vperm.xlu0 %129, %v124
  %v131 = vpop.permute.xlu0 %130
  %134 = vset.pattern.permute.xlu0 0
  %135 = vperm.xlu0 %134, %v125
  %v136 = vpop.permute.xlu0 %135
  %139 = vset.pattern.permute.xlu0 0
  %140 = vperm.xlu0 %139, %v126
  %v141 = vpop.permute.xlu0 %140
  %144 = vset.pattern.permute.xlu0 0
  %145 = vperm.xlu0 %144, %v127
  %v146 = vpop.permute.xlu0 %145
  %v148 = vadd.f32 %v120, %v131
  %v149 = vadd.f32 %v121, %v136
  %v150 = vadd.f32 %v122, %v141
  %v151 = vadd.f32 %v123, %v146
  %v152 = vpack.c.bf16 %v149, %v148
  %v153 = vpack.c.bf16 %v151, %v150
  %v156 = vunpack.c.l.b16 %v152
  %v157 = vunpack.c.h.b16 %v152
  %v158 = vunpack.c.l.b16 %v153
  %v159 = vunpack.c.h.b16 %v153
  %v160 = vpack.c.b16 %v156, %v156
  %v161 = vpack.c.b16 %v157, %v157
  %v162 = vpack.c.b16 %v158, %v158
  %v163 = vpack.c.b16 %v159, %v159
  %168 = vst [vmem:[%s4] sm:$0xf] %v160
  %169 = vst [vmem:[%s4 + $0x4] sm:$0xf] %v161
  %170 = vst [vmem:[%s4 + $0x8] sm:$0xf] %v162
  %171 = vst [vmem:[%s4 + $0xc] sm:$0xf] %v163
  // Predicated region
  $region18: #{resnet_fed_forward.10} parent=0 // pred_check
    _
  $region19: #{resnet_fed_forward.10} parent=0 // pred_check_branch
    %173 = sbr.rel (0) target = $region21
  $region20: #{resnet_fed_forward.10} parent=0 // pred_region
    _
  $region21: #{resnet_fed_forward.10} parent=0 // pred_fallthru
    _
  // Predicated region
  $region22: #{resnet_fed_forward.10} parent=0 // pred_check
    _
  $region23: #{resnet_fed_forward.10} parent=0 // pred_check_branch
    %175 = sbr.rel (0) target = $region25
  $region24: #{resnet_fed_forward.10} parent=0 // pred_region
    _
  $region25: #{resnet_fed_forward.10} parent=0 // pred_fallthru
    _

// kernel: resnet_fed_forward.12
$region0: #{resnet_fed_forward.12}
  #allocation0 [shape = 'u32[]', space=smem, size = 0x4, offset = 0x4, fixed_abs, tag = 'smem constant byte address 0x4 - core index']
  #allocation1 [shape = 'u32[144,128]{1,0:T(1,128)}', space=vmem, size = 0x12000, scoped, tag = 'internal scratch']
  %s0 = inlined_call_operand.vmem [shape: bf16[32,288], index: 0, kind: input, shape index: {}]
  %s1 = inlined_call_operand.vmem [shape: bf16[288,128], index: 1, kind: input, shape index: {}]
  %s2 = inlined_call_operand.vmem [shape: f32[32,1], index: 2, kind: input, shape index: {}]
  %s3 = inlined_call_operand.vmem [shape: f32[32,1], index: 3, kind: input, shape index: {}]
  %s4 = inlined_call_operand.vmem [shape: bf16[32,128], index: 4, kind: input, shape index: {}]
  %s5 = inlined_call_operand.vmem [shape: bf16[32,128], index: 5, kind: output, shape index: {}]
  %s6 = sld [smem:[#allocation0]]
  $region30: #{resnet_fed_forward.12} parent=0
    _
  %s8 = ssub.s32 1, %s6
  %s9 = scalar_select 0, %s8, %s6
  // Predicated region
  $region2: #{resnet_fed_forward.12} parent=0 // pred_check
    _
  $region3: #{resnet_fed_forward.12} parent=0 // pred_check_branch
    %11 = sbr.rel (0) target = $region5
  $region4: #{resnet_fed_forward.12} parent=0 // pred_region
    _
  $region5: #{resnet_fed_forward.12} parent=0 // pred_fallthru
    _
  // Predicated region
  $region6: #{resnet_fed_forward.12} parent=0 // pred_check
    _
  $region7: #{resnet_fed_forward.12} parent=0 // pred_check_branch
    %13 = sbr.rel (0) target = $region9
  $region8: #{resnet_fed_forward.12} parent=0 // pred_region
    _
  $region9: #{resnet_fed_forward.12} parent=0 // pred_fallthru
    _
  // Predicated region
  $region10: #{resnet_fed_forward.12} parent=0 // pred_check
    _
  $region11: #{resnet_fed_forward.12} parent=0 // pred_check_branch
    %15 = sbr.rel (0) target = $region13
  $region12: #{resnet_fed_forward.12} parent=0 // pred_region
    _
  $region13: #{resnet_fed_forward.12} parent=0 // pred_fallthru
    _
  // Predicated region
  $region14: #{resnet_fed_forward.12} parent=0 // pred_check
    _
  $region15: #{resnet_fed_forward.12} parent=0 // pred_check_branch
    %17 = sbr.rel (0) target = $region17
  $region16: #{resnet_fed_forward.12} parent=0 // pred_region
    _
  $region17: #{resnet_fed_forward.12} parent=0 // pred_fallthru
    _
  // Predicated region
  $region18: #{resnet_fed_forward.12} parent=0 // pred_check
    _
  $region19: #{resnet_fed_forward.12} parent=0 // pred_check_branch
    %19 = sbr.rel (0) target = $region21
  $region20: #{resnet_fed_forward.12} parent=0 // pred_region
    _
  $region21: #{resnet_fed_forward.12} parent=0 // pred_fallthru
    _
  %v21 = vld [vmem:[%s0] sm:$0xff]
  %v22 = vld [vmem:[%s0 + $0x8] sm:$0xf]
  %v23 = vld [vmem:[%s0 + $0xc] sm:$0xff]
  %v24 = vld [vmem:[%s0 + $0x14] sm:$0xf]
  %v25 = vld [vmem:[%s0 + $0x18] sm:$0xff]
  %v26 = vld [vmem:[%s0 + $0x20] sm:$0xf]
  %v27 = vld [vmem:[%s0 + $0x24] sm:$0xff]
  %v28 = vld [vmem:[%s0 + $0x2c] sm:$0xf]
  %v29 = vld [vmem:[%s1] sm:$0xf]
  %v30 = vld [vmem:[%s1 + $0x4] sm:$0xf]
  %v31 = vld [vmem:[%s1 + $0x8] sm:$0xf]
  %v32 = vld [vmem:[%s1 + $0xc] sm:$0xf]
  %v33 = vld [vmem:[%s1 + $0x10] sm:$0xf]
  %v34 = vld [vmem:[%s1 + $0x14] sm:$0xf]
  %v35 = vld [vmem:[%s1 + $0x18] sm:$0xf]
  %v36 = vld [vmem:[%s1 + $0x1c] sm:$0xf]
  %v37 = vld [vmem:[%s1 + $0x20] sm:$0xf]
  %v38 = vld [vmem:[%s1 + $0x24] sm:$0xf]
  %v39 = vld [vmem:[%s1 + $0x28] sm:$0xf]
  %v40 = vld [vmem:[%s1 + $0x2c] sm:$0xf]
  %v41 = vld [vmem:[%s1 + $0x30] sm:$0xf]
  %v42 = vld [vmem:[%s1 + $0x34] sm:$0xf]
  %v43 = vld [vmem:[%s1 + $0x38] sm:$0xf]
  %v44 = vld [vmem:[%s1 + $0x3c] sm:$0xf]
  %v45 = vld [vmem:[%s1 + $0x40] sm:$0xf]
  %v46 = vld [vmem:[%s1 + $0x44] sm:$0xf]
  %v47 = vld [vmem:[%s1 + $0x48] sm:$0xf]
  %v48 = vld [vmem:[%s1 + $0x4c] sm:$0xf]
  %v49 = vld [vmem:[%s1 + $0x50] sm:$0xf]
  %v50 = vld [vmem:[%s1 + $0x54] sm:$0xf]
  %v51 = vld [vmem:[%s1 + $0x58] sm:$0xf]
  %v52 = vld [vmem:[%s1 + $0x5c] sm:$0xf]
  %v53 = vld [vmem:[%s1 + $0x60] sm:$0xf]
  %v54 = vld [vmem:[%s1 + $0x64] sm:$0xf]
  %v55 = vld [vmem:[%s1 + $0x68] sm:$0xf]
  %v56 = vld [vmem:[%s1 + $0x6c] sm:$0xf]
  %v57 = vld [vmem:[%s1 + $0x70] sm:$0xf]
  %v58 = vld [vmem:[%s1 + $0x74] sm:$0xf]
  %v59 = vld [vmem:[%s1 + $0x78] sm:$0xf]
  %v60 = vld [vmem:[%s1 + $0x7c] sm:$0xf]
  %v61 = vld [vmem:[%s1 + $0x80] sm:$0xf]
  %v62 = vld [vmem:[%s1 + $0x84] sm:$0xf]
  %v63 = vld [vmem:[%s1 + $0x88] sm:$0xf]
  %v64 = vld [vmem:[%s1 + $0x8c] sm:$0xf]
  %v73 = vunpack.c.l.b16 %v21
  %v74 = vunpack.c.h.b16 %v21
  %v75 = vunpack.c.l.b16 %v22
  %v76 = vunpack.c.l.b16 %v23
  %v77 = vunpack.c.h.b16 %v23
  %v78 = vunpack.c.l.b16 %v24
  %v79 = vunpack.c.l.b16 %v25
  %v80 = vunpack.c.h.b16 %v25
  %v81 = vunpack.c.l.b16 %v26
  %v82 = vunpack.c.l.b16 %v27
  %v83 = vunpack.c.h.b16 %v27
  %v84 = vunpack.c.l.b16 %v28
  %v85 = vpack.c.b16 %v76, %v73
  %v86 = vpack.c.b16 %v77, %v74
  %v87 = vpack.c.b16 %v78, %v75
  %v88 = vpack.c.b16 %v82, %v79
  %v89 = vpack.c.b16 %v83, %v80
  %v90 = vpack.c.b16 %v84, %v81
  %v131 = vunpack.c.l.b16 %v29
  %v132 = vunpack.c.l.b16 %v30
  %v133 = vunpack.c.l.b16 %v31
  %v134 = vunpack.c.l.b16 %v32
  %v135 = vunpack.c.l.b16 %v33
  %v136 = vunpack.c.l.b16 %v34
  %v137 = vunpack.c.l.b16 %v35
  %v138 = vunpack.c.l.b16 %v36
  %v139 = vunpack.c.l.b16 %v37
  %v140 = vunpack.c.l.b16 %v38
  %v141 = vunpack.c.l.b16 %v39
  %v142 = vunpack.c.l.b16 %v40
  %v143 = vunpack.c.l.b16 %v41
  %v144 = vunpack.c.l.b16 %v42
  %v145 = vunpack.c.l.b16 %v43
  %v146 = vunpack.c.l.b16 %v44
  %v147 = vunpack.c.l.b16 %v45
  %v148 = vunpack.c.l.b16 %v46
  %v149 = vunpack.c.l.b16 %v47
  %v150 = vunpack.c.l.b16 %v48
  %v151 = vunpack.c.l.b16 %v49
  %v152 = vunpack.c.l.b16 %v50
  %v153 = vunpack.c.l.b16 %v51
  %v154 = vunpack.c.l.b16 %v52
  %v155 = vunpack.c.l.b16 %v53
  %v156 = vunpack.c.l.b16 %v54
  %v157 = vunpack.c.l.b16 %v55
  %v158 = vunpack.c.l.b16 %v56
  %v159 = vunpack.c.l.b16 %v57
  %v160 = vunpack.c.l.b16 %v58
  %v161 = vunpack.c.l.b16 %v59
  %v162 = vunpack.c.l.b16 %v60
  %v163 = vunpack.c.l.b16 %v61
  %v164 = vunpack.c.l.b16 %v62
  %v165 = vunpack.c.l.b16 %v63
  %v166 = vunpack.c.l.b16 %v64
  %v167 = vpack.c.b16 %v132, %v131
  %v168 = vpack.c.b16 %v134, %v133
  %v169 = vpack.c.b16 %v136, %v135
  %v170 = vpack.c.b16 %v138, %v137
  %v171 = vpack.c.b16 %v140, %v139
  %v172 = vpack.c.b16 %v142, %v141
  %v173 = vpack.c.b16 %v144, %v143
  %v174 = vpack.c.b16 %v146, %v145
  %v175 = vpack.c.b16 %v148, %v147
  %v176 = vpack.c.b16 %v150, %v149
  %v177 = vpack.c.b16 %v152, %v151
  %v178 = vpack.c.b16 %v154, %v153
  %v179 = vpack.c.b16 %v156, %v155
  %v180 = vpack.c.b16 %v158, %v157
  %v181 = vpack.c.b16 %v160, %v159
  %v182 = vpack.c.b16 %v162, %v161
  %v183 = vpack.c.b16 %v164, %v163
  %v184 = vpack.c.b16 %v166, %v165
  %vm203 = vcmask 261120
  %v205 = vsel %vm203, %v87, 0
  %v208 = vsel %vm203, %v90, 0
  %210 = vmatprep.subr.bf16.mxu0 0
  %211 = vmatpush1.bf16.msra.mxu0 %v174
  %212 = vmatprep.subr.bf16.mxu0 0
  %213 = vmatpush1.bf16.msra.mxu0 %v173
  %214 = vmatprep.subr.bf16.mxu0 0
  %215 = vmatpush1.bf16.msra.mxu0 %v172
  %216 = vmatprep.subr.bf16.mxu0 0
  %217 = vmatpush1.bf16.msra.mxu0 %v171
  %218 = vmatprep.subr.bf16.mxu0 0
  %219 = vmatpush1.bf16.msra.mxu0 %v170
  %220 = vmatprep.subr.bf16.mxu0 0
  %221 = vmatpush1.bf16.msra.mxu0 %v169
  %222 = vmatprep.subr.bf16.mxu0 0
  %223 = vmatpush1.bf16.msra.mxu0 %v168
  %224 = vmatprep.subr.bf16.mxu0 0
  %225 = vmatpush1.bf16.msra.mxu0 %v167
  %226 = vmatprep.subr.bf16.mxu0 0
  %227 = vmatpush2.bf16.msra.mxu0 %v182
  %228 = vmatprep.subr.bf16.mxu0 0
  %229 = vmatpush2.bf16.msra.mxu0 %v181
  %230 = vmatprep.subr.bf16.mxu0 0
  %231 = vmatpush2.bf16.msra.mxu0 %v180
  %232 = vmatprep.subr.bf16.mxu0 0
  %233 = vmatpush2.bf16.msra.mxu0 %v179
  %234 = vmatprep.subr.bf16.mxu0 0
  %235 = vmatpush2.bf16.msra.mxu0 %v178
  %236 = vmatprep.subr.bf16.mxu0 0
  %237 = vmatpush2.bf16.msra.mxu0 %v177
  %238 = vmatprep.subr.bf16.mxu0 0
  %239 = vmatpush2.bf16.msra.mxu0 %v176
  %240 = vmatprep.subr.bf16.mxu0 0
  %241 = vmatpush2.bf16.msra.mxu0 %v175
  %242 = vmatprep.mubr.bf16.mxu0 %v86
  %243 = vmatmul.mubr.bf16.gmra.mxu0 %v85
  %v244 = vpop.f32.mrf.mxu0
  %v245 = vadd.f32 0.0, %v244
  %v246 = vpop.f32.mrf.mxu0
  %v247 = vpop.f32.mrf.mxu0
  %v248 = vadd.f32 0.0, %v247
  %v249 = vpop.f32.mrf.mxu0
  %250 = vmatprep.mubr.bf16.mxu0 %v89
  %251 = vmatmul.mubr.bf16.gmra.mxu0 %v88
  %v252 = vpop.f32.mrf.mxu0
  %v253 = vadd.f32 0.0, %v252
  %v254 = vpop.f32.mrf.mxu0
  %v255 = vpop.f32.mrf.mxu0
  %v256 = vadd.f32 0.0, %v255
  %v257 = vpop.f32.mrf.mxu0
  %258 = vdwg.mxu0
  %259 = vmatprep.subr.bf16.mxu0 0
  %260 = vmatpush1.bf16.msra.mxu0 0
  %261 = vmatprep.subr.bf16.mxu0 0
  %262 = vmatpush1.bf16.msra.mxu0 0
  %263 = vmatprep.subr.bf16.mxu0 0
  %264 = vmatpush1.bf16.msra.mxu0 0
  %265 = vmatprep.subr.bf16.mxu0 0
  %266 = vmatpush1.bf16.msra.mxu0 0
  %267 = vmatprep.subr.bf16.mxu0 0
  %268 = vmatpush1.bf16.msra.mxu0 0
  %269 = vmatprep.subr.bf16.mxu0 0
  %270 = vmatpush1.bf16.msra.mxu0 0
  %271 = vmatprep.subr.bf16.mxu0 0
  %272 = vmatpush1.bf16.msra.mxu0 %v184
  %273 = vmatprep.subr.bf16.mxu0 0
  %274 = vmatpush1.bf16.msra.mxu0 %v183
  %275 = vmatprep.subr.bf16.mxu0 0
  %276 = vmatpush2.bf16.msra.mxu0 0
  %277 = vmatprep.subr.bf16.mxu0 0
  %278 = vmatpush2.bf16.msra.mxu0 0
  %279 = vmatprep.subr.bf16.mxu0 0
  %280 = vmatpush2.bf16.msra.mxu0 0
  %281 = vmatprep.subr.bf16.mxu0 0
  %282 = vmatpush2.bf16.msra.mxu0 0
  %283 = vmatprep.subr.bf16.mxu0 0
  %284 = vmatpush2.bf16.msra.mxu0 0
  %285 = vmatprep.subr.bf16.mxu0 0
  %286 = vmatpush2.bf16.msra.mxu0 0
  %287 = vmatprep.subr.bf16.mxu0 0
  %288 = vmatpush2.bf16.msra.mxu0 0
  %289 = vmatprep.subr.bf16.mxu0 0
  %290 = vmatpush2.bf16.msra.mxu0 0
  %291 = vmatprep.mubr.bf16.mxu0 0
  %292 = vmatmul.mubr.bf16.gmra.mxu0 %v205
  %v293 = vpop.f32.mrf.mxu0
  %v294 = vadd.f32 %v245, %v293
  %v295 = vpop.f32.mrf.mxu0
  %v296 = vpop.f32.mrf.mxu0
  %v297 = vadd.f32 %v248, %v296
  %v298 = vpop.f32.mrf.mxu0
  %299 = vmatprep.mubr.bf16.mxu0 0
  %300 = vmatmul.mubr.bf16.gmra.mxu0 %v208
  %v301 = vpop.f32.mrf.mxu0
  %v302 = vadd.f32 %v253, %v301
  %v303 = vpop.f32.mrf.mxu0
  %v304 = vpop.f32.mrf.mxu0
  %v305 = vadd.f32 %v256, %v304
  %v306 = vpop.f32.mrf.mxu0
  %307 = vdwg.mxu0
  %v308 = vld [vmem:[%s2] sm:$0xff]
  %v309 = vld [vmem:[%s2 + $0x8] sm:$0xff]
  %v310 = vld [vmem:[%s2 + $0x10] sm:$0xff]
  %v311 = vld [vmem:[%s2 + $0x18] sm:$0xff]
  %313 = vset.pattern.permute.xlu0 0
  %314 = vperm.xlu0 %313, %v308
  %v315 = vpop.permute.xlu0 %314
  %318 = vset.pattern.permute.xlu0 0
  %319 = vperm.xlu0 %318, %v309
  %v320 = vpop.permute.xlu0 %319
  %323 = vset.pattern.permute.xlu0 0
  %324 = vperm.xlu0 %323, %v310
  %v325 = vpop.permute.xlu0 %324
  %328 = vset.pattern.permute.xlu0 0
  %329 = vperm.xlu0 %328, %v311
  %v330 = vpop.permute.xlu0 %329
  %v332 = vmul.f32 %v294, %v315
  %v333 = vmul.f32 %v297, %v320
  %v334 = vmul.f32 %v302, %v325
  %v335 = vmul.f32 %v305, %v330
  %v336 = vld [vmem:[%s3] sm:$0xff]
  %v337 = vld [vmem:[%s3 + $0x8] sm:$0xff]
  %v338 = vld [vmem:[%s3 + $0x10] sm:$0xff]
  %v339 = vld [vmem:[%s3 + $0x18] sm:$0xff]
  %341 = vset.pattern.permute.xlu0 0
  %342 = vperm.xlu0 %341, %v336
  %v343 = vpop.permute.xlu0 %342
  %346 = vset.pattern.permute.xlu0 0
  %347 = vperm.xlu0 %346, %v337
  %v348 = vpop.permute.xlu0 %347
  %351 = vset.pattern.permute.xlu0 0
  %352 = vperm.xlu0 %351, %v338
  %v353 = vpop.permute.xlu0 %352
  %356 = vset.pattern.permute.xlu0 0
  %357 = vperm.xlu0 %356, %v339
  %v358 = vpop.permute.xlu0 %357
  %v360 = vadd.f32 %v332, %v343
  %v361 = vadd.f32 %v333, %v348
  %v362 = vadd.f32 %v334, %v353
  %v363 = vadd.f32 %v335, %v358
  %v364 = vld [vmem:[%s4] sm:$0xf]
  %v365 = vld [vmem:[%s4 + $0x4] sm:$0xf]
  %v366 = vld [vmem:[%s4 + $0x8] sm:$0xf]
  %v367 = vld [vmem:[%s4 + $0xc] sm:$0xf]
  %v368 = vunpack.c.l.bf16 %v364
  %v369 = vunpack.c.l.bf16 %v365
  %v370 = vunpack.c.l.bf16 %v366
  %v371 = vunpack.c.l.bf16 %v367
  %v372 = vadd.f32 %v360, %v368
  %v373 = vadd.f32 %v361, %v369
  %v374 = vadd.f32 %v362, %v370
  %v375 = vadd.f32 %v363, %v371
  %v376 = vmax.f32 %v372, 0.0
  %v377 = vmax.f32 %v373, 0.0
  %v378 = vmax.f32 %v374, 0.0
  %v379 = vmax.f32 %v375, 0.0
  %v380 = vpack.c.bf16 %v377, %v376
  %v381 = vpack.c.bf16 %v379, %v378
  %v384 = vunpack.c.l.b16 %v380
  %v385 = vunpack.c.h.b16 %v380
  %v386 = vunpack.c.l.b16 %v381
  %v387 = vunpack.c.h.b16 %v381
  %v388 = vpack.c.b16 %v384, %v384
  %v389 = vpack.c.b16 %v385, %v385
  %v390 = vpack.c.b16 %v386, %v386
  %v391 = vpack.c.b16 %v387, %v387
  %396 = vst [vmem:[%s5] sm:$0xf] %v388
  %397 = vst [vmem:[%s5 + $0x4] sm:$0xf] %v389
  %398 = vst [vmem:[%s5 + $0x8] sm:$0xf] %v390
  %399 = vst [vmem:[%s5 + $0xc] sm:$0xf] %v391
  // Predicated region
  $region22: #{resnet_fed_forward.12} parent=0 // pred_check
    _
  $region23: #{resnet_fed_forward.12} parent=0 // pred_check_branch
    %401 = sbr.rel (0) target = $region25
  $region24: #{resnet_fed_forward.12} parent=0 // pred_region
    _
  $region25: #{resnet_fed_forward.12} parent=0 // pred_fallthru
    _
  // Predicated region
  $region26: #{resnet_fed_forward.12} parent=0 // pred_check
    _
  $region27: #{resnet_fed_forward.12} parent=0 // pred_check_branch
    %403 = sbr.rel (0) target = $region29
  $region28: #{resnet_fed_forward.12} parent=0 // pred_region
    _
  $region29: #{resnet_fed_forward.12} parent=0 // pred_fallthru
    _

</llo_original>
